<compile_context>
chip_gen: v6e
topology: v6e:2x2x1
jax: 0.10.0
libtpu: 0.0.40
codegen_flags: <defaults>
</compile_context>

<pallas_src>
import functools
import math

import jax
import jax.numpy as jnp
from jax import lax
from jax.experimental import pallas as pl
from jax.experimental.pallas import tpu as pltpu


def _layernorm(v, gamma, beta, eps):
    # v: (M, E) f32; gamma/beta: (1, E) f32.  Biased variance (nn.LayerNorm).
    mu = jnp.mean(v, axis=-1, keepdims=True)
    c = v - mu
    var = jnp.mean(c * c, axis=-1, keepdims=True)
    return c * lax.rsqrt(var + eps) * gamma + beta


def _attention_block_kernel(
    x_ref,
    ln1_g_ref, ln1_b_ref,
    wqkv_ref, bqkv_ref,        # (E, 3E) bf16, (1, 3E) f32   -- in_proj, pre-transposed
    wo_ref, bo_ref,            # (E, E)  bf16, (1, E)  f32   -- out_proj, pre-transposed
    ln2_g_ref, ln2_b_ref,
    w1_ref, b1_ref,            # (E, H)  bf16, (1, H)  f32   -- MLP linear 1
    w2_ref, b2_ref,            # (H, E)  bf16, (1, E)  f32   -- MLP linear 2
    o_ref,
    *, num_heads, eps):
    f32 = jnp.float32
    bf16 = jnp.bfloat16
    Bt, S, E = x_ref.shape
    M = Bt * S
    hd = E // num_heads
    scale = 1.0 / math.sqrt(hd)

    # Residual stream kept in f32; batch+seq rows folded into the matmul M dim.
    x0 = x_ref[...].reshape(M, E).astype(f32)

    # ---- pre-LN 1 + fused QKV projection (bf16 operands, f32 accumulate) ----
    inp = _layernorm(x0, ln1_g_ref[...], ln1_b_ref[...], eps)          # (M, E) f32
    qkv = jnp.dot(inp.astype(bf16), wqkv_ref[...],
                  preferred_element_type=f32) + bqkv_ref[...]          # (M, 3E) f32
    qkv_b = qkv.astype(bf16)                                           # cast once

    # ---- multi-head scaled-dot-product attention -----------------------------
    # num_heads is small & static -> unrolled loop of batched-over-Bt matmuls.
    # The out-projection is folded into the loop as an accumulation over the
    # matching row-slice of wo (no jnp.concatenate over heads).
    attn = None
    for h in range(num_heads):
        lo = h * hd
        qh = qkv_b[:, lo:lo + hd].reshape(Bt, S, hd)
        kh = qkv_b[:, E + lo:E + lo + hd].reshape(Bt, S, hd)
        vh = qkv_b[:, 2 * E + lo:2 * E + lo + hd].reshape(Bt, S, hd)
        s = jnp.einsum('bqd,bkd->bqk', qh, kh,
                       preferred_element_type=f32) * scale             # (Bt, S, S)
        m = jnp.max(s, axis=-1, keepdims=True)
        p = jnp.exp(s - m)
        l = jnp.sum(p, axis=-1, keepdims=True)
        p = p * pl.reciprocal(l, approx=True)                          # EUP, not VALU divide
        ctx = jnp.einsum('bqk,bkd->bqd', p.astype(bf16), vh,
                         preferred_element_type=f32)                   # (Bt, S, hd)
        contrib = jnp.dot(ctx.reshape(M, hd).astype(bf16),
                          wo_ref[lo:lo + hd, :],
                          preferred_element_type=f32)                  # (M, E)
        attn = contrib if attn is None else attn + contrib
    x1 = x0 + attn + bo_ref[...]                                       # residual 1

    # ---- pre-LN 2 + MLP -------------------------------------------------------
    ln2 = _layernorm(x1, ln2_g_ref[...], ln2_b_ref[...], eps)
    h1 = jnp.dot(ln2.astype(bf16), w1_ref[...],
                 preferred_element_type=f32) + b1_ref[...]             # (M, H)
    # TODO(synk): torch.nn.GELU() defaults to the exact erf form; the tanh
    # approximation is used for guaranteed Mosaic lowering (max |diff| ~3e-3).
    h1 = jax.nn.gelu(h1, approximate=True)
    # TODO(synk): nn.Dropout is identity at p=0 / eval; training-mode dropout
    # masks are not generated in-kernel.
    h2 = jnp.dot(h1.astype(bf16), w2_ref[...],
                 preferred_element_type=f32) + b2_ref[...]             # (M, E)

    o_ref[...] = (x1 + h2).reshape(Bt, S, E).astype(o_ref.dtype)       # residual 2


# ---------------------------------------------------------------------------
# Wrapper
# ---------------------------------------------------------------------------

def prepare_params(params, compute_dtype=jnp.bfloat16):
    """One-time parameter prep: transpose weights, cast to bf16, reshape biases.

    Doing this once (instead of per forward call) removes the per-call HBM
    transpose/cast traffic the old wrapper generated.
    """
    f32 = jnp.float32
    E = params["wo"].shape[0]
    H = params["w1"].shape[0]
    prep = dict(
        ln1_g=jnp.asarray(params["ln1_g"]).reshape(1, E).astype(f32),
        ln1_b=jnp.asarray(params["ln1_b"]).reshape(1, E).astype(f32),
        wqkv_t=jnp.asarray(params["wqkv"]).T.astype(compute_dtype),   # (E, 3E)
        bqkv=jnp.asarray(params["bqkv"]).reshape(1, 3 * E).astype(f32),
        wo_t=jnp.asarray(params["wo"]).T.astype(compute_dtype),       # (E, E)
        bo=jnp.asarray(params["bo"]).reshape(1, E).astype(f32),
        ln2_g=jnp.asarray(params["ln2_g"]).reshape(1, E).astype(f32),
        ln2_b=jnp.asarray(params["ln2_b"]).reshape(1, E).astype(f32),
        w1_t=jnp.asarray(params["w1"]).T.astype(compute_dtype),       # (E, H)
        b1=jnp.asarray(params["b1"]).reshape(1, H).astype(f32),
        w2_t=jnp.asarray(params["w2"]).T.astype(compute_dtype),       # (H, E)
        b2=jnp.asarray(params["b2"]).reshape(1, E).astype(f32),
    )
    return prep


def _pick_batch_tile(B, S, target_rows=256):
    """Largest divisor of B such that Bt*S <= target_rows (MXU row utilization)."""
    bt = 1
    for cand in range(1, B + 1):
        if B % cand == 0 and cand * S <= target_rows:
            bt = cand
    return bt


def _vmem_limit_bytes(Bt, S, E, H, x_itemsize):
    """Rough VMEM footprint (weights resident + activations), with headroom."""
    M = Bt * S
    weights = 2 * (E * 3 * E + E * E + E * H + H * E)          # bf16 resident weights
    vectors = 4 * (8 * E + 3 * E + H)                          # LN/bias rows (f32)
    io = 2 * 2 * x_itemsize * M * E                            # dbl-buffered x / out blocks
    acts = 4 * (2 * M * 3 * E + 3 * Bt * S * S + 4 * M * E + 2 * M * H)
    est = weights + vectors + io + acts
    # >= 32 MiB fixes v5e's 16 MiB default scoped limit; <= 64 MiB stays within
    # v7x physical VMEM.
    return int(min(max(2 * est, 32 * 1024 * 1024), 64 * 1024 * 1024))


_SINGLE_BUFFER_OK = None  # cached: does this jax accept pipeline_mode=pl.Buffered(1)?


def attention_block(x, prep, num_heads, eps=1e-5):
    """Pallas equivalent of AttentionBlock.forward(x), x of shape (B, S, E)."""
    global _SINGLE_BUFFER_OK
    B, S, E = x.shape
    H = prep["w1_t"].shape[1]
    assert E % num_heads == 0, "embed_dim must be divisible by num_heads"

    Bt = _pick_batch_tile(B, S)
    grid = (B // Bt,)
    vmem_limit = _vmem_limit_bytes(Bt, S, E, H, jnp.dtype(x.dtype).itemsize)

    args = [
        x,                      # native dtype; cast to f32/bf16 inside the kernel
        prep["ln1_g"], prep["ln1_b"],
        prep["wqkv_t"], prep["bqkv"],
        prep["wo_t"], prep["bo"],
        prep["ln2_g"], prep["ln2_b"],
        prep["w1_t"], prep["b1"],
        prep["w2_t"], prep["b2"],
    ]

    kernel = functools.partial(_attention_block_kernel,
                               num_heads=num_heads, eps=float(eps))

    def weight_spec(shape, single_buffer):
        # Grid-invariant 2-D weight/bias tile (block == full array).
        if single_buffer:
            return pl.BlockSpec(shape, lambda b: (0, 0),
                                pipeline_mode=pl.Buffered(1))
        return pl.BlockSpec(shape, lambda b: (0, 0))

    def run(single_buffer):
        in_specs = [pl.BlockSpec((Bt, S, E), lambda b: (b, 0, 0))]
        in_specs += [weight_spec(a.shape, single_buffer) for a in args[1:]]
        return pl.pallas_call(
            kernel,
            out_shape=jax.ShapeDtypeStruct((B, S, E), x.dtype),
            grid=grid,
            in_specs=in_specs,
            out_specs=pl.BlockSpec((Bt, S, E), lambda b: (b, 0, 0)),
            compiler_params=pltpu.CompilerParams(
                dimension_semantics=("parallel",),   # independent per-batch-tile blocks
                vmem_limit_bytes=vmem_limit,
            ),
        )(*args)

    if _SINGLE_BUFFER_OK is None:
        try:
            out = run(True)
            _SINGLE_BUFFER_OK = True
            return out
        except Exception:
            # pipeline_mode=pl.Buffered(1) not supported on this jax/libtpu;
            # fall back to default double-buffering (correctness unchanged).
            _SINGLE_BUFFER_OK = False
            return run(False)
    return run(_SINGLE_BUFFER_OK)


# ---------------------------------------------------------------------------
# Pure-JAX reference with matching numerics (bf16 matmul operands, f32 accum)
# ---------------------------------------------------------------------------

def _reference(x, p, num_heads, eps=1e-5):
    f32, bf = jnp.float32, jnp.bfloat16

    def ln(v, g, b):
        mu = jnp.mean(v, -1, keepdims=True)
        var = jnp.mean((v - mu) ** 2, -1, keepdims=True)
        return (v - mu) * lax.rsqrt(var + eps) * g + b

    B, S, E = x.shape
    hd = E // num_heads
    x = x.astype(f32)
    ln1 = ln(x, p["ln1_g"], p["ln1_b"])
    qkv = jnp.einsum("bse,fe->bsf", ln1.astype(bf), p["wqkv"].astype(bf),
                     preferred_element_type=f32) + p["bqkv"]
    q, k, v = jnp.split(qkv, 3, axis=-1)
    sh = lambda t: t.reshape(B, S, num_heads, hd).transpose(0, 2, 1, 3)
    q, k, v = sh(q), sh(k), sh(v)
    s = jnp.einsum("bhqd,bhkd->bhqk", q.astype(bf), k.astype(bf),
                   preferred_element_type=f32) / math.sqrt(hd)
    a = jax.nn.softmax(s, axis=-1)
    o = jnp.einsum("bhqk,bhkd->bhqd", a.astype(bf), v.astype(bf),
                   preferred_element_type=f32)
    o = o.transpose(0, 2, 1, 3).reshape(B, S, E)
    attn = jnp.einsum("bse,fe->bsf", o.astype(bf), p["wo"].astype(bf),
                      preferred_element_type=f32) + p["bo"]
    x = x + attn
    ln2 = ln(x, p["ln2_g"], p["ln2_b"])
    h = jnp.einsum("bse,fe->bsf", ln2.astype(bf), p["w1"].astype(bf),
                   preferred_element_type=f32) + p["b1"]
    h = jax.nn.gelu(h, approximate=True)
    h = jnp.einsum("bsf,ef->bse", h.astype(bf), p["w2"].astype(bf),
                   preferred_element_type=f32) + p["b2"]
    return x + h


if __name__ == "__main__":
    B, S = 2, 8
    E, HID, NH = 32, 64, 4          # embed_dim, hidden_dim, num_heads

    key = jax.random.PRNGKey(0)
    ks = jax.random.split(key, 12)
    nrm = lambda k, shape, s=0.1: s * jax.random.normal(k, shape, jnp.float32)

    params = dict(
        ln1_g=1.0 + nrm(ks[0], (E,)),
        ln1_b=nrm(ks[1], (E,)),
        wqkv=nrm(ks[2], (3 * E, E)),
        bqkv=nrm(ks[3], (3 * E,)),
        wo=nrm(ks[4], (E, E)),
        bo=nrm(ks[5], (E,)),
        ln2_g=1.0 + nrm(ks[6], (E,)),
        ln2_b=nrm(ks[7], (E,)),
        w1=nrm(ks[8], (HID, E)),
        b1=nrm(ks[9], (HID,)),
        w2=nrm(ks[10], (E, HID)),
        b2=nrm(ks[11], (E,)),
    )
    x = jax.random.normal(jax.random.PRNGKey(1), (B, S, E), jnp.float32)

    prep = prepare_params(params)                   # one-time weight prep
    out = jax.block_until_ready(attention_block(x, prep, num_heads=NH))
    ref = jax.block_until_ready(_reference(x, params, num_heads=NH))

    assert out.shape == (B, S, E)
    assert out.dtype == x.dtype
    # tolerance covers approx-reciprocal softmax + bf16 MXU accumulation order
    assert jnp.allclose(out.astype(jnp.float32), ref, rtol=1e-2, atol=1e-2), (
        float(jnp.max(jnp.abs(out.astype(jnp.float32) - ref))))

    print("KERNEL_OK")
</pallas_src>

<mosaic_0001>
module attributes {stable_mosaic.version = 11 : i64} {
  func.func @_attention_block_kernel(%arg0: i32, %arg1: memref<2x8x32xf32, #tpu.memory_space<vmem>>, %arg2: memref<1x32xf32, #tpu.memory_space<vmem>>, %arg3: memref<1x32xf32, #tpu.memory_space<vmem>>, %arg4: memref<32x96xbf16, #tpu.memory_space<vmem>>, %arg5: memref<1x96xf32, #tpu.memory_space<vmem>>, %arg6: memref<32x32xbf16, #tpu.memory_space<vmem>>, %arg7: memref<1x32xf32, #tpu.memory_space<vmem>>, %arg8: memref<1x32xf32, #tpu.memory_space<vmem>>, %arg9: memref<1x32xf32, #tpu.memory_space<vmem>>, %arg10: memref<32x64xbf16, #tpu.memory_space<vmem>>, %arg11: memref<1x64xf32, #tpu.memory_space<vmem>>, %arg12: memref<64x32xbf16, #tpu.memory_space<vmem>>, %arg13: memref<1x32xf32, #tpu.memory_space<vmem>>, %arg14: memref<2x8x32xf32, #tpu.memory_space<vmem>>) attributes {dimension_semantics = [#tpu.dimension_semantics<parallel>], iteration_bounds = array<i64: 1>, scalar_prefetch = 0 : i64, scratch_operands = 0 : i64, tpu.core_type = #tpu.core_type<tc>, window_params = [{transform_indices = @transform_0, window_bounds = array<i64: 2, 8, 32>}, {pipeline_mode = #tpu.pipeline_mode<synchronous>, transform_indices = @transform_1, window_bounds = array<i64: 1, 32>}, {pipeline_mode = #tpu.pipeline_mode<synchronous>, transform_indices = @transform_2, window_bounds = array<i64: 1, 32>}, {pipeline_mode = #tpu.pipeline_mode<synchronous>, transform_indices = @transform_3, window_bounds = array<i64: 32, 96>}, {pipeline_mode = #tpu.pipeline_mode<synchronous>, transform_indices = @transform_4, window_bounds = array<i64: 1, 96>}, {pipeline_mode = #tpu.pipeline_mode<synchronous>, transform_indices = @transform_5, window_bounds = array<i64: 32, 32>}, {pipeline_mode = #tpu.pipeline_mode<synchronous>, transform_indices = @transform_6, window_bounds = array<i64: 1, 32>}, {pipeline_mode = #tpu.pipeline_mode<synchronous>, transform_indices = @transform_7, window_bounds = array<i64: 1, 32>}, {pipeline_mode = #tpu.pipeline_mode<synchronous>, transform_indices = @transform_8, window_bounds = array<i64: 1, 32>}, {pipeline_mode = #tpu.pipeline_mode<synchronous>, transform_indices = @transform_9, window_bounds = array<i64: 32, 64>}, {pipeline_mode = #tpu.pipeline_mode<synchronous>, transform_indices = @transform_10, window_bounds = array<i64: 1, 64>}, {pipeline_mode = #tpu.pipeline_mode<synchronous>, transform_indices = @transform_11, window_bounds = array<i64: 64, 32>}, {pipeline_mode = #tpu.pipeline_mode<synchronous>, transform_indices = @transform_12, window_bounds = array<i64: 1, 32>}, {transform_indices = @transform_13, window_bounds = array<i64: 2, 8, 32>}]} {
    %c0 = arith.constant 0 : index
    %c0_0 = arith.constant 0 : index
    %c0_1 = arith.constant 0 : index
    %0 = vector.load %arg1[%c0, %c0_0, %c0_1] : memref<2x8x32xf32, #tpu.memory_space<vmem>>, vector<2x8x32xf32>
    %1 = vector.shape_cast %0 : vector<2x8x32xf32> to vector<16x32xf32>
    %c0_2 = arith.constant 0 : index
    %c0_3 = arith.constant 0 : index
    %2 = vector.load %arg2[%c0_2, %c0_3] : memref<1x32xf32, #tpu.memory_space<vmem>>, vector<1x32xf32>
    %c0_4 = arith.constant 0 : index
    %c0_5 = arith.constant 0 : index
    %3 = vector.load %arg3[%c0_4, %c0_5] : memref<1x32xf32, #tpu.memory_space<vmem>>, vector<1x32xf32>
    %cst = arith.constant dense<0.000000e+00> : vector<16xf32>
    %4 = vector.multi_reduction <add>, %1, %cst [1] : vector<16x32xf32> to vector<16xf32>
    %5 = vector.shape_cast %4 : vector<16xf32> to vector<16x1xf32>
    %cst_6 = arith.constant 3.200000e+01 : f32
    %6 = vector.broadcast %cst_6 : f32 to vector<16x1xf32>
    %7 = arith.divf %5, %6 : vector<16x1xf32>
    %8 = vector.broadcast %7 : vector<16x1xf32> to vector<16x32xf32>
    %9 = arith.subf %1, %8 : vector<16x32xf32>
    %10 = arith.mulf %9, %9 : vector<16x32xf32>
    %cst_7 = arith.constant dense<0.000000e+00> : vector<16xf32>
    %11 = vector.multi_reduction <add>, %10, %cst_7 [1] : vector<16x32xf32> to vector<16xf32>
    %12 = vector.shape_cast %11 : vector<16xf32> to vector<16x1xf32>
    %cst_8 = arith.constant 3.200000e+01 : f32
    %13 = vector.broadcast %cst_8 : f32 to vector<16x1xf32>
    %14 = arith.divf %12, %13 : vector<16x1xf32>
    %cst_9 = arith.constant 9.99999974E-6 : f32
    %15 = vector.broadcast %cst_9 : f32 to vector<16x1xf32>
    %16 = arith.addf %14, %15 : vector<16x1xf32>
    %17 = math.rsqrt %16 : vector<16x1xf32>
    %18 = vector.broadcast %17 : vector<16x1xf32> to vector<16x32xf32>
    %19 = arith.mulf %9, %18 : vector<16x32xf32>
    %20 = vector.broadcast %2 : vector<1x32xf32> to vector<16x32xf32>
    %21 = arith.mulf %19, %20 : vector<16x32xf32>
    %22 = vector.broadcast %3 : vector<1x32xf32> to vector<16x32xf32>
    %23 = arith.addf %21, %22 : vector<16x32xf32>
    %24 = arith.truncf %23 : vector<16x32xf32> to vector<16x32xbf16>
    %c0_10 = arith.constant 0 : index
    %c0_11 = arith.constant 0 : index
    %25 = vector.load %arg4[%c0_10, %c0_11] : memref<32x96xbf16, #tpu.memory_space<vmem>>, vector<32x96xbf16>
    %cst_12 = arith.constant dense<0.000000e+00> : vector<16x96xf32>
    %26 = tpu.matmul %24, %25, %cst_12 {dimension_numbers = #tpu.dot_dimension_numbers<[1], [0], [0], [1], [0, 0, 1, 1], [], []>} : vector<16x32xbf16>, vector<32x96xbf16>, vector<16x96xf32> -> vector<16x96xf32>
    %c0_13 = arith.constant 0 : index
    %c0_14 = arith.constant 0 : index
    %27 = vector.load %arg5[%c0_13, %c0_14] : memref<1x96xf32, #tpu.memory_space<vmem>>, vector<1x96xf32>
    %28 = vector.broadcast %27 : vector<1x96xf32> to vector<16x96xf32>
    %29 = arith.addf %26, %28 : vector<16x96xf32>
    %30 = arith.truncf %29 : vector<16x96xf32> to vector<16x96xbf16>
    %31 = vector.extract_strided_slice %30 {offsets = [0, 0], sizes = [16, 8], strides = [1, 1]} : vector<16x96xbf16> to vector<16x8xbf16>
    %32 = vector.shape_cast %31 : vector<16x8xbf16> to vector<2x8x8xbf16>
    %33 = vector.extract_strided_slice %30 {offsets = [0, 32], sizes = [16, 8], strides = [1, 1]} : vector<16x96xbf16> to vector<16x8xbf16>
    %34 = vector.shape_cast %33 : vector<16x8xbf16> to vector<2x8x8xbf16>
    %35 = vector.extract_strided_slice %30 {offsets = [0, 64], sizes = [16, 8], strides = [1, 1]} : vector<16x96xbf16> to vector<16x8xbf16>
    %36 = vector.shape_cast %35 : vector<16x8xbf16> to vector<2x8x8xbf16>
    "tpu.trace_start"() <{level = 10 : i32, message = "bqd,bkd->bqk"}> : () -> ()
    %cst_15 = arith.constant dense<0.000000e+00> : vector<2x8x8xf32>
    %37 = tpu.matmul %32, %34, %cst_15 {dimension_numbers = #tpu.dot_dimension_numbers<[2], [2], [1], [1], [0, 0, 0, 1, 1, 1], [0], [0]>} : vector<2x8x8xbf16>, vector<2x8x8xbf16>, vector<2x8x8xf32> -> vector<2x8x8xf32>
    "tpu.trace_stop"() : () -> ()
    %cst_16 = arith.constant 0.353553385 : f32
    %38 = vector.broadcast %cst_16 : f32 to vector<2x8x8xf32>
    %39 = arith.mulf %37, %38 : vector<2x8x8xf32>
    %cst_17 = arith.constant dense<0xFF800000> : vector<2x8xf32>
    %40 = vector.multi_reduction <maximumf>, %39, %cst_17 [2] : vector<2x8x8xf32> to vector<2x8xf32>
    %41 = vector.shape_cast %40 : vector<2x8xf32> to vector<2x8x1xf32>
    %42 = vector.broadcast %41 : vector<2x8x1xf32> to vector<2x8x8xf32>
    %43 = arith.subf %39, %42 : vector<2x8x8xf32>
    %44 = math.exp %43 : vector<2x8x8xf32>
    %cst_18 = arith.constant dense<0.000000e+00> : vector<2x8xf32>
    %45 = vector.multi_reduction <add>, %44, %cst_18 [2] : vector<2x8x8xf32> to vector<2x8xf32>
    %46 = vector.shape_cast %45 : vector<2x8xf32> to vector<2x8x1xf32>
    %47 = tpu.reciprocal %46 {approx = true} : vector<2x8x1xf32> -> vector<2x8x1xf32>
    %48 = vector.broadcast %47 : vector<2x8x1xf32> to vector<2x8x8xf32>
    %49 = arith.mulf %44, %48 : vector<2x8x8xf32>
    %50 = arith.truncf %49 : vector<2x8x8xf32> to vector<2x8x8xbf16>
    "tpu.trace_start"() <{level = 10 : i32, message = "bqk,bkd->bqd"}> : () -> ()
    %cst_19 = arith.constant dense<0.000000e+00> : vector<2x8x8xf32>
    %51 = tpu.matmul %50, %36, %cst_19 {dimension_numbers = #tpu.dot_dimension_numbers<[2], [1], [1], [2], [0, 0, 0, 1, 1, 2], [0], [0]>} : vector<2x8x8xbf16>, vector<2x8x8xbf16>, vector<2x8x8xf32> -> vector<2x8x8xf32>
    "tpu.trace_stop"() : () -> ()
    %52 = vector.shape_cast %51 : vector<2x8x8xf32> to vector<16x8xf32>
    %53 = arith.truncf %52 : vector<16x8xf32> to vector<16x8xbf16>
    %c0_20 = arith.constant 0 : index
    %c0_21 = arith.constant 0 : index
    %54 = vector.load %arg6[%c0_20, %c0_21] : memref<32x32xbf16, #tpu.memory_space<vmem>>, vector<8x32xbf16>
    %cst_22 = arith.constant dense<0.000000e+00> : vector<16x32xf32>
    %55 = tpu.matmul %53, %54, %cst_22 {dimension_numbers = #tpu.dot_dimension_numbers<[1], [0], [0], [1], [0, 0, 1, 1], [], []>} : vector<16x8xbf16>, vector<8x32xbf16>, vector<16x32xf32> -> vector<16x32xf32>
    %56 = vector.extract_strided_slice %30 {offsets = [0, 8], sizes = [16, 8], strides = [1, 1]} : vector<16x96xbf16> to vector<16x8xbf16>
    %57 = vector.shape_cast %56 : vector<16x8xbf16> to vector<2x8x8xbf16>
    %58 = vector.extract_strided_slice %30 {offsets = [0, 40], sizes = [16, 8], strides = [1, 1]} : vector<16x96xbf16> to vector<16x8xbf16>
    %59 = vector.shape_cast %58 : vector<16x8xbf16> to vector<2x8x8xbf16>
    %60 = vector.extract_strided_slice %30 {offsets = [0, 72], sizes = [16, 8], strides = [1, 1]} : vector<16x96xbf16> to vector<16x8xbf16>
    %61 = vector.shape_cast %60 : vector<16x8xbf16> to vector<2x8x8xbf16>
    "tpu.trace_start"() <{level = 10 : i32, message = "bqd,bkd->bqk"}> : () -> ()
    %cst_23 = arith.constant dense<0.000000e+00> : vector<2x8x8xf32>
    %62 = tpu.matmul %57, %59, %cst_23 {dimension_numbers = #tpu.dot_dimension_numbers<[2], [2], [1], [1], [0, 0, 0, 1, 1, 1], [0], [0]>} : vector<2x8x8xbf16>, vector<2x8x8xbf16>, vector<2x8x8xf32> -> vector<2x8x8xf32>
    "tpu.trace_stop"() : () -> ()
    %cst_24 = arith.constant 0.353553385 : f32
    %63 = vector.broadcast %cst_24 : f32 to vector<2x8x8xf32>
    %64 = arith.mulf %62, %63 : vector<2x8x8xf32>
    %cst_25 = arith.constant dense<0xFF800000> : vector<2x8xf32>
    %65 = vector.multi_reduction <maximumf>, %64, %cst_25 [2] : vector<2x8x8xf32> to vector<2x8xf32>
    %66 = vector.shape_cast %65 : vector<2x8xf32> to vector<2x8x1xf32>
    %67 = vector.broadcast %66 : vector<2x8x1xf32> to vector<2x8x8xf32>
    %68 = arith.subf %64, %67 : vector<2x8x8xf32>
    %69 = math.exp %68 : vector<2x8x8xf32>
    %cst_26 = arith.constant dense<0.000000e+00> : vector<2x8xf32>
    %70 = vector.multi_reduction <add>, %69, %cst_26 [2] : vector<2x8x8xf32> to vector<2x8xf32>
    %71 = vector.shape_cast %70 : vector<2x8xf32> to vector<2x8x1xf32>
    %72 = tpu.reciprocal %71 {approx = true} : vector<2x8x1xf32> -> vector<2x8x1xf32>
    %73 = vector.broadcast %72 : vector<2x8x1xf32> to vector<2x8x8xf32>
    %74 = arith.mulf %69, %73 : vector<2x8x8xf32>
    %75 = arith.truncf %74 : vector<2x8x8xf32> to vector<2x8x8xbf16>
    "tpu.trace_start"() <{level = 10 : i32, message = "bqk,bkd->bqd"}> : () -> ()
    %cst_27 = arith.constant dense<0.000000e+00> : vector<2x8x8xf32>
    %76 = tpu.matmul %75, %61, %cst_27 {dimension_numbers = #tpu.dot_dimension_numbers<[2], [1], [1], [2], [0, 0, 0, 1, 1, 2], [0], [0]>} : vector<2x8x8xbf16>, vector<2x8x8xbf16>, vector<2x8x8xf32> -> vector<2x8x8xf32>
    "tpu.trace_stop"() : () -> ()
    %77 = vector.shape_cast %76 : vector<2x8x8xf32> to vector<16x8xf32>
    %78 = arith.truncf %77 : vector<16x8xf32> to vector<16x8xbf16>
    %c8 = arith.constant 8 : index
    %c0_28 = arith.constant 0 : index
    %79 = vector.load %arg6[%c8, %c0_28] : memref<32x32xbf16, #tpu.memory_space<vmem>>, vector<8x32xbf16>
    %cst_29 = arith.constant dense<0.000000e+00> : vector<16x32xf32>
    %80 = tpu.matmul %78, %79, %cst_29 {dimension_numbers = #tpu.dot_dimension_numbers<[1], [0], [0], [1], [0, 0, 1, 1], [], []>} : vector<16x8xbf16>, vector<8x32xbf16>, vector<16x32xf32> -> vector<16x32xf32>
    %81 = arith.addf %55, %80 : vector<16x32xf32>
    %82 = vector.extract_strided_slice %30 {offsets = [0, 16], sizes = [16, 8], strides = [1, 1]} : vector<16x96xbf16> to vector<16x8xbf16>
    %83 = vector.shape_cast %82 : vector<16x8xbf16> to vector<2x8x8xbf16>
    %84 = vector.extract_strided_slice %30 {offsets = [0, 48], sizes = [16, 8], strides = [1, 1]} : vector<16x96xbf16> to vector<16x8xbf16>
    %85 = vector.shape_cast %84 : vector<16x8xbf16> to vector<2x8x8xbf16>
    %86 = vector.extract_strided_slice %30 {offsets = [0, 80], sizes = [16, 8], strides = [1, 1]} : vector<16x96xbf16> to vector<16x8xbf16>
    %87 = vector.shape_cast %86 : vector<16x8xbf16> to vector<2x8x8xbf16>
    "tpu.trace_start"() <{level = 10 : i32, message = "bqd,bkd->bqk"}> : () -> ()
    %cst_30 = arith.constant dense<0.000000e+00> : vector<2x8x8xf32>
    %88 = tpu.matmul %83, %85, %cst_30 {dimension_numbers = #tpu.dot_dimension_numbers<[2], [2], [1], [1], [0, 0, 0, 1, 1, 1], [0], [0]>} : vector<2x8x8xbf16>, vector<2x8x8xbf16>, vector<2x8x8xf32> -> vector<2x8x8xf32>
    "tpu.trace_stop"() : () -> ()
    %cst_31 = arith.constant 0.353553385 : f32
    %89 = vector.broadcast %cst_31 : f32 to vector<2x8x8xf32>
    %90 = arith.mulf %88, %89 : vector<2x8x8xf32>
    %cst_32 = arith.constant dense<0xFF800000> : vector<2x8xf32>
    %91 = vector.multi_reduction <maximumf>, %90, %cst_32 [2] : vector<2x8x8xf32> to vector<2x8xf32>
    %92 = vector.shape_cast %91 : vector<2x8xf32> to vector<2x8x1xf32>
    %93 = vector.broadcast %92 : vector<2x8x1xf32> to vector<2x8x8xf32>
    %94 = arith.subf %90, %93 : vector<2x8x8xf32>
    %95 = math.exp %94 : vector<2x8x8xf32>
    %cst_33 = arith.constant dense<0.000000e+00> : vector<2x8xf32>
    %96 = vector.multi_reduction <add>, %95, %cst_33 [2] : vector<2x8x8xf32> to vector<2x8xf32>
    %97 = vector.shape_cast %96 : vector<2x8xf32> to vector<2x8x1xf32>
    %98 = tpu.reciprocal %97 {approx = true} : vector<2x8x1xf32> -> vector<2x8x1xf32>
    %99 = vector.broadcast %98 : vector<2x8x1xf32> to vector<2x8x8xf32>
    %100 = arith.mulf %95, %99 : vector<2x8x8xf32>
    %101 = arith.truncf %100 : vector<2x8x8xf32> to vector<2x8x8xbf16>
    "tpu.trace_start"() <{level = 10 : i32, message = "bqk,bkd->bqd"}> : () -> ()
    %cst_34 = arith.constant dense<0.000000e+00> : vector<2x8x8xf32>
    %102 = tpu.matmul %101, %87, %cst_34 {dimension_numbers = #tpu.dot_dimension_numbers<[2], [1], [1], [2], [0, 0, 0, 1, 1, 2], [0], [0]>} : vector<2x8x8xbf16>, vector<2x8x8xbf16>, vector<2x8x8xf32> -> vector<2x8x8xf32>
    "tpu.trace_stop"() : () -> ()
    %103 = vector.shape_cast %102 : vector<2x8x8xf32> to vector<16x8xf32>
    %104 = arith.truncf %103 : vector<16x8xf32> to vector<16x8xbf16>
    %c16 = arith.constant 16 : index
    %c0_35 = arith.constant 0 : index
    %105 = vector.load %arg6[%c16, %c0_35] : memref<32x32xbf16, #tpu.memory_space<vmem>>, vector<8x32xbf16>
    %cst_36 = arith.constant dense<0.000000e+00> : vector<16x32xf32>
    %106 = tpu.matmul %104, %105, %cst_36 {dimension_numbers = #tpu.dot_dimension_numbers<[1], [0], [0], [1], [0, 0, 1, 1], [], []>} : vector<16x8xbf16>, vector<8x32xbf16>, vector<16x32xf32> -> vector<16x32xf32>
    %107 = arith.addf %81, %106 : vector<16x32xf32>
    %108 = vector.extract_strided_slice %30 {offsets = [0, 24], sizes = [16, 8], strides = [1, 1]} : vector<16x96xbf16> to vector<16x8xbf16>
    %109 = vector.shape_cast %108 : vector<16x8xbf16> to vector<2x8x8xbf16>
    %110 = vector.extract_strided_slice %30 {offsets = [0, 56], sizes = [16, 8], strides = [1, 1]} : vector<16x96xbf16> to vector<16x8xbf16>
    %111 = vector.shape_cast %110 : vector<16x8xbf16> to vector<2x8x8xbf16>
    %112 = vector.extract_strided_slice %30 {offsets = [0, 88], sizes = [16, 8], strides = [1, 1]} : vector<16x96xbf16> to vector<16x8xbf16>
    %113 = vector.shape_cast %112 : vector<16x8xbf16> to vector<2x8x8xbf16>
    "tpu.trace_start"() <{level = 10 : i32, message = "bqd,bkd->bqk"}> : () -> ()
    %cst_37 = arith.constant dense<0.000000e+00> : vector<2x8x8xf32>
    %114 = tpu.matmul %109, %111, %cst_37 {dimension_numbers = #tpu.dot_dimension_numbers<[2], [2], [1], [1], [0, 0, 0, 1, 1, 1], [0], [0]>} : vector<2x8x8xbf16>, vector<2x8x8xbf16>, vector<2x8x8xf32> -> vector<2x8x8xf32>
    "tpu.trace_stop"() : () -> ()
    %cst_38 = arith.constant 0.353553385 : f32
    %115 = vector.broadcast %cst_38 : f32 to vector<2x8x8xf32>
    %116 = arith.mulf %114, %115 : vector<2x8x8xf32>
    %cst_39 = arith.constant dense<0xFF800000> : vector<2x8xf32>
    %117 = vector.multi_reduction <maximumf>, %116, %cst_39 [2] : vector<2x8x8xf32> to vector<2x8xf32>
    %118 = vector.shape_cast %117 : vector<2x8xf32> to vector<2x8x1xf32>
    %119 = vector.broadcast %118 : vector<2x8x1xf32> to vector<2x8x8xf32>
    %120 = arith.subf %116, %119 : vector<2x8x8xf32>
    %121 = math.exp %120 : vector<2x8x8xf32>
    %cst_40 = arith.constant dense<0.000000e+00> : vector<2x8xf32>
    %122 = vector.multi_reduction <add>, %121, %cst_40 [2] : vector<2x8x8xf32> to vector<2x8xf32>
    %123 = vector.shape_cast %122 : vector<2x8xf32> to vector<2x8x1xf32>
    %124 = tpu.reciprocal %123 {approx = true} : vector<2x8x1xf32> -> vector<2x8x1xf32>
    %125 = vector.broadcast %124 : vector<2x8x1xf32> to vector<2x8x8xf32>
    %126 = arith.mulf %121, %125 : vector<2x8x8xf32>
    %127 = arith.truncf %126 : vector<2x8x8xf32> to vector<2x8x8xbf16>
    "tpu.trace_start"() <{level = 10 : i32, message = "bqk,bkd->bqd"}> : () -> ()
    %cst_41 = arith.constant dense<0.000000e+00> : vector<2x8x8xf32>
    %128 = tpu.matmul %127, %113, %cst_41 {dimension_numbers = #tpu.dot_dimension_numbers<[2], [1], [1], [2], [0, 0, 0, 1, 1, 2], [0], [0]>} : vector<2x8x8xbf16>, vector<2x8x8xbf16>, vector<2x8x8xf32> -> vector<2x8x8xf32>
    "tpu.trace_stop"() : () -> ()
    %129 = vector.shape_cast %128 : vector<2x8x8xf32> to vector<16x8xf32>
    %130 = arith.truncf %129 : vector<16x8xf32> to vector<16x8xbf16>
    %c24 = arith.constant 24 : index
    %c0_42 = arith.constant 0 : index
    %131 = vector.load %arg6[%c24, %c0_42] : memref<32x32xbf16, #tpu.memory_space<vmem>>, vector<8x32xbf16>
    %cst_43 = arith.constant dense<0.000000e+00> : vector<16x32xf32>
    %132 = tpu.matmul %130, %131, %cst_43 {dimension_numbers = #tpu.dot_dimension_numbers<[1], [0], [0], [1], [0, 0, 1, 1], [], []>} : vector<16x8xbf16>, vector<8x32xbf16>, vector<16x32xf32> -> vector<16x32xf32>
    %133 = arith.addf %107, %132 : vector<16x32xf32>
    %134 = arith.addf %1, %133 : vector<16x32xf32>
    %c0_44 = arith.constant 0 : index
    %c0_45 = arith.constant 0 : index
    %135 = vector.load %arg7[%c0_44, %c0_45] : memref<1x32xf32, #tpu.memory_space<vmem>>, vector<1x32xf32>
    %136 = vector.broadcast %135 : vector<1x32xf32> to vector<16x32xf32>
    %137 = arith.addf %134, %136 : vector<16x32xf32>
    %c0_46 = arith.constant 0 : index
    %c0_47 = arith.constant 0 : index
    %138 = vector.load %arg8[%c0_46, %c0_47] : memref<1x32xf32, #tpu.memory_space<vmem>>, vector<1x32xf32>
    %c0_48 = arith.constant 0 : index
    %c0_49 = arith.constant 0 : index
    %139 = vector.load %arg9[%c0_48, %c0_49] : memref<1x32xf32, #tpu.memory_space<vmem>>, vector<1x32xf32>
    %cst_50 = arith.constant dense<0.000000e+00> : vector<16xf32>
    %140 = vector.multi_reduction <add>, %137, %cst_50 [1] : vector<16x32xf32> to vector<16xf32>
    %141 = vector.shape_cast %140 : vector<16xf32> to vector<16x1xf32>
    %cst_51 = arith.constant 3.200000e+01 : f32
    %142 = vector.broadcast %cst_51 : f32 to vector<16x1xf32>
    %143 = arith.divf %141, %142 : vector<16x1xf32>
    %144 = vector.broadcast %143 : vector<16x1xf32> to vector<16x32xf32>
    %145 = arith.subf %137, %144 : vector<16x32xf32>
    %146 = arith.mulf %145, %145 : vector<16x32xf32>
    %cst_52 = arith.constant dense<0.000000e+00> : vector<16xf32>
    %147 = vector.multi_reduction <add>, %146, %cst_52 [1] : vector<16x32xf32> to vector<16xf32>
    %148 = vector.shape_cast %147 : vector<16xf32> to vector<16x1xf32>
    %cst_53 = arith.constant 3.200000e+01 : f32
    %149 = vector.broadcast %cst_53 : f32 to vector<16x1xf32>
    %150 = arith.divf %148, %149 : vector<16x1xf32>
    %cst_54 = arith.constant 9.99999974E-6 : f32
    %151 = vector.broadcast %cst_54 : f32 to vector<16x1xf32>
    %152 = arith.addf %150, %151 : vector<16x1xf32>
    %153 = math.rsqrt %152 : vector<16x1xf32>
    %154 = vector.broadcast %153 : vector<16x1xf32> to vector<16x32xf32>
    %155 = arith.mulf %145, %154 : vector<16x32xf32>
    %156 = vector.broadcast %138 : vector<1x32xf32> to vector<16x32xf32>
    %157 = arith.mulf %155, %156 : vector<16x32xf32>
    %158 = vector.broadcast %139 : vector<1x32xf32> to vector<16x32xf32>
    %159 = arith.addf %157, %158 : vector<16x32xf32>
    %160 = arith.truncf %159 : vector<16x32xf32> to vector<16x32xbf16>
    %c0_55 = arith.constant 0 : index
    %c0_56 = arith.constant 0 : index
    %161 = vector.load %arg10[%c0_55, %c0_56] : memref<32x64xbf16, #tpu.memory_space<vmem>>, vector<32x64xbf16>
    %cst_57 = arith.constant dense<0.000000e+00> : vector<16x64xf32>
    %162 = tpu.matmul %160, %161, %cst_57 {dimension_numbers = #tpu.dot_dimension_numbers<[1], [0], [0], [1], [0, 0, 1, 1], [], []>} : vector<16x32xbf16>, vector<32x64xbf16>, vector<16x64xf32> -> vector<16x64xf32>
    %c0_58 = arith.constant 0 : index
    %c0_59 = arith.constant 0 : index
    %163 = vector.load %arg11[%c0_58, %c0_59] : memref<1x64xf32, #tpu.memory_space<vmem>>, vector<1x64xf32>
    %164 = vector.broadcast %163 : vector<1x64xf32> to vector<16x64xf32>
    %165 = arith.addf %162, %164 : vector<16x64xf32>
    %166 = arith.mulf %165, %165 : vector<16x64xf32>
    %167 = arith.mulf %165, %166 : vector<16x64xf32>
    %cst_60 = arith.constant 4.471500e-02 : f32
    %168 = vector.broadcast %cst_60 : f32 to vector<16x64xf32>
    %169 = arith.mulf %168, %167 : vector<16x64xf32>
    %170 = arith.addf %165, %169 : vector<16x64xf32>
    %cst_61 = arith.constant 0.797884583 : f32
    %171 = vector.broadcast %cst_61 : f32 to vector<16x64xf32>
    %172 = arith.mulf %171, %170 : vector<16x64xf32>
    %173 = math.tanh %172 : vector<16x64xf32>
    %cst_62 = arith.constant 1.000000e+00 : f32
    %174 = vector.broadcast %cst_62 : f32 to vector<16x64xf32>
    %175 = arith.addf %174, %173 : vector<16x64xf32>
    %cst_63 = arith.constant 5.000000e-01 : f32
    %176 = vector.broadcast %cst_63 : f32 to vector<16x64xf32>
    %177 = arith.mulf %176, %175 : vector<16x64xf32>
    %178 = arith.mulf %165, %177 : vector<16x64xf32>
    %179 = arith.truncf %178 : vector<16x64xf32> to vector<16x64xbf16>
    %c0_64 = arith.constant 0 : index
    %c0_65 = arith.constant 0 : index
    %180 = vector.load %arg12[%c0_64, %c0_65] : memref<64x32xbf16, #tpu.memory_space<vmem>>, vector<64x32xbf16>
    %cst_66 = arith.constant dense<0.000000e+00> : vector<16x32xf32>
    %181 = tpu.matmul %179, %180, %cst_66 {dimension_numbers = #tpu.dot_dimension_numbers<[1], [0], [0], [1], [0, 0, 1, 1], [], []>} : vector<16x64xbf16>, vector<64x32xbf16>, vector<16x32xf32> -> vector<16x32xf32>
    %c0_67 = arith.constant 0 : index
    %c0_68 = arith.constant 0 : index
    %182 = vector.load %arg13[%c0_67, %c0_68] : memref<1x32xf32, #tpu.memory_space<vmem>>, vector<1x32xf32>
    %183 = vector.broadcast %182 : vector<1x32xf32> to vector<16x32xf32>
    %184 = arith.addf %181, %183 : vector<16x32xf32>
    %185 = arith.addf %137, %184 : vector<16x32xf32>
    %186 = vector.shape_cast %185 : vector<16x32xf32> to vector<2x8x32xf32>
    %c0_69 = arith.constant 0 : index
    %c0_70 = arith.constant 0 : index
    %c0_71 = arith.constant 0 : index
    %187 = vector.load %arg14[%c0_69, %c0_70, %c0_71] : memref<2x8x32xf32, #tpu.memory_space<vmem>>, vector<2x8x32xf32>
    tpu.vector_store %arg14[%c0_69, %c0_70, %c0_71], %186 {strides = array<i32>} : memref<2x8x32xf32, #tpu.memory_space<vmem>>, vector<2x8x32xf32>,
    return
  }
  func.func @transform_0(%arg0: i32) -> (i32, i32, i32) {
    %c0_i32 = arith.constant 0 : i32
    %c0_i32_0 = arith.constant 0 : i32
    %c0_i32_1 = arith.constant 0 : i32
    return %arg0, %c0_i32, %c0_i32_0 : i32, i32, i32
  }
  func.func @transform_1(%arg0: i32) -> (i32, i32) {
    %c0_i32 = arith.constant 0 : i32
    %c0_i32_0 = arith.constant 0 : i32
    %c0_i32_1 = arith.constant 0 : i32
    return %c0_i32, %c0_i32_0 : i32, i32
  }
  func.func @transform_2(%arg0: i32) -> (i32, i32) {
    %c0_i32 = arith.constant 0 : i32
    %c0_i32_0 = arith.constant 0 : i32
    %c0_i32_1 = arith.constant 0 : i32
    return %c0_i32, %c0_i32_0 : i32, i32
  }
  func.func @transform_3(%arg0: i32) -> (i32, i32) {
    %c0_i32 = arith.constant 0 : i32
    %c0_i32_0 = arith.constant 0 : i32
    %c0_i32_1 = arith.constant 0 : i32
    return %c0_i32, %c0_i32_0 : i32, i32
  }
  func.func @transform_4(%arg0: i32) -> (i32, i32) {
    %c0_i32 = arith.constant 0 : i32
    %c0_i32_0 = arith.constant 0 : i32
    %c0_i32_1 = arith.constant 0 : i32
    return %c0_i32, %c0_i32_0 : i32, i32
  }
  func.func @transform_5(%arg0: i32) -> (i32, i32) {
    %c0_i32 = arith.constant 0 : i32
    %c0_i32_0 = arith.constant 0 : i32
    %c0_i32_1 = arith.constant 0 : i32
    return %c0_i32, %c0_i32_0 : i32, i32
  }
  func.func @transform_6(%arg0: i32) -> (i32, i32) {
    %c0_i32 = arith.constant 0 : i32
    %c0_i32_0 = arith.constant 0 : i32
    %c0_i32_1 = arith.constant 0 : i32
    return %c0_i32, %c0_i32_0 : i32, i32
  }
  func.func @transform_7(%arg0: i32) -> (i32, i32) {
    %c0_i32 = arith.constant 0 : i32
    %c0_i32_0 = arith.constant 0 : i32
    %c0_i32_1 = arith.constant 0 : i32
    return %c0_i32, %c0_i32_0 : i32, i32
  }
  func.func @transform_8(%arg0: i32) -> (i32, i32) {
    %c0_i32 = arith.constant 0 : i32
    %c0_i32_0 = arith.constant 0 : i32
    %c0_i32_1 = arith.constant 0 : i32
    return %c0_i32, %c0_i32_0 : i32, i32
  }
  func.func @transform_9(%arg0: i32) -> (i32, i32) {
    %c0_i32 = arith.constant 0 : i32
    %c0_i32_0 = arith.constant 0 : i32
    %c0_i32_1 = arith.constant 0 : i32
    return %c0_i32, %c0_i32_0 : i32, i32
  }
  func.func @transform_10(%arg0: i32) -> (i32, i32) {
    %c0_i32 = arith.constant 0 : i32
    %c0_i32_0 = arith.constant 0 : i32
    %c0_i32_1 = arith.constant 0 : i32
    return %c0_i32, %c0_i32_0 : i32, i32
  }
  func.func @transform_11(%arg0: i32) -> (i32, i32) {
    %c0_i32 = arith.constant 0 : i32
    %c0_i32_0 = arith.constant 0 : i32
    %c0_i32_1 = arith.constant 0 : i32
    return %c0_i32, %c0_i32_0 : i32, i32
  }
  func.func @transform_12(%arg0: i32) -> (i32, i32) {
    %c0_i32 = arith.constant 0 : i32
    %c0_i32_0 = arith.constant 0 : i32
    %c0_i32_1 = arith.constant 0 : i32
    return %c0_i32, %c0_i32_0 : i32, i32
  }
  func.func @transform_13(%arg0: i32) -> (i32, i32, i32) {
    %c0_i32 = arith.constant 0 : i32
    %c0_i32_0 = arith.constant 0 : i32
    %c0_i32_1 = arith.constant 0 : i32
    return %arg0, %c0_i32, %c0_i32_0 : i32, i32, i32
  }
}

module attributes {stable_mosaic.version = 11 : i64} {
  func.func @_attention_block_kernel(%arg0: i32, %arg1: memref<2x8x32xf32, #tpu.memory_space<vmem>>, %arg2: memref<1x32xf32, #tpu.memory_space<vmem>>, %arg3: memref<1x32xf32, #tpu.memory_space<vmem>>, %arg4: memref<32x96xbf16, #tpu.memory_space<vmem>>, %arg5: memref<1x96xf32, #tpu.memory_space<vmem>>, %arg6: memref<32x32xbf16, #tpu.memory_space<vmem>>, %arg7: memref<1x32xf32, #tpu.memory_space<vmem>>, %arg8: memref<1x32xf32, #tpu.memory_space<vmem>>, %arg9: memref<1x32xf32, #tpu.memory_space<vmem>>, %arg10: memref<32x64xbf16, #tpu.memory_space<vmem>>, %arg11: memref<1x64xf32, #tpu.memory_space<vmem>>, %arg12: memref<64x32xbf16, #tpu.memory_space<vmem>>, %arg13: memref<1x32xf32, #tpu.memory_space<vmem>>, %arg14: memref<2x8x32xf32, #tpu.memory_space<vmem>>) attributes {dimension_semantics = [#tpu.dimension_semantics<parallel>], iteration_bounds = array<i64: 1>, scalar_prefetch = 0 : i64, scratch_operands = 0 : i64, tpu.core_type = #tpu.core_type<tc>, window_params = [{transform_indices = @transform_0, window_bounds = array<i64: 2, 8, 32>}, {pipeline_mode = #tpu.pipeline_mode<synchronous>, transform_indices = @transform_1, window_bounds = array<i64: 1, 32>}, {pipeline_mode = #tpu.pipeline_mode<synchronous>, transform_indices = @transform_2, window_bounds = array<i64: 1, 32>}, {pipeline_mode = #tpu.pipeline_mode<synchronous>, transform_indices = @transform_3, window_bounds = array<i64: 32, 96>}, {pipeline_mode = #tpu.pipeline_mode<synchronous>, transform_indices = @transform_4, window_bounds = array<i64: 1, 96>}, {pipeline_mode = #tpu.pipeline_mode<synchronous>, transform_indices = @transform_5, window_bounds = array<i64: 32, 32>}, {pipeline_mode = #tpu.pipeline_mode<synchronous>, transform_indices = @transform_6, window_bounds = array<i64: 1, 32>}, {pipeline_mode = #tpu.pipeline_mode<synchronous>, transform_indices = @transform_7, window_bounds = array<i64: 1, 32>}, {pipeline_mode = #tpu.pipeline_mode<synchronous>, transform_indices = @transform_8, window_bounds = array<i64: 1, 32>}, {pipeline_mode = #tpu.pipeline_mode<synchronous>, transform_indices = @transform_9, window_bounds = array<i64: 32, 64>}, {pipeline_mode = #tpu.pipeline_mode<synchronous>, transform_indices = @transform_10, window_bounds = array<i64: 1, 64>}, {pipeline_mode = #tpu.pipeline_mode<synchronous>, transform_indices = @transform_11, window_bounds = array<i64: 64, 32>}, {pipeline_mode = #tpu.pipeline_mode<synchronous>, transform_indices = @transform_12, window_bounds = array<i64: 1, 32>}, {transform_indices = @transform_13, window_bounds = array<i64: 2, 8, 32>}]} {
    %c0 = arith.constant 0 : index
    %c0_0 = arith.constant 0 : index
    %c0_1 = arith.constant 0 : index
    %0 = vector.load %arg1[%c0, %c0_0, %c0_1] : memref<2x8x32xf32, #tpu.memory_space<vmem>>, vector<2x8x32xf32>
    %1 = vector.shape_cast %0 : vector<2x8x32xf32> to vector<16x32xf32>
    %c0_2 = arith.constant 0 : index
    %c0_3 = arith.constant 0 : index
    %2 = vector.load %arg2[%c0_2, %c0_3] : memref<1x32xf32, #tpu.memory_space<vmem>>, vector<1x32xf32>
    %c0_4 = arith.constant 0 : index
    %c0_5 = arith.constant 0 : index
    %3 = vector.load %arg3[%c0_4, %c0_5] : memref<1x32xf32, #tpu.memory_space<vmem>>, vector<1x32xf32>
    %cst = arith.constant dense<0.000000e+00> : vector<16xf32>
    %4 = vector.multi_reduction <add>, %1, %cst [1] : vector<16x32xf32> to vector<16xf32>
    %5 = vector.shape_cast %4 : vector<16xf32> to vector<16x1xf32>
    %cst_6 = arith.constant 3.200000e+01 : f32
    %6 = vector.broadcast %cst_6 : f32 to vector<16x1xf32>
    %7 = arith.divf %5, %6 : vector<16x1xf32>
    %8 = vector.broadcast %7 : vector<16x1xf32> to vector<16x32xf32>
    %9 = arith.subf %1, %8 : vector<16x32xf32>
    %10 = arith.mulf %9, %9 : vector<16x32xf32>
    %cst_7 = arith.constant dense<0.000000e+00> : vector<16xf32>
    %11 = vector.multi_reduction <add>, %10, %cst_7 [1] : vector<16x32xf32> to vector<16xf32>
    %12 = vector.shape_cast %11 : vector<16xf32> to vector<16x1xf32>
    %cst_8 = arith.constant 3.200000e+01 : f32
    %13 = vector.broadcast %cst_8 : f32 to vector<16x1xf32>
    %14 = arith.divf %12, %13 : vector<16x1xf32>
    %cst_9 = arith.constant 9.99999974E-6 : f32
    %15 = vector.broadcast %cst_9 : f32 to vector<16x1xf32>
    %16 = arith.addf %14, %15 : vector<16x1xf32>
    %17 = math.rsqrt %16 : vector<16x1xf32>
    %18 = vector.broadcast %17 : vector<16x1xf32> to vector<16x32xf32>
    %19 = arith.mulf %9, %18 : vector<16x32xf32>
    %20 = vector.broadcast %2 : vector<1x32xf32> to vector<16x32xf32>
    %21 = arith.mulf %19, %20 : vector<16x32xf32>
    %22 = vector.broadcast %3 : vector<1x32xf32> to vector<16x32xf32>
    %23 = arith.addf %21, %22 : vector<16x32xf32>
    %24 = arith.truncf %23 : vector<16x32xf32> to vector<16x32xbf16>
    %c0_10 = arith.constant 0 : index
    %c0_11 = arith.constant 0 : index
    %25 = vector.load %arg4[%c0_10, %c0_11] : memref<32x96xbf16, #tpu.memory_space<vmem>>, vector<32x96xbf16>
    %cst_12 = arith.constant dense<0.000000e+00> : vector<16x96xf32>
    %26 = tpu.matmul %24, %25, %cst_12 {dimension_numbers = #tpu.dot_dimension_numbers<[1], [0], [0], [1], [0, 0, 1, 1], [], []>} : vector<16x32xbf16>, vector<32x96xbf16>, vector<16x96xf32> -> vector<16x96xf32>
    %c0_13 = arith.constant 0 : index
    %c0_14 = arith.constant 0 : index
    %27 = vector.load %arg5[%c0_13, %c0_14] : memref<1x96xf32, #tpu.memory_space<vmem>>, vector<1x96xf32>
    %28 = vector.broadcast %27 : vector<1x96xf32> to vector<16x96xf32>
    %29 = arith.addf %26, %28 : vector<16x96xf32>
    %30 = arith.truncf %29 : vector<16x96xf32> to vector<16x96xbf16>
    %31 = vector.extract_strided_slice %30 {offsets = [0, 0], sizes = [16, 8], strides = [1, 1]} : vector<16x96xbf16> to vector<16x8xbf16>
    %32 = vector.shape_cast %31 : vector<16x8xbf16> to vector<2x8x8xbf16>
    %33 = vector.extract_strided_slice %30 {offsets = [0, 32], sizes = [16, 8], strides = [1, 1]} : vector<16x96xbf16> to vector<16x8xbf16>
    %34 = vector.shape_cast %33 : vector<16x8xbf16> to vector<2x8x8xbf16>
    %35 = vector.extract_strided_slice %30 {offsets = [0, 64], sizes = [16, 8], strides = [1, 1]} : vector<16x96xbf16> to vector<16x8xbf16>
    %36 = vector.shape_cast %35 : vector<16x8xbf16> to vector<2x8x8xbf16>
    "tpu.trace_start"() <{level = 10 : i32, message = "bqd,bkd->bqk"}> : () -> ()
    %cst_15 = arith.constant dense<0.000000e+00> : vector<2x8x8xf32>
    %37 = tpu.matmul %32, %34, %cst_15 {dimension_numbers = #tpu.dot_dimension_numbers<[2], [2], [1], [1], [0, 0, 0, 1, 1, 1], [0], [0]>} : vector<2x8x8xbf16>, vector<2x8x8xbf16>, vector<2x8x8xf32> -> vector<2x8x8xf32>
    "tpu.trace_stop"() : () -> ()
    %cst_16 = arith.constant 0.353553385 : f32
    %38 = vector.broadcast %cst_16 : f32 to vector<2x8x8xf32>
    %39 = arith.mulf %37, %38 : vector<2x8x8xf32>
    %cst_17 = arith.constant dense<0xFF800000> : vector<2x8xf32>
    %40 = vector.multi_reduction <maximumf>, %39, %cst_17 [2] : vector<2x8x8xf32> to vector<2x8xf32>
    %41 = vector.shape_cast %40 : vector<2x8xf32> to vector<2x8x1xf32>
    %42 = vector.broadcast %41 : vector<2x8x1xf32> to vector<2x8x8xf32>
    %43 = arith.subf %39, %42 : vector<2x8x8xf32>
    %44 = math.exp %43 : vector<2x8x8xf32>
    %cst_18 = arith.constant dense<0.000000e+00> : vector<2x8xf32>
    %45 = vector.multi_reduction <add>, %44, %cst_18 [2] : vector<2x8x8xf32> to vector<2x8xf32>
    %46 = vector.shape_cast %45 : vector<2x8xf32> to vector<2x8x1xf32>
    %47 = tpu.reciprocal %46 {approx = true} : vector<2x8x1xf32> -> vector<2x8x1xf32>
    %48 = vector.broadcast %47 : vector<2x8x1xf32> to vector<2x8x8xf32>
    %49 = arith.mulf %44, %48 : vector<2x8x8xf32>
    %50 = arith.truncf %49 : vector<2x8x8xf32> to vector<2x8x8xbf16>
    "tpu.trace_start"() <{level = 10 : i32, message = "bqk,bkd->bqd"}> : () -> ()
    %cst_19 = arith.constant dense<0.000000e+00> : vector<2x8x8xf32>
    %51 = tpu.matmul %50, %36, %cst_19 {dimension_numbers = #tpu.dot_dimension_numbers<[2], [1], [1], [2], [0, 0, 0, 1, 1, 2], [0], [0]>} : vector<2x8x8xbf16>, vector<2x8x8xbf16>, vector<2x8x8xf32> -> vector<2x8x8xf32>
    "tpu.trace_stop"() : () -> ()
    %52 = vector.shape_cast %51 : vector<2x8x8xf32> to vector<16x8xf32>
    %53 = arith.truncf %52 : vector<16x8xf32> to vector<16x8xbf16>
    %c0_20 = arith.constant 0 : index
    %c0_21 = arith.constant 0 : index
    %54 = vector.load %arg6[%c0_20, %c0_21] : memref<32x32xbf16, #tpu.memory_space<vmem>>, vector<8x32xbf16>
    %cst_22 = arith.constant dense<0.000000e+00> : vector<16x32xf32>
    %55 = tpu.matmul %53, %54, %cst_22 {dimension_numbers = #tpu.dot_dimension_numbers<[1], [0], [0], [1], [0, 0, 1, 1], [], []>} : vector<16x8xbf16>, vector<8x32xbf16>, vector<16x32xf32> -> vector<16x32xf32>
    %56 = vector.extract_strided_slice %30 {offsets = [0, 8], sizes = [16, 8], strides = [1, 1]} : vector<16x96xbf16> to vector<16x8xbf16>
    %57 = vector.shape_cast %56 : vector<16x8xbf16> to vector<2x8x8xbf16>
    %58 = vector.extract_strided_slice %30 {offsets = [0, 40], sizes = [16, 8], strides = [1, 1]} : vector<16x96xbf16> to vector<16x8xbf16>
    %59 = vector.shape_cast %58 : vector<16x8xbf16> to vector<2x8x8xbf16>
    %60 = vector.extract_strided_slice %30 {offsets = [0, 72], sizes = [16, 8], strides = [1, 1]} : vector<16x96xbf16> to vector<16x8xbf16>
    %61 = vector.shape_cast %60 : vector<16x8xbf16> to vector<2x8x8xbf16>
    "tpu.trace_start"() <{level = 10 : i32, message = "bqd,bkd->bqk"}> : () -> ()
    %cst_23 = arith.constant dense<0.000000e+00> : vector<2x8x8xf32>
    %62 = tpu.matmul %57, %59, %cst_23 {dimension_numbers = #tpu.dot_dimension_numbers<[2], [2], [1], [1], [0, 0, 0, 1, 1, 1], [0], [0]>} : vector<2x8x8xbf16>, vector<2x8x8xbf16>, vector<2x8x8xf32> -> vector<2x8x8xf32>
    "tpu.trace_stop"() : () -> ()
    %cst_24 = arith.constant 0.353553385 : f32
    %63 = vector.broadcast %cst_24 : f32 to vector<2x8x8xf32>
    %64 = arith.mulf %62, %63 : vector<2x8x8xf32>
    %cst_25 = arith.constant dense<0xFF800000> : vector<2x8xf32>
    %65 = vector.multi_reduction <maximumf>, %64, %cst_25 [2] : vector<2x8x8xf32> to vector<2x8xf32>
    %66 = vector.shape_cast %65 : vector<2x8xf32> to vector<2x8x1xf32>
    %67 = vector.broadcast %66 : vector<2x8x1xf32> to vector<2x8x8xf32>
    %68 = arith.subf %64, %67 : vector<2x8x8xf32>
    %69 = math.exp %68 : vector<2x8x8xf32>
    %cst_26 = arith.constant dense<0.000000e+00> : vector<2x8xf32>
    %70 = vector.multi_reduction <add>, %69, %cst_26 [2] : vector<2x8x8xf32> to vector<2x8xf32>
    %71 = vector.shape_cast %70 : vector<2x8xf32> to vector<2x8x1xf32>
    %72 = tpu.reciprocal %71 {approx = true} : vector<2x8x1xf32> -> vector<2x8x1xf32>
    %73 = vector.broadcast %72 : vector<2x8x1xf32> to vector<2x8x8xf32>
    %74 = arith.mulf %69, %73 : vector<2x8x8xf32>
    %75 = arith.truncf %74 : vector<2x8x8xf32> to vector<2x8x8xbf16>
    "tpu.trace_start"() <{level = 10 : i32, message = "bqk,bkd->bqd"}> : () -> ()
    %cst_27 = arith.constant dense<0.000000e+00> : vector<2x8x8xf32>
    %76 = tpu.matmul %75, %61, %cst_27 {dimension_numbers = #tpu.dot_dimension_numbers<[2], [1], [1], [2], [0, 0, 0, 1, 1, 2], [0], [0]>} : vector<2x8x8xbf16>, vector<2x8x8xbf16>, vector<2x8x8xf32> -> vector<2x8x8xf32>
    "tpu.trace_stop"() : () -> ()
    %77 = vector.shape_cast %76 : vector<2x8x8xf32> to vector<16x8xf32>
    %78 = arith.truncf %77 : vector<16x8xf32> to vector<16x8xbf16>
    %c8 = arith.constant 8 : index
    %c0_28 = arith.constant 0 : index
    %79 = vector.load %arg6[%c8, %c0_28] : memref<32x32xbf16, #tpu.memory_space<vmem>>, vector<8x32xbf16>
    %cst_29 = arith.constant dense<0.000000e+00> : vector<16x32xf32>
    %80 = tpu.matmul %78, %79, %cst_29 {dimension_numbers = #tpu.dot_dimension_numbers<[1], [0], [0], [1], [0, 0, 1, 1], [], []>} : vector<16x8xbf16>, vector<8x32xbf16>, vector<16x32xf32> -> vector<16x32xf32>
    %81 = arith.addf %55, %80 : vector<16x32xf32>
    %82 = vector.extract_strided_slice %30 {offsets = [0, 16], sizes = [16, 8], strides = [1, 1]} : vector<16x96xbf16> to vector<16x8xbf16>
    %83 = vector.shape_cast %82 : vector<16x8xbf16> to vector<2x8x8xbf16>
    %84 = vector.extract_strided_slice %30 {offsets = [0, 48], sizes = [16, 8], strides = [1, 1]} : vector<16x96xbf16> to vector<16x8xbf16>
    %85 = vector.shape_cast %84 : vector<16x8xbf16> to vector<2x8x8xbf16>
    %86 = vector.extract_strided_slice %30 {offsets = [0, 80], sizes = [16, 8], strides = [1, 1]} : vector<16x96xbf16> to vector<16x8xbf16>
    %87 = vector.shape_cast %86 : vector<16x8xbf16> to vector<2x8x8xbf16>
    "tpu.trace_start"() <{level = 10 : i32, message = "bqd,bkd->bqk"}> : () -> ()
    %cst_30 = arith.constant dense<0.000000e+00> : vector<2x8x8xf32>
    %88 = tpu.matmul %83, %85, %cst_30 {dimension_numbers = #tpu.dot_dimension_numbers<[2], [2], [1], [1], [0, 0, 0, 1, 1, 1], [0], [0]>} : vector<2x8x8xbf16>, vector<2x8x8xbf16>, vector<2x8x8xf32> -> vector<2x8x8xf32>
    "tpu.trace_stop"() : () -> ()
    %cst_31 = arith.constant 0.353553385 : f32
    %89 = vector.broadcast %cst_31 : f32 to vector<2x8x8xf32>
    %90 = arith.mulf %88, %89 : vector<2x8x8xf32>
    %cst_32 = arith.constant dense<0xFF800000> : vector<2x8xf32>
    %91 = vector.multi_reduction <maximumf>, %90, %cst_32 [2] : vector<2x8x8xf32> to vector<2x8xf32>
    %92 = vector.shape_cast %91 : vector<2x8xf32> to vector<2x8x1xf32>
    %93 = vector.broadcast %92 : vector<2x8x1xf32> to vector<2x8x8xf32>
    %94 = arith.subf %90, %93 : vector<2x8x8xf32>
    %95 = math.exp %94 : vector<2x8x8xf32>
    %cst_33 = arith.constant dense<0.000000e+00> : vector<2x8xf32>
    %96 = vector.multi_reduction <add>, %95, %cst_33 [2] : vector<2x8x8xf32> to vector<2x8xf32>
    %97 = vector.shape_cast %96 : vector<2x8xf32> to vector<2x8x1xf32>
    %98 = tpu.reciprocal %97 {approx = true} : vector<2x8x1xf32> -> vector<2x8x1xf32>
    %99 = vector.broadcast %98 : vector<2x8x1xf32> to vector<2x8x8xf32>
    %100 = arith.mulf %95, %99 : vector<2x8x8xf32>
    %101 = arith.truncf %100 : vector<2x8x8xf32> to vector<2x8x8xbf16>
    "tpu.trace_start"() <{level = 10 : i32, message = "bqk,bkd->bqd"}> : () -> ()
    %cst_34 = arith.constant dense<0.000000e+00> : vector<2x8x8xf32>
    %102 = tpu.matmul %101, %87, %cst_34 {dimension_numbers = #tpu.dot_dimension_numbers<[2], [1], [1], [2], [0, 0, 0, 1, 1, 2], [0], [0]>} : vector<2x8x8xbf16>, vector<2x8x8xbf16>, vector<2x8x8xf32> -> vector<2x8x8xf32>
    "tpu.trace_stop"() : () -> ()
    %103 = vector.shape_cast %102 : vector<2x8x8xf32> to vector<16x8xf32>
    %104 = arith.truncf %103 : vector<16x8xf32> to vector<16x8xbf16>
    %c16 = arith.constant 16 : index
    %c0_35 = arith.constant 0 : index
    %105 = vector.load %arg6[%c16, %c0_35] : memref<32x32xbf16, #tpu.memory_space<vmem>>, vector<8x32xbf16>
    %cst_36 = arith.constant dense<0.000000e+00> : vector<16x32xf32>
    %106 = tpu.matmul %104, %105, %cst_36 {dimension_numbers = #tpu.dot_dimension_numbers<[1], [0], [0], [1], [0, 0, 1, 1], [], []>} : vector<16x8xbf16>, vector<8x32xbf16>, vector<16x32xf32> -> vector<16x32xf32>
    %107 = arith.addf %81, %106 : vector<16x32xf32>
    %108 = vector.extract_strided_slice %30 {offsets = [0, 24], sizes = [16, 8], strides = [1, 1]} : vector<16x96xbf16> to vector<16x8xbf16>
    %109 = vector.shape_cast %108 : vector<16x8xbf16> to vector<2x8x8xbf16>
    %110 = vector.extract_strided_slice %30 {offsets = [0, 56], sizes = [16, 8], strides = [1, 1]} : vector<16x96xbf16> to vector<16x8xbf16>
    %111 = vector.shape_cast %110 : vector<16x8xbf16> to vector<2x8x8xbf16>
    %112 = vector.extract_strided_slice %30 {offsets = [0, 88], sizes = [16, 8], strides = [1, 1]} : vector<16x96xbf16> to vector<16x8xbf16>
    %113 = vector.shape_cast %112 : vector<16x8xbf16> to vector<2x8x8xbf16>
    "tpu.trace_start"() <{level = 10 : i32, message = "bqd,bkd->bqk"}> : () -> ()
    %cst_37 = arith.constant dense<0.000000e+00> : vector<2x8x8xf32>
    %114 = tpu.matmul %109, %111, %cst_37 {dimension_numbers = #tpu.dot_dimension_numbers<[2], [2], [1], [1], [0, 0, 0, 1, 1, 1], [0], [0]>} : vector<2x8x8xbf16>, vector<2x8x8xbf16>, vector<2x8x8xf32> -> vector<2x8x8xf32>
    "tpu.trace_stop"() : () -> ()
    %cst_38 = arith.constant 0.353553385 : f32
    %115 = vector.broadcast %cst_38 : f32 to vector<2x8x8xf32>
    %116 = arith.mulf %114, %115 : vector<2x8x8xf32>
    %cst_39 = arith.constant dense<0xFF800000> : vector<2x8xf32>
    %117 = vector.multi_reduction <maximumf>, %116, %cst_39 [2] : vector<2x8x8xf32> to vector<2x8xf32>
    %118 = vector.shape_cast %117 : vector<2x8xf32> to vector<2x8x1xf32>
    %119 = vector.broadcast %118 : vector<2x8x1xf32> to vector<2x8x8xf32>
    %120 = arith.subf %116, %119 : vector<2x8x8xf32>
    %121 = math.exp %120 : vector<2x8x8xf32>
    %cst_40 = arith.constant dense<0.000000e+00> : vector<2x8xf32>
    %122 = vector.multi_reduction <add>, %121, %cst_40 [2] : vector<2x8x8xf32> to vector<2x8xf32>
    %123 = vector.shape_cast %122 : vector<2x8xf32> to vector<2x8x1xf32>
    %124 = tpu.reciprocal %123 {approx = true} : vector<2x8x1xf32> -> vector<2x8x1xf32>
    %125 = vector.broadcast %124 : vector<2x8x1xf32> to vector<2x8x8xf32>
    %126 = arith.mulf %121, %125 : vector<2x8x8xf32>
    %127 = arith.truncf %126 : vector<2x8x8xf32> to vector<2x8x8xbf16>
    "tpu.trace_start"() <{level = 10 : i32, message = "bqk,bkd->bqd"}> : () -> ()
    %cst_41 = arith.constant dense<0.000000e+00> : vector<2x8x8xf32>
    %128 = tpu.matmul %127, %113, %cst_41 {dimension_numbers = #tpu.dot_dimension_numbers<[2], [1], [1], [2], [0, 0, 0, 1, 1, 2], [0], [0]>} : vector<2x8x8xbf16>, vector<2x8x8xbf16>, vector<2x8x8xf32> -> vector<2x8x8xf32>
    "tpu.trace_stop"() : () -> ()
    %129 = vector.shape_cast %128 : vector<2x8x8xf32> to vector<16x8xf32>
    %130 = arith.truncf %129 : vector<16x8xf32> to vector<16x8xbf16>
    %c24 = arith.constant 24 : index
    %c0_42 = arith.constant 0 : index
    %131 = vector.load %arg6[%c24, %c0_42] : memref<32x32xbf16, #tpu.memory_space<vmem>>, vector<8x32xbf16>
    %cst_43 = arith.constant dense<0.000000e+00> : vector<16x32xf32>
    %132 = tpu.matmul %130, %131, %cst_43 {dimension_numbers = #tpu.dot_dimension_numbers<[1], [0], [0], [1], [0, 0, 1, 1], [], []>} : vector<16x8xbf16>, vector<8x32xbf16>, vector<16x32xf32> -> vector<16x32xf32>
    %133 = arith.addf %107, %132 : vector<16x32xf32>
    %134 = arith.addf %1, %133 : vector<16x32xf32>
    %c0_44 = arith.constant 0 : index
    %c0_45 = arith.constant 0 : index
    %135 = vector.load %arg7[%c0_44, %c0_45] : memref<1x32xf32, #tpu.memory_space<vmem>>, vector<1x32xf32>
    %136 = vector.broadcast %135 : vector<1x32xf32> to vector<16x32xf32>
    %137 = arith.addf %134, %136 : vector<16x32xf32>
    %c0_46 = arith.constant 0 : index
    %c0_47 = arith.constant 0 : index
    %138 = vector.load %arg8[%c0_46, %c0_47] : memref<1x32xf32, #tpu.memory_space<vmem>>, vector<1x32xf32>
    %c0_48 = arith.constant 0 : index
    %c0_49 = arith.constant 0 : index
    %139 = vector.load %arg9[%c0_48, %c0_49] : memref<1x32xf32, #tpu.memory_space<vmem>>, vector<1x32xf32>
    %cst_50 = arith.constant dense<0.000000e+00> : vector<16xf32>
    %140 = vector.multi_reduction <add>, %137, %cst_50 [1] : vector<16x32xf32> to vector<16xf32>
    %141 = vector.shape_cast %140 : vector<16xf32> to vector<16x1xf32>
    %cst_51 = arith.constant 3.200000e+01 : f32
    %142 = vector.broadcast %cst_51 : f32 to vector<16x1xf32>
    %143 = arith.divf %141, %142 : vector<16x1xf32>
    %144 = vector.broadcast %143 : vector<16x1xf32> to vector<16x32xf32>
    %145 = arith.subf %137, %144 : vector<16x32xf32>
    %146 = arith.mulf %145, %145 : vector<16x32xf32>
    %cst_52 = arith.constant dense<0.000000e+00> : vector<16xf32>
    %147 = vector.multi_reduction <add>, %146, %cst_52 [1] : vector<16x32xf32> to vector<16xf32>
    %148 = vector.shape_cast %147 : vector<16xf32> to vector<16x1xf32>
    %cst_53 = arith.constant 3.200000e+01 : f32
    %149 = vector.broadcast %cst_53 : f32 to vector<16x1xf32>
    %150 = arith.divf %148, %149 : vector<16x1xf32>
    %cst_54 = arith.constant 9.99999974E-6 : f32
    %151 = vector.broadcast %cst_54 : f32 to vector<16x1xf32>
    %152 = arith.addf %150, %151 : vector<16x1xf32>
    %153 = math.rsqrt %152 : vector<16x1xf32>
    %154 = vector.broadcast %153 : vector<16x1xf32> to vector<16x32xf32>
    %155 = arith.mulf %145, %154 : vector<16x32xf32>
    %156 = vector.broadcast %138 : vector<1x32xf32> to vector<16x32xf32>
    %157 = arith.mulf %155, %156 : vector<16x32xf32>
    %158 = vector.broadcast %139 : vector<1x32xf32> to vector<16x32xf32>
    %159 = arith.addf %157, %158 : vector<16x32xf32>
    %160 = arith.truncf %159 : vector<16x32xf32> to vector<16x32xbf16>
    %c0_55 = arith.constant 0 : index
    %c0_56 = arith.constant 0 : index
    %161 = vector.load %arg10[%c0_55, %c0_56] : memref<32x64xbf16, #tpu.memory_space<vmem>>, vector<32x64xbf16>
    %cst_57 = arith.constant dense<0.000000e+00> : vector<16x64xf32>
    %162 = tpu.matmul %160, %161, %cst_57 {dimension_numbers = #tpu.dot_dimension_numbers<[1], [0], [0], [1], [0, 0, 1, 1], [], []>} : vector<16x32xbf16>, vector<32x64xbf16>, vector<16x64xf32> -> vector<16x64xf32>
    %c0_58 = arith.constant 0 : index
    %c0_59 = arith.constant 0 : index
    %163 = vector.load %arg11[%c0_58, %c0_59] : memref<1x64xf32, #tpu.memory_space<vmem>>, vector<1x64xf32>
    %164 = vector.broadcast %163 : vector<1x64xf32> to vector<16x64xf32>
    %165 = arith.addf %162, %164 : vector<16x64xf32>
    %166 = arith.mulf %165, %165 : vector<16x64xf32>
    %167 = arith.mulf %165, %166 : vector<16x64xf32>
    %cst_60 = arith.constant 4.471500e-02 : f32
    %168 = vector.broadcast %cst_60 : f32 to vector<16x64xf32>
    %169 = arith.mulf %168, %167 : vector<16x64xf32>
    %170 = arith.addf %165, %169 : vector<16x64xf32>
    %cst_61 = arith.constant 0.797884583 : f32
    %171 = vector.broadcast %cst_61 : f32 to vector<16x64xf32>
    %172 = arith.mulf %171, %170 : vector<16x64xf32>
    %173 = math.tanh %172 : vector<16x64xf32>
    %cst_62 = arith.constant 1.000000e+00 : f32
    %174 = vector.broadcast %cst_62 : f32 to vector<16x64xf32>
    %175 = arith.addf %174, %173 : vector<16x64xf32>
    %cst_63 = arith.constant 5.000000e-01 : f32
    %176 = vector.broadcast %cst_63 : f32 to vector<16x64xf32>
    %177 = arith.mulf %176, %175 : vector<16x64xf32>
    %178 = arith.mulf %165, %177 : vector<16x64xf32>
    %179 = arith.truncf %178 : vector<16x64xf32> to vector<16x64xbf16>
    %c0_64 = arith.constant 0 : index
    %c0_65 = arith.constant 0 : index
    %180 = vector.load %arg12[%c0_64, %c0_65] : memref<64x32xbf16, #tpu.memory_space<vmem>>, vector<64x32xbf16>
    %cst_66 = arith.constant dense<0.000000e+00> : vector<16x32xf32>
    %181 = tpu.matmul %179, %180, %cst_66 {dimension_numbers = #tpu.dot_dimension_numbers<[1], [0], [0], [1], [0, 0, 1, 1], [], []>} : vector<16x64xbf16>, vector<64x32xbf16>, vector<16x32xf32> -> vector<16x32xf32>
    %c0_67 = arith.constant 0 : index
    %c0_68 = arith.constant 0 : index
    %182 = vector.load %arg13[%c0_67, %c0_68] : memref<1x32xf32, #tpu.memory_space<vmem>>, vector<1x32xf32>
    %183 = vector.broadcast %182 : vector<1x32xf32> to vector<16x32xf32>
    %184 = arith.addf %181, %183 : vector<16x32xf32>
    %185 = arith.addf %137, %184 : vector<16x32xf32>
    %186 = vector.shape_cast %185 : vector<16x32xf32> to vector<2x8x32xf32>
    %c0_69 = arith.constant 0 : index
    %c0_70 = arith.constant 0 : index
    %c0_71 = arith.constant 0 : index
    %187 = vector.load %arg14[%c0_69, %c0_70, %c0_71] : memref<2x8x32xf32, #tpu.memory_space<vmem>>, vector<2x8x32xf32>
    tpu.vector_store %arg14[%c0_69, %c0_70, %c0_71], %186 {strides = array<i32>} : memref<2x8x32xf32, #tpu.memory_space<vmem>>, vector<2x8x32xf32>,
    return
  }
  func.func @transform_0(%arg0: i32) -> (i32, i32, i32) {
    %c0_i32 = arith.constant 0 : i32
    %c0_i32_0 = arith.constant 0 : i32
    %c0_i32_1 = arith.constant 0 : i32
    return %arg0, %c0_i32, %c0_i32_0 : i32, i32, i32
  }
  func.func @transform_1(%arg0: i32) -> (i32, i32) {
    %c0_i32 = arith.constant 0 : i32
    %c0_i32_0 = arith.constant 0 : i32
    %c0_i32_1 = arith.constant 0 : i32
    return %c0_i32, %c0_i32_0 : i32, i32
  }
  func.func @transform_2(%arg0: i32) -> (i32, i32) {
    %c0_i32 = arith.constant 0 : i32
    %c0_i32_0 = arith.constant 0 : i32
    %c0_i32_1 = arith.constant 0 : i32
    return %c0_i32, %c0_i32_0 : i32, i32
  }
  func.func @transform_3(%arg0: i32) -> (i32, i32) {
    %c0_i32 = arith.constant 0 : i32
    %c0_i32_0 = arith.constant 0 : i32
    %c0_i32_1 = arith.constant 0 : i32
    return %c0_i32, %c0_i32_0 : i32, i32
  }
  func.func @transform_4(%arg0: i32) -> (i32, i32) {
    %c0_i32 = arith.constant 0 : i32
    %c0_i32_0 = arith.constant 0 : i32
    %c0_i32_1 = arith.constant 0 : i32
    return %c0_i32, %c0_i32_0 : i32, i32
  }
  func.func @transform_5(%arg0: i32) -> (i32, i32) {
    %c0_i32 = arith.constant 0 : i32
    %c0_i32_0 = arith.constant 0 : i32
    %c0_i32_1 = arith.constant 0 : i32
    return %c0_i32, %c0_i32_0 : i32, i32
  }
  func.func @transform_6(%arg0: i32) -> (i32, i32) {
    %c0_i32 = arith.constant 0 : i32
    %c0_i32_0 = arith.constant 0 : i32
    %c0_i32_1 = arith.constant 0 : i32
    return %c0_i32, %c0_i32_0 : i32, i32
  }
  func.func @transform_7(%arg0: i32) -> (i32, i32) {
    %c0_i32 = arith.constant 0 : i32
    %c0_i32_0 = arith.constant 0 : i32
    %c0_i32_1 = arith.constant 0 : i32
    return %c0_i32, %c0_i32_0 : i32, i32
  }
  func.func @transform_8(%arg0: i32) -> (i32, i32) {
    %c0_i32 = arith.constant 0 : i32
    %c0_i32_0 = arith.constant 0 : i32
    %c0_i32_1 = arith.constant 0 : i32
    return %c0_i32, %c0_i32_0 : i32, i32
  }
  func.func @transform_9(%arg0: i32) -> (i32, i32) {
    %c0_i32 = arith.constant 0 : i32
    %c0_i32_0 = arith.constant 0 : i32
    %c0_i32_1 = arith.constant 0 : i32
    return %c0_i32, %c0_i32_0 : i32, i32
  }
  func.func @transform_10(%arg0: i32) -> (i32, i32) {
    %c0_i32 = arith.constant 0 : i32
    %c0_i32_0 = arith.constant 0 : i32
    %c0_i32_1 = arith.constant 0 : i32
    return %c0_i32, %c0_i32_0 : i32, i32
  }
  func.func @transform_11(%arg0: i32) -> (i32, i32) {
    %c0_i32 = arith.constant 0 : i32
    %c0_i32_0 = arith.constant 0 : i32
    %c0_i32_1 = arith.constant 0 : i32
    return %c0_i32, %c0_i32_0 : i32, i32
  }
  func.func @transform_12(%arg0: i32) -> (i32, i32) {
    %c0_i32 = arith.constant 0 : i32
    %c0_i32_0 = arith.constant 0 : i32
    %c0_i32_1 = arith.constant 0 : i32
    return %c0_i32, %c0_i32_0 : i32, i32
  }
  func.func @transform_13(%arg0: i32) -> (i32, i32, i32) {
    %c0_i32 = arith.constant 0 : i32
    %c0_i32_0 = arith.constant 0 : i32
    %c0_i32_1 = arith.constant 0 : i32
    return %arg0, %c0_i32, %c0_i32_0 : i32, i32, i32
  }
}

</mosaic_0001>

<llo_original>
// kernel: tpu_custom_call.1
$region0: #{tpu_custom_call.1}
  #allocation0 [shape = 'u32[]', space=smem, size = 0x4, offset = 0x4, fixed_abs, tag = 'smem constant byte address 0x4 - core index']
  #allocation1 [shape = 'u32[144,128]{1,0:T(1,128)}', space=vmem, size = 0x12000, scoped, tag = 'internal scratch']
  %s0 = inlined_call_operand.vmem [shape: f32[2,8,32], index: 0, kind: input, shape index: {}]
  %s1 = inlined_call_operand.vmem [shape: f32[1,32], index: 1, kind: input, shape index: {}]
  %s2 = inlined_call_operand.vmem [shape: f32[1,32], index: 2, kind: input, shape index: {}]
  %s3 = inlined_call_operand.vmem [shape: bf16[32,96], index: 3, kind: input, shape index: {}]
  %s4 = inlined_call_operand.vmem [shape: f32[1,96], index: 4, kind: input, shape index: {}]
  %s5 = inlined_call_operand.vmem [shape: bf16[32,32], index: 5, kind: input, shape index: {}]
  %s6 = inlined_call_operand.vmem [shape: f32[1,32], index: 6, kind: input, shape index: {}]
  %s7 = inlined_call_operand.hbm [shape: f32[1,32], index: 7, kind: input, shape index: {}]
  %s8 = inlined_call_operand.hbm [shape: f32[1,32], index: 8, kind: input, shape index: {}]
  %s9 = inlined_call_operand.hbm [shape: bf16[32,64], index: 9, kind: input, shape index: {}]
  %s10 = inlined_call_operand.hbm [shape: f32[1,64], index: 10, kind: input, shape index: {}]
  %s11 = inlined_call_operand.vmem [shape: bf16[64,32], index: 11, kind: input, shape index: {}]
  %s12 = inlined_call_operand.vmem [shape: f32[1,32], index: 12, kind: input, shape index: {}]
  %s13 = inlined_call_operand.hbm [shape: f32[2,8,32], index: 13, kind: output, shape index: {}]
  %s14 = sld [smem:[#allocation0]]
  $region78: #{tpu_custom_call.1} parent=0
    _
  %s16 = ssub.s32 1, %s14
  %s17 = scalar_select 0, %s16, %s14
  $region1: #{tpu_custom_call.1} parent=0
    #allocation2 [shape = 'u8[512]{0}', space=vmem, size = 0x400, scoped, tag = 'input window, operand 7, single buffered']
    #allocation3 [shape = 's32[1]{0}', space=sflag, size = 0x4, scoped, tag = 'scoped memory for tpu_custom_call.1']
    #allocation4 [shape = 's32[1]{0}', space=sflag, size = 0x4, scoped, tag = 'scoped memory for tpu_custom_call.1']
    #allocation5 [shape = 'u8[512]{0}', space=vmem, size = 0x400, scoped, tag = 'input window, operand 8, single buffered']
    #allocation6 [shape = 's32[1]{0}', space=sflag, size = 0x4, scoped, tag = 'scoped memory for tpu_custom_call.1']
    #allocation7 [shape = 'u8[8192]{0}', space=vmem, size = 0x2000, scoped, tag = 'input window, operand 9, single buffered']
    #allocation8 [shape = 'u8[512]{0}', space=vmem, size = 0x400, scoped, tag = 'input window, operand 10, single buffered']
    #allocation9 [shape = 's32[1]{0}', space=sflag, size = 0x4, scoped, tag = 'scoped memory for tpu_custom_call.1']
    #allocation10 [shape = 'u8[8192]{0}', space=vmem, size = 0x2000, scoped, tag = 'output window, operand 0, single buffered']
    %18 = vsyncpa [#allocation3], 0
    %19 = vsyncpa [#allocation6], 0
    %20 = vsyncpa [#allocation9], 0
    %21 = vsyncpa [#allocation4], 0
    // Predicated region
    $region2: #{tpu_custom_call.1} parent=1 // pred_check
      _
    $region3: #{tpu_custom_call.1} parent=1 // pred_check_branch
      %23 = sbr.rel (0) target = $region5
    $region4: #{tpu_custom_call.1} parent=1 // pred_region
      _
    $region5: #{tpu_custom_call.1} parent=1 // pred_fallthru
      _
    // Predicated region
    $region6: #{tpu_custom_call.1} parent=1 // pred_check
      _
    $region7: #{tpu_custom_call.1} parent=1 // pred_check_branch
      %25 = sbr.rel (0) target = $region9
    $region8: #{tpu_custom_call.1} parent=1 // pred_region
      _
    $region9: #{tpu_custom_call.1} parent=1 // pred_fallthru
      _
    // Predicated region
    $region10: #{tpu_custom_call.1} parent=1 // pred_check
      _
    $region11: #{tpu_custom_call.1} parent=1 // pred_check_branch
      %27 = sbr.rel (0) target = $region13
    $region12: #{tpu_custom_call.1} parent=1 // pred_region
      _
    $region13: #{tpu_custom_call.1} parent=1 // pred_fallthru
      _
    // Predicated region
    $region14: #{tpu_custom_call.1} parent=1 // pred_check
      _
    $region15: #{tpu_custom_call.1} parent=1 // pred_check_branch
      %29 = sbr.rel (0) target = $region17
    $region16: #{tpu_custom_call.1} parent=1 // pred_region
      _
    $region17: #{tpu_custom_call.1} parent=1 // pred_fallthru
      _
    // Predicated region
    $region18: #{tpu_custom_call.1} parent=1 // pred_check
      _
    $region19: #{tpu_custom_call.1} parent=1 // pred_check_branch
      %31 = sbr.rel (0) target = $region21
    $region20: #{tpu_custom_call.1} parent=1 // pred_region
      _
    $region21: #{tpu_custom_call.1} parent=1 // pred_fallthru
      _
    // Predicated region
    $region22: #{tpu_custom_call.1} parent=1 // pred_check
      _
    $region23: #{tpu_custom_call.1} parent=1 // pred_check_branch
      %33 = sbr.rel (0) target = $region25
    $region24: #{tpu_custom_call.1} parent=1 // pred_region
      _
    $region25: #{tpu_custom_call.1} parent=1 // pred_fallthru
      _
    // Predicated region
    $region26: #{tpu_custom_call.1} parent=1 // pred_check
      _
    $region27: #{tpu_custom_call.1} parent=1 // pred_check_branch
      %35 = sbr.rel (0) target = $region29
    $region28: #{tpu_custom_call.1} parent=1 // pred_region
      _
    $region29: #{tpu_custom_call.1} parent=1 // pred_fallthru
      _
    // Predicated region
    $region30: #{tpu_custom_call.1} parent=1 // pred_check
      _
    $region31: #{tpu_custom_call.1} parent=1 // pred_check_branch
      %37 = sbr.rel (0) target = $region33
    $region32: #{tpu_custom_call.1} parent=1 // pred_region
      %s39 = ssub.s32 16, 16
      %40 = vsyncadd [#allocation3], %s39
      %s42 = sshll.u32 [#allocation2], 4
      %s43 = int_to_ptr.vmem [resolvable:$true] %s42
      %45 = dma.hbm_to_vmem [thread:$0]  %s7, 16, %s43, [#allocation3]
    $region33: #{tpu_custom_call.1} parent=1 // pred_fallthru
      _
    // Predicated region
    $region34: #{tpu_custom_call.1} parent=1 // pred_check
      _
    $region35: #{tpu_custom_call.1} parent=1 // pred_check_branch
      %47 = sbr.rel (0) target = $region37
    $region36: #{tpu_custom_call.1} parent=1 // pred_region
      %s49 = ssub.s32 16, 16
      %50 = vsyncadd [#allocation6], %s49
      %s52 = sshll.u32 [#allocation5], 4
      %s53 = int_to_ptr.vmem [resolvable:$true] %s52
      %55 = dma.hbm_to_vmem [thread:$0]  %s8, 16, %s53, [#allocation6]
    $region37: #{tpu_custom_call.1} parent=1 // pred_fallthru
      _
    // Predicated region
    $region38: #{tpu_custom_call.1} parent=1 // pred_check
      _
    $region39: #{tpu_custom_call.1} parent=1 // pred_check_branch
      %57 = sbr.rel (0) target = $region41
    $region40: #{tpu_custom_call.1} parent=1 // pred_region
      %s59 = ssub.s32 256, 256
      %60 = vsyncadd [#allocation6], %s59
      %s61 = sshll.u32 [#allocation7], 4
      %s62 = int_to_ptr.vmem [resolvable:$true] %s61
      %67 = dma.hbm_to_vmem [thread:$0]  %s9, 256, %s62, [#allocation6], 64, 64, 4
    $region41: #{tpu_custom_call.1} parent=1 // pred_fallthru
      _
    // Predicated region
    $region42: #{tpu_custom_call.1} parent=1 // pred_check
      _
    $region43: #{tpu_custom_call.1} parent=1 // pred_check_branch
      %69 = sbr.rel (0) target = $region45
    $region44: #{tpu_custom_call.1} parent=1 // pred_region
      %s71 = ssub.s32 16, 16
      %72 = vsyncadd [#allocation9], %s71
      %s74 = sshll.u32 [#allocation8], 4
      %s75 = int_to_ptr.vmem [resolvable:$true] %s74
      %77 = dma.hbm_to_vmem [thread:$0]  %s10, 16, %s75, [#allocation9]
    $region45: #{tpu_custom_call.1} parent=1 // pred_fallthru
      _
    // Predicated region
    $region46: #{tpu_custom_call.1} parent=1 // pred_check
      _
    $region47: #{tpu_custom_call.1} parent=1 // pred_check_branch
      %79 = sbr.rel (0) target = $region49
    $region48: #{tpu_custom_call.1} parent=1 // pred_region
      _
    $region49: #{tpu_custom_call.1} parent=1 // pred_fallthru
      _
    // Predicated region
    $region50: #{tpu_custom_call.1} parent=1 // pred_check
      _
    $region51: #{tpu_custom_call.1} parent=1 // pred_check_branch
      %81 = sbr.rel (0) target = $region53
    $region52: #{tpu_custom_call.1} parent=1 // pred_region
      _
    $region53: #{tpu_custom_call.1} parent=1 // pred_fallthru
      _
    // Predicated region
    $region54: #{tpu_custom_call.1} parent=1 // pred_check
      _
    $region55: #{tpu_custom_call.1} parent=1 // pred_check_branch
      %83 = sbr.rel (0) target = $region57
    $region56: #{tpu_custom_call.1} parent=1 // pred_region
      %84 = dma.done [#allocation3], 16
    $region57: #{tpu_custom_call.1} parent=1 // pred_fallthru
      _
    // Predicated region
    $region58: #{tpu_custom_call.1} parent=1 // pred_check
      _
    $region59: #{tpu_custom_call.1} parent=1 // pred_check_branch
      %86 = sbr.rel (0) target = $region61
    $region60: #{tpu_custom_call.1} parent=1 // pred_region
      %87 = dma.done [#allocation6], 16
    $region61: #{tpu_custom_call.1} parent=1 // pred_fallthru
      _
    // Predicated region
    $region62: #{tpu_custom_call.1} parent=1 // pred_check
      _
    $region63: #{tpu_custom_call.1} parent=1 // pred_check_branch
      %89 = sbr.rel (0) target = $region65
    $region64: #{tpu_custom_call.1} parent=1 // pred_region
      %90 = dma.done [#allocation6], 256
    $region65: #{tpu_custom_call.1} parent=1 // pred_fallthru
      _
    // Predicated region
    $region66: #{tpu_custom_call.1} parent=1 // pred_check
      _
    $region67: #{tpu_custom_call.1} parent=1 // pred_check_branch
      %92 = sbr.rel (0) target = $region69
    $region68: #{tpu_custom_call.1} parent=1 // pred_region
      %93 = dma.done [#allocation9], 16
    $region69: #{tpu_custom_call.1} parent=1 // pred_fallthru
      _
    %v95 = vld [vmem:[%s0] sm:$0xff]
    %v96 = vld [vmem:[%s0 + $0x8] sm:$0xff]
    %v97 = vld [vmem:[%s1] sm:$0x1]
    %v98 = vld [vmem:[%s2] sm:$0x1]
    %vm99 = vcmask 261120
    %v100 = vsel %vm99, %v95, 0.0
    %101 = vadd.xlane.f32.xlu0 %v100
    %v102 = vpop.xlane.xlu0 %101
    %v103 = vsel %vm99, %v96, 0.0
    %104 = vadd.xlane.f32.xlu0 %v103
    %v105 = vpop.xlane.xlu0 %104
    %v106 = vrcp.pop 32.0
    %v107 = vmul.f32 %v102, %v106
    %v108 = vmul.f32 %v105, %v106
    %v109 = vsub.f32 %v95, %v107
    %v110 = vsub.f32 %v96, %v108
    %v111 = vmul.f32 %v109, %v109
    %v112 = vmul.f32 %v110, %v110
    %v113 = vsel %vm99, %v111, 0.0
    %114 = vadd.xlane.f32.xlu0 %v113
    %v115 = vpop.xlane.xlu0 %114
    %v116 = vsel %vm99, %v112, 0.0
    %117 = vadd.xlane.f32.xlu0 %v116
    %v118 = vpop.xlane.xlu0 %117
    %v119 = vmul.f32 %v115, %v106
    %v120 = vmul.f32 %v118, %v106
    %v121 = vadd.f32 %v119, 1e-05
    %v122 = vadd.f32 %v120, 1e-05
    %v123 = vrsqrt.pop %v121
    %v124 = vrsqrt.pop %v122
    %v125 = vmul.f32 %v109, %v123
    %v126 = vmul.f32 %v110, %v124
    %v128 = vlaneseq
    %v129 = vshrl.u32 %v128, 7
    %v130 = vsub.s32 0, %v129
    %v131 = vrot.slane %v97, %v130
    %v133 = vmul.f32 %v125, %v131
    %v134 = vmul.f32 %v126, %v131
    %v136 = vlaneseq
    %v137 = vshrl.u32 %v136, 7
    %v138 = vsub.s32 0, %v137
    %v139 = vrot.slane %v98, %v138
    %v141 = vadd.f32 %v133, %v139
    %v142 = vadd.f32 %v134, %v139
    %v143 = vpack.c.bf16 %v142, %v141
    %v144 = vld [vmem:[%s3] sm:$0xf]
    %v145 = vld [vmem:[%s3 + $0x4] sm:$0xf]
    %v146 = vld [vmem:[%s3 + $0x8] sm:$0xf]
    %v147 = vld [vmem:[%s3 + $0xc] sm:$0xf]
    %v148 = vld [vmem:[%s4] sm:$0x1]
    %v150 = vlaneseq
    %v151 = vshrl.u32 %v150, 7
    %v152 = vsub.s32 0, %v151
    %v153 = vrot.slane %v148, %v152
    %v159 = vunpack.c.l.b16 %v144
    %v160 = vunpack.c.l.b16 %v145
    %v161 = vunpack.c.l.b16 %v146
    %v162 = vunpack.c.l.b16 %v147
    %v163 = vpack.c.b16 %v160, %v159
    %v164 = vpack.c.b16 %v162, %v161
    %v168 = vsel %vm99, %v143, 0
    %170 = vmatprep.subr.bf16.mxu0 0
    %171 = vmatpush1.bf16.msra.mxu0 0
    %172 = vmatprep.subr.bf16.mxu0 0
    %173 = vmatpush1.bf16.msra.mxu0 0
    %174 = vmatprep.subr.bf16.mxu0 0
    %175 = vmatpush1.bf16.msra.mxu0 0
    %176 = vmatprep.subr.bf16.mxu0 0
    %177 = vmatpush1.bf16.msra.mxu0 0
    %178 = vmatprep.subr.bf16.mxu0 0
    %179 = vmatpush1.bf16.msra.mxu0 0
    %180 = vmatprep.subr.bf16.mxu0 0
    %181 = vmatpush1.bf16.msra.mxu0 0
    %182 = vmatprep.subr.bf16.mxu0 0
    %183 = vmatpush1.bf16.msra.mxu0 %v164
    %184 = vmatprep.subr.bf16.mxu0 0
    %185 = vmatpush1.bf16.msra.mxu0 %v163
    %186 = vmatprep.subr.bf16.mxu0 0
    %187 = vmatpush2.bf16.msra.mxu0 0
    %188 = vmatprep.subr.bf16.mxu0 0
    %189 = vmatpush2.bf16.msra.mxu0 0
    %190 = vmatprep.subr.bf16.mxu0 0
    %191 = vmatpush2.bf16.msra.mxu0 0
    %192 = vmatprep.subr.bf16.mxu0 0
    %193 = vmatpush2.bf16.msra.mxu0 0
    %194 = vmatprep.subr.bf16.mxu0 0
    %195 = vmatpush2.bf16.msra.mxu0 0
    %196 = vmatprep.subr.bf16.mxu0 0
    %197 = vmatpush2.bf16.msra.mxu0 0
    %198 = vmatprep.subr.bf16.mxu0 0
    %199 = vmatpush2.bf16.msra.mxu0 0
    %200 = vmatprep.subr.bf16.mxu0 0
    %201 = vmatpush2.bf16.msra.mxu0 0
    %202 = vmatprep.mubr.bf16.mxu0 0
    %203 = vmatmul.mubr.bf16.gmra.mxu0 %v168
    %v204 = vpop.f32.mrf.mxu0
    %v205 = vadd.f32 %v153, %v204
    %v206 = vpop.f32.mrf.mxu0
    %v207 = vpop.f32.mrf.mxu0
    %v208 = vadd.f32 %v153, %v207
    %v209 = vpop.f32.mrf.mxu0
    %210 = vdwg.mxu0
    %v211 = vpack.c.bf16 %v208, %v205
    %v213 = vunpack.c.l.b16 %v211
    %v214 = vunpack.c.h.b16 %v211
    %v215 = vpack.c.b16 %v213, %v213
    %v216 = vpack.c.b16 %v214, %v214
    %217 = vrot.lane.b32.xlu0 %v215, 96
    %v218 = vpop.permute.xlu0 %217
    %vm219 = vcmask 64512
    %v221 = vsel %vm219, %v215, 0
    %v224 = vsel %vm219, %v218, 0
    %226 = vmatprep.subr.bf16.mxu0 0
    %227 = vmatpush1.bf16.xpose.msra.mxu0 0
    %228 = vmatprep.subr.bf16.mxu0 0
    %229 = vmatpush1.bf16.xpose.msra.mxu0 0
    %230 = vmatprep.subr.bf16.mxu0 0
    %231 = vmatpush1.bf16.xpose.msra.mxu0 0
    %232 = vmatprep.subr.bf16.mxu0 0
    %233 = vmatpush1.bf16.xpose.msra.mxu0 0
    %234 = vmatprep.subr.bf16.mxu0 0
    %235 = vmatpush1.bf16.xpose.msra.mxu0 0
    %236 = vmatprep.subr.bf16.mxu0 0
    %237 = vmatpush1.bf16.xpose.msra.mxu0 0
    %238 = vmatprep.subr.bf16.mxu0 0
    %239 = vmatpush1.bf16.xpose.msra.mxu0 0
    %240 = vmatprep.subr.bf16.mxu0 0
    %241 = vmatpush1.bf16.xpose.msra.mxu0 %v224
    %242 = vmatprep.subr.bf16.mxu0 0
    %243 = vmatpush2.bf16.xpose.msra.mxu0 0
    %244 = vmatprep.subr.bf16.mxu0 0
    %245 = vmatpush2.bf16.xpose.msra.mxu0 0
    %246 = vmatprep.subr.bf16.mxu0 0
    %247 = vmatpush2.bf16.xpose.msra.mxu0 0
    %248 = vmatprep.subr.bf16.mxu0 0
    %249 = vmatpush2.bf16.xpose.msra.mxu0 0
    %250 = vmatprep.subr.bf16.mxu0 0
    %251 = vmatpush2.bf16.xpose.msra.mxu0 0
    %252 = vmatprep.subr.bf16.mxu0 0
    %253 = vmatpush2.bf16.xpose.msra.mxu0 0
    %254 = vmatprep.subr.bf16.mxu0 0
    %255 = vmatpush2.bf16.xpose.msra.mxu0 0
    %256 = vmatprep.subr.bf16.mxu0 0
    %257 = vmatpush2.bf16.xpose.msra.mxu0 0
    %258 = vmatprep.mubr.bf16.mxu0 0
    %259 = vmatmul.mubr.bf16.gmra.mxu0 %v221
    %v260 = vpop.f32.mrf.mxu0
    %v261 = vadd.f32 0.0, %v260
    %v262 = vpop.f32.mrf.mxu0
    %v263 = vpop.f32.mrf.mxu0
    %v264 = vpop.f32.mrf.mxu0
    %265 = vdwg.mxu0
    %266 = vrot.lane.b32.xlu0 %v216, 96
    %v267 = vpop.permute.xlu0 %266
    %v269 = vsel %vm219, %v216, 0
    %v272 = vsel %vm219, %v267, 0
    %274 = vmatprep.subr.bf16.mxu0 0
    %275 = vmatpush1.bf16.xpose.msra.mxu0 0
    %276 = vmatprep.subr.bf16.mxu0 0
    %277 = vmatpush1.bf16.xpose.msra.mxu0 0
    %278 = vmatprep.subr.bf16.mxu0 0
    %279 = vmatpush1.bf16.xpose.msra.mxu0 0
    %280 = vmatprep.subr.bf16.mxu0 0
    %281 = vmatpush1.bf16.xpose.msra.mxu0 0
    %282 = vmatprep.subr.bf16.mxu0 0
    %283 = vmatpush1.bf16.xpose.msra.mxu0 0
    %284 = vmatprep.subr.bf16.mxu0 0
    %285 = vmatpush1.bf16.xpose.msra.mxu0 0
    %286 = vmatprep.subr.bf16.mxu0 0
    %287 = vmatpush1.bf16.xpose.msra.mxu0 0
    %288 = vmatprep.subr.bf16.mxu0 0
    %289 = vmatpush1.bf16.xpose.msra.mxu0 %v272
    %290 = vmatprep.subr.bf16.mxu0 0
    %291 = vmatpush2.bf16.xpose.msra.mxu0 0
    %292 = vmatprep.subr.bf16.mxu0 0
    %293 = vmatpush2.bf16.xpose.msra.mxu0 0
    %294 = vmatprep.subr.bf16.mxu0 0
    %295 = vmatpush2.bf16.xpose.msra.mxu0 0
    %296 = vmatprep.subr.bf16.mxu0 0
    %297 = vmatpush2.bf16.xpose.msra.mxu0 0
    %298 = vmatprep.subr.bf16.mxu0 0
    %299 = vmatpush2.bf16.xpose.msra.mxu0 0
    %300 = vmatprep.subr.bf16.mxu0 0
    %301 = vmatpush2.bf16.xpose.msra.mxu0 0
    %302 = vmatprep.subr.bf16.mxu0 0
    %303 = vmatpush2.bf16.xpose.msra.mxu0 0
    %304 = vmatprep.subr.bf16.mxu0 0
    %305 = vmatpush2.bf16.xpose.msra.mxu0 0
    %306 = vmatprep.mubr.bf16.mxu0 0
    %307 = vmatmul.mubr.bf16.gmra.mxu0 %v269
    %v308 = vpop.f32.mrf.mxu0
    %v309 = vadd.f32 0.0, %v308
    %v310 = vpop.f32.mrf.mxu0
    %v311 = vpop.f32.mrf.mxu0
    %v312 = vpop.f32.mrf.mxu0
    %313 = vdwg.mxu0
    %v314 = vmul.f32 %v261, 0.35355338
    %v315 = vmul.f32 %v309, 0.35355338
    %v316 = vsel %vm219, %v314, -inf
    %317 = vmax.xlane.f32.xlu0 %v316
    %v318 = vpop.xlane.xlu0 %317
    %v319 = vsel %vm219, %v315, -inf
    %320 = vmax.xlane.f32.xlu0 %v319
    %v321 = vpop.xlane.xlu0 %320
    %v322 = vsub.f32 %v314, %v318
    %v323 = vsub.f32 %v315, %v321
    %v324 = vmul.f32 %v322, 1.442695
    %v325 = vpow.pop %v324
    %v326 = vmul.f32 %v323, 1.442695
    %v327 = vpow.pop %v326
    %v328 = vsel %vm219, %v325, 0.0
    %329 = vadd.xlane.f32.xlu0 %v328
    %v330 = vpop.xlane.xlu0 %329
    %v331 = vsel %vm219, %v327, 0.0
    %332 = vadd.xlane.f32.xlu0 %v331
    %v333 = vpop.xlane.xlu0 %332
    %v334 = vrcp.pop %v330
    %v335 = vrcp.pop %v333
    %v336 = vmul.f32 %v325, %v334
    %v337 = vmul.f32 %v327, %v335
    %v338 = vpack.c.bf16 %v336, %v336
    %v339 = vpack.c.bf16 %v337, %v337
    %340 = vrot.lane.b32.xlu0 %v215, 64
    %v341 = vpop.permute.xlu0 %340
    %v343 = vsel %vm219, %v338, 0
    %vm345 = vcmask 1043456
    %v347 = vsel %vm345, %v341, 0
    %349 = vmatprep.subr.bf16.mxu0 0
    %350 = vmatpush1.bf16.msra.mxu0 0
    %351 = vmatprep.subr.bf16.mxu0 0
    %352 = vmatpush1.bf16.msra.mxu0 0
    %353 = vmatprep.subr.bf16.mxu0 0
    %354 = vmatpush1.bf16.msra.mxu0 0
    %355 = vmatprep.subr.bf16.mxu0 0
    %356 = vmatpush1.bf16.msra.mxu0 0
    %357 = vmatprep.subr.bf16.mxu0 0
    %358 = vmatpush1.bf16.msra.mxu0 0
    %359 = vmatprep.subr.bf16.mxu0 0
    %360 = vmatpush1.bf16.msra.mxu0 0
    %361 = vmatprep.subr.bf16.mxu0 0
    %362 = vmatpush1.bf16.msra.mxu0 0
    %363 = vmatprep.subr.bf16.mxu0 0
    %364 = vmatpush1.bf16.msra.mxu0 %v347
    %365 = vmatprep.subr.bf16.mxu0 0
    %366 = vmatpush2.bf16.msra.mxu0 0
    %367 = vmatprep.subr.bf16.mxu0 0
    %368 = vmatpush2.bf16.msra.mxu0 0
    %369 = vmatprep.subr.bf16.mxu0 0
    %370 = vmatpush2.bf16.msra.mxu0 0
    %371 = vmatprep.subr.bf16.mxu0 0
    %372 = vmatpush2.bf16.msra.mxu0 0
    %373 = vmatprep.subr.bf16.mxu0 0
    %374 = vmatpush2.bf16.msra.mxu0 0
    %375 = vmatprep.subr.bf16.mxu0 0
    %376 = vmatpush2.bf16.msra.mxu0 0
    %377 = vmatprep.subr.bf16.mxu0 0
    %378 = vmatpush2.bf16.msra.mxu0 0
    %379 = vmatprep.subr.bf16.mxu0 0
    %380 = vmatpush2.bf16.msra.mxu0 0
    %381 = vmatprep.mubr.bf16.mxu0 0
    %382 = vmatmul.mubr.bf16.gmra.mxu0 %v343
    %v383 = vpop.f32.mrf.mxu0
    %v384 = vadd.f32 0.0, %v383
    %v385 = vpop.f32.mrf.mxu0
    %v386 = vpop.f32.mrf.mxu0
    %v387 = vpop.f32.mrf.mxu0
    %388 = vdwg.mxu0
    %389 = vrot.lane.b32.xlu0 %v216, 64
    %v390 = vpop.permute.xlu0 %389
    %v392 = vsel %vm219, %v339, 0
    %v395 = vsel %vm345, %v390, 0
    %397 = vmatprep.subr.bf16.mxu0 0
    %398 = vmatpush1.bf16.msra.mxu0 0
    %399 = vmatprep.subr.bf16.mxu0 0
    %400 = vmatpush1.bf16.msra.mxu0 0
    %401 = vmatprep.subr.bf16.mxu0 0
    %402 = vmatpush1.bf16.msra.mxu0 0
    %403 = vmatprep.subr.bf16.mxu0 0
    %404 = vmatpush1.bf16.msra.mxu0 0
    %405 = vmatprep.subr.bf16.mxu0 0
    %406 = vmatpush1.bf16.msra.mxu0 0
    %407 = vmatprep.subr.bf16.mxu0 0
    %408 = vmatpush1.bf16.msra.mxu0 0
    %409 = vmatprep.subr.bf16.mxu0 0
    %410 = vmatpush1.bf16.msra.mxu0 0
    %411 = vmatprep.subr.bf16.mxu0 0
    %412 = vmatpush1.bf16.msra.mxu0 %v395
    %413 = vmatprep.subr.bf16.mxu0 0
    %414 = vmatpush2.bf16.msra.mxu0 0
    %415 = vmatprep.subr.bf16.mxu0 0
    %416 = vmatpush2.bf16.msra.mxu0 0
    %417 = vmatprep.subr.bf16.mxu0 0
    %418 = vmatpush2.bf16.msra.mxu0 0
    %419 = vmatprep.subr.bf16.mxu0 0
    %420 = vmatpush2.bf16.msra.mxu0 0
    %421 = vmatprep.subr.bf16.mxu0 0
    %422 = vmatpush2.bf16.msra.mxu0 0
    %423 = vmatprep.subr.bf16.mxu0 0
    %424 = vmatpush2.bf16.msra.mxu0 0
    %425 = vmatprep.subr.bf16.mxu0 0
    %426 = vmatpush2.bf16.msra.mxu0 0
    %427 = vmatprep.subr.bf16.mxu0 0
    %428 = vmatpush2.bf16.msra.mxu0 0
    %429 = vmatprep.mubr.bf16.mxu0 0
    %430 = vmatmul.mubr.bf16.gmra.mxu0 %v392
    %v431 = vpop.f32.mrf.mxu0
    %v432 = vadd.f32 0.0, %v431
    %v433 = vpop.f32.mrf.mxu0
    %v434 = vpop.f32.mrf.mxu0
    %v435 = vpop.f32.mrf.mxu0
    %436 = vdwg.mxu0
    %v437 = vpack.c.bf16 %v432, %v384
    %v438 = vld [vmem:[%s5] sm:$0xf]
    %439 = vrot.lane.b32.xlu0 %v215, 120
    %v440 = vpop.permute.xlu0 %439
    %441 = vrot.lane.b32.xlu0 %v215, 88
    %v442 = vpop.permute.xlu0 %441
    %v444 = vsel %vm219, %v440, 0
    %v447 = vsel %vm219, %v442, 0
    %449 = vmatprep.subr.bf16.mxu0 0
    %450 = vmatpush1.bf16.xpose.msra.mxu0 0
    %451 = vmatprep.subr.bf16.mxu0 0
    %452 = vmatpush1.bf16.xpose.msra.mxu0 0
    %453 = vmatprep.subr.bf16.mxu0 0
    %454 = vmatpush1.bf16.xpose.msra.mxu0 0
    %455 = vmatprep.subr.bf16.mxu0 0
    %456 = vmatpush1.bf16.xpose.msra.mxu0 0
    %457 = vmatprep.subr.bf16.mxu0 0
    %458 = vmatpush1.bf16.xpose.msra.mxu0 0
    %459 = vmatprep.subr.bf16.mxu0 0
    %460 = vmatpush1.bf16.xpose.msra.mxu0 0
    %461 = vmatprep.subr.bf16.mxu0 0
    %462 = vmatpush1.bf16.xpose.msra.mxu0 0
    %463 = vmatprep.subr.bf16.mxu0 0
    %464 = vmatpush1.bf16.xpose.msra.mxu0 %v447
    %465 = vmatprep.subr.bf16.mxu0 0
    %466 = vmatpush2.bf16.xpose.msra.mxu0 0
    %467 = vmatprep.subr.bf16.mxu0 0
    %468 = vmatpush2.bf16.xpose.msra.mxu0 0
    %469 = vmatprep.subr.bf16.mxu0 0
    %470 = vmatpush2.bf16.xpose.msra.mxu0 0
    %471 = vmatprep.subr.bf16.mxu0 0
    %472 = vmatpush2.bf16.xpose.msra.mxu0 0
    %473 = vmatprep.subr.bf16.mxu0 0
    %474 = vmatpush2.bf16.xpose.msra.mxu0 0
    %475 = vmatprep.subr.bf16.mxu0 0
    %476 = vmatpush2.bf16.xpose.msra.mxu0 0
    %477 = vmatprep.subr.bf16.mxu0 0
    %478 = vmatpush2.bf16.xpose.msra.mxu0 0
    %479 = vmatprep.subr.bf16.mxu0 0
    %480 = vmatpush2.bf16.xpose.msra.mxu0 0
    %481 = vmatprep.mubr.bf16.mxu0 0
    %482 = vmatmul.mubr.bf16.gmra.mxu0 %v444
    %v483 = vpop.f32.mrf.mxu0
    %v484 = vadd.f32 0.0, %v483
    %v485 = vpop.f32.mrf.mxu0
    %v486 = vpop.f32.mrf.mxu0
    %v487 = vpop.f32.mrf.mxu0
    %488 = vdwg.mxu0
    %489 = vrot.lane.b32.xlu0 %v216, 120
    %v490 = vpop.permute.xlu0 %489
    %491 = vrot.lane.b32.xlu0 %v216, 88
    %v492 = vpop.permute.xlu0 %491
    %v494 = vsel %vm219, %v490, 0
    %v497 = vsel %vm219, %v492, 0
    %499 = vmatprep.subr.bf16.mxu0 0
    %500 = vmatpush1.bf16.xpose.msra.mxu0 0
    %501 = vmatprep.subr.bf16.mxu0 0
    %502 = vmatpush1.bf16.xpose.msra.mxu0 0
    %503 = vmatprep.subr.bf16.mxu0 0
    %504 = vmatpush1.bf16.xpose.msra.mxu0 0
    %505 = vmatprep.subr.bf16.mxu0 0
    %506 = vmatpush1.bf16.xpose.msra.mxu0 0
    %507 = vmatprep.subr.bf16.mxu0 0
    %508 = vmatpush1.bf16.xpose.msra.mxu0 0
    %509 = vmatprep.subr.bf16.mxu0 0
    %510 = vmatpush1.bf16.xpose.msra.mxu0 0
    %511 = vmatprep.subr.bf16.mxu0 0
    %512 = vmatpush1.bf16.xpose.msra.mxu0 0
    %513 = vmatprep.subr.bf16.mxu0 0
    %514 = vmatpush1.bf16.xpose.msra.mxu0 %v497
    %515 = vmatprep.subr.bf16.mxu0 0
    %516 = vmatpush2.bf16.xpose.msra.mxu0 0
    %517 = vmatprep.subr.bf16.mxu0 0
    %518 = vmatpush2.bf16.xpose.msra.mxu0 0
    %519 = vmatprep.subr.bf16.mxu0 0
    %520 = vmatpush2.bf16.xpose.msra.mxu0 0
    %521 = vmatprep.subr.bf16.mxu0 0
    %522 = vmatpush2.bf16.xpose.msra.mxu0 0
    %523 = vmatprep.subr.bf16.mxu0 0
    %524 = vmatpush2.bf16.xpose.msra.mxu0 0
    %525 = vmatprep.subr.bf16.mxu0 0
    %526 = vmatpush2.bf16.xpose.msra.mxu0 0
    %527 = vmatprep.subr.bf16.mxu0 0
    %528 = vmatpush2.bf16.xpose.msra.mxu0 0
    %529 = vmatprep.subr.bf16.mxu0 0
    %530 = vmatpush2.bf16.xpose.msra.mxu0 0
    %531 = vmatprep.mubr.bf16.mxu0 0
    %532 = vmatmul.mubr.bf16.gmra.mxu0 %v494
    %v533 = vpop.f32.mrf.mxu0
    %v534 = vadd.f32 0.0, %v533
    %v535 = vpop.f32.mrf.mxu0
    %v536 = vpop.f32.mrf.mxu0
    %v537 = vpop.f32.mrf.mxu0
    %538 = vdwg.mxu0
    %v539 = vmul.f32 %v484, 0.35355338
    %v540 = vmul.f32 %v534, 0.35355338
    %v541 = vsel %vm219, %v539, -inf
    %542 = vmax.xlane.f32.xlu0 %v541
    %v543 = vpop.xlane.xlu0 %542
    %v544 = vsel %vm219, %v540, -inf
    %545 = vmax.xlane.f32.xlu0 %v544
    %v546 = vpop.xlane.xlu0 %545
    %v547 = vsub.f32 %v539, %v543
    %v548 = vsub.f32 %v540, %v546
    %v549 = vmul.f32 %v547, 1.442695
    %v550 = vpow.pop %v549
    %v551 = vmul.f32 %v548, 1.442695
    %v552 = vpow.pop %v551
    %v553 = vsel %vm219, %v550, 0.0
    %554 = vadd.xlane.f32.xlu0 %v553
    %v555 = vpop.xlane.xlu0 %554
    %v556 = vsel %vm219, %v552, 0.0
    %557 = vadd.xlane.f32.xlu0 %v556
    %v558 = vpop.xlane.xlu0 %557
    %v559 = vrcp.pop %v555
    %v560 = vrcp.pop %v558
    %v561 = vmul.f32 %v550, %v559
    %v562 = vmul.f32 %v552, %v560
    %v563 = vpack.c.bf16 %v561, %v561
    %v564 = vpack.c.bf16 %v562, %v562
    %565 = vrot.lane.b32.xlu0 %v215, 56
    %v566 = vpop.permute.xlu0 %565
    %v568 = vsel %vm219, %v563, 0
    %v571 = vsel %vm345, %v566, 0
    %573 = vmatprep.subr.bf16.mxu0 0
    %574 = vmatpush1.bf16.msra.mxu0 0
    %575 = vmatprep.subr.bf16.mxu0 0
    %576 = vmatpush1.bf16.msra.mxu0 0
    %577 = vmatprep.subr.bf16.mxu0 0
    %578 = vmatpush1.bf16.msra.mxu0 0
    %579 = vmatprep.subr.bf16.mxu0 0
    %580 = vmatpush1.bf16.msra.mxu0 0
    %581 = vmatprep.subr.bf16.mxu0 0
    %582 = vmatpush1.bf16.msra.mxu0 0
    %583 = vmatprep.subr.bf16.mxu0 0
    %584 = vmatpush1.bf16.msra.mxu0 0
    %585 = vmatprep.subr.bf16.mxu0 0
    %586 = vmatpush1.bf16.msra.mxu0 0
    %587 = vmatprep.subr.bf16.mxu0 0
    %588 = vmatpush1.bf16.msra.mxu0 %v571
    %589 = vmatprep.subr.bf16.mxu0 0
    %590 = vmatpush2.bf16.msra.mxu0 0
    %591 = vmatprep.subr.bf16.mxu0 0
    %592 = vmatpush2.bf16.msra.mxu0 0
    %593 = vmatprep.subr.bf16.mxu0 0
    %594 = vmatpush2.bf16.msra.mxu0 0
    %595 = vmatprep.subr.bf16.mxu0 0
    %596 = vmatpush2.bf16.msra.mxu0 0
    %597 = vmatprep.subr.bf16.mxu0 0
    %598 = vmatpush2.bf16.msra.mxu0 0
    %599 = vmatprep.subr.bf16.mxu0 0
    %600 = vmatpush2.bf16.msra.mxu0 0
    %601 = vmatprep.subr.bf16.mxu0 0
    %602 = vmatpush2.bf16.msra.mxu0 0
    %603 = vmatprep.subr.bf16.mxu0 0
    %604 = vmatpush2.bf16.msra.mxu0 0
    %605 = vmatprep.mubr.bf16.mxu0 0
    %606 = vmatmul.mubr.bf16.gmra.mxu0 %v568
    %v607 = vpop.f32.mrf.mxu0
    %v608 = vadd.f32 0.0, %v607
    %v609 = vpop.f32.mrf.mxu0
    %v610 = vpop.f32.mrf.mxu0
    %v611 = vpop.f32.mrf.mxu0
    %612 = vdwg.mxu0
    %613 = vrot.lane.b32.xlu0 %v216, 56
    %v614 = vpop.permute.xlu0 %613
    %v616 = vsel %vm219, %v564, 0
    %v619 = vsel %vm345, %v614, 0
    %621 = vmatprep.subr.bf16.mxu0 0
    %622 = vmatpush1.bf16.msra.mxu0 0
    %623 = vmatprep.subr.bf16.mxu0 0
    %624 = vmatpush1.bf16.msra.mxu0 0
    %625 = vmatprep.subr.bf16.mxu0 0
    %626 = vmatpush1.bf16.msra.mxu0 0
    %627 = vmatprep.subr.bf16.mxu0 0
    %628 = vmatpush1.bf16.msra.mxu0 0
    %629 = vmatprep.subr.bf16.mxu0 0
    %630 = vmatpush1.bf16.msra.mxu0 0
    %631 = vmatprep.subr.bf16.mxu0 0
    %632 = vmatpush1.bf16.msra.mxu0 0
    %633 = vmatprep.subr.bf16.mxu0 0
    %634 = vmatpush1.bf16.msra.mxu0 0
    %635 = vmatprep.subr.bf16.mxu0 0
    %636 = vmatpush1.bf16.msra.mxu0 %v619
    %637 = vmatprep.subr.bf16.mxu0 0
    %638 = vmatpush2.bf16.msra.mxu0 0
    %639 = vmatprep.subr.bf16.mxu0 0
    %640 = vmatpush2.bf16.msra.mxu0 0
    %641 = vmatprep.subr.bf16.mxu0 0
    %642 = vmatpush2.bf16.msra.mxu0 0
    %643 = vmatprep.subr.bf16.mxu0 0
    %644 = vmatpush2.bf16.msra.mxu0 0
    %645 = vmatprep.subr.bf16.mxu0 0
    %646 = vmatpush2.bf16.msra.mxu0 0
    %647 = vmatprep.subr.bf16.mxu0 0
    %648 = vmatpush2.bf16.msra.mxu0 0
    %649 = vmatprep.subr.bf16.mxu0 0
    %650 = vmatpush2.bf16.msra.mxu0 0
    %651 = vmatprep.subr.bf16.mxu0 0
    %652 = vmatpush2.bf16.msra.mxu0 0
    %653 = vmatprep.mubr.bf16.mxu0 0
    %654 = vmatmul.mubr.bf16.gmra.mxu0 %v616
    %v655 = vpop.f32.mrf.mxu0
    %v656 = vadd.f32 0.0, %v655
    %v657 = vpop.f32.mrf.mxu0
    %v658 = vpop.f32.mrf.mxu0
    %v659 = vpop.f32.mrf.mxu0
    %660 = vdwg.mxu0
    %v661 = vpack.c.bf16 %v656, %v608
    %v662 = vld [vmem:[%s5 + $0x4] sm:$0xf]
    %v664 = vsel %vm219, %v661, 0
    %v667 = vsel %vm345, %v662, 0
    %669 = vmatprep.subr.bf16.mxu0 0
    %670 = vmatpush1.bf16.msra.mxu0 0
    %671 = vmatprep.subr.bf16.mxu0 0
    %672 = vmatpush1.bf16.msra.mxu0 0
    %673 = vmatprep.subr.bf16.mxu0 0
    %674 = vmatpush1.bf16.msra.mxu0 0
    %675 = vmatprep.subr.bf16.mxu0 0
    %676 = vmatpush1.bf16.msra.mxu0 0
    %677 = vmatprep.subr.bf16.mxu0 0
    %678 = vmatpush1.bf16.msra.mxu0 0
    %679 = vmatprep.subr.bf16.mxu0 0
    %680 = vmatpush1.bf16.msra.mxu0 0
    %681 = vmatprep.subr.bf16.mxu0 0
    %682 = vmatpush1.bf16.msra.mxu0 0
    %683 = vmatprep.subr.bf16.mxu0 0
    %684 = vmatpush1.bf16.msra.mxu0 %v667
    %685 = vmatprep.subr.bf16.mxu0 0
    %686 = vmatpush2.bf16.msra.mxu0 0
    %687 = vmatprep.subr.bf16.mxu0 0
    %688 = vmatpush2.bf16.msra.mxu0 0
    %689 = vmatprep.subr.bf16.mxu0 0
    %690 = vmatpush2.bf16.msra.mxu0 0
    %691 = vmatprep.subr.bf16.mxu0 0
    %692 = vmatpush2.bf16.msra.mxu0 0
    %693 = vmatprep.subr.bf16.mxu0 0
    %694 = vmatpush2.bf16.msra.mxu0 0
    %695 = vmatprep.subr.bf16.mxu0 0
    %696 = vmatpush2.bf16.msra.mxu0 0
    %697 = vmatprep.subr.bf16.mxu0 0
    %698 = vmatpush2.bf16.msra.mxu0 0
    %699 = vmatprep.subr.bf16.mxu0 0
    %700 = vmatpush2.bf16.msra.mxu0 0
    %701 = vmatprep.mubr.bf16.mxu0 0
    %702 = vmatmul.mubr.bf16.gmra.mxu0 %v664
    %v703 = vpop.f32.mrf.mxu0
    %v704 = vadd.f32 0.0, %v703
    %v705 = vpop.f32.mrf.mxu0
    %v706 = vpop.f32.mrf.mxu0
    %v707 = vadd.f32 0.0, %v706
    %v708 = vpop.f32.mrf.mxu0
    %709 = vdwg.mxu0
    %v711 = vsel %vm219, %v437, 0
    %v714 = vsel %vm345, %v438, 0
    %716 = vmatprep.subr.bf16.mxu0 0
    %717 = vmatpush1.bf16.msra.mxu0 0
    %718 = vmatprep.subr.bf16.mxu0 0
    %719 = vmatpush1.bf16.msra.mxu0 0
    %720 = vmatprep.subr.bf16.mxu0 0
    %721 = vmatpush1.bf16.msra.mxu0 0
    %722 = vmatprep.subr.bf16.mxu0 0
    %723 = vmatpush1.bf16.msra.mxu0 0
    %724 = vmatprep.subr.bf16.mxu0 0
    %725 = vmatpush1.bf16.msra.mxu0 0
    %726 = vmatprep.subr.bf16.mxu0 0
    %727 = vmatpush1.bf16.msra.mxu0 0
    %728 = vmatprep.subr.bf16.mxu0 0
    %729 = vmatpush1.bf16.msra.mxu0 0
    %730 = vmatprep.subr.bf16.mxu0 0
    %731 = vmatpush1.bf16.msra.mxu0 %v714
    %732 = vmatprep.subr.bf16.mxu0 0
    %733 = vmatpush2.bf16.msra.mxu0 0
    %734 = vmatprep.subr.bf16.mxu0 0
    %735 = vmatpush2.bf16.msra.mxu0 0
    %736 = vmatprep.subr.bf16.mxu0 0
    %737 = vmatpush2.bf16.msra.mxu0 0
    %738 = vmatprep.subr.bf16.mxu0 0
    %739 = vmatpush2.bf16.msra.mxu0 0
    %740 = vmatprep.subr.bf16.mxu0 0
    %741 = vmatpush2.bf16.msra.mxu0 0
    %742 = vmatprep.subr.bf16.mxu0 0
    %743 = vmatpush2.bf16.msra.mxu0 0
    %744 = vmatprep.subr.bf16.mxu0 0
    %745 = vmatpush2.bf16.msra.mxu0 0
    %746 = vmatprep.subr.bf16.mxu0 0
    %747 = vmatpush2.bf16.msra.mxu0 0
    %748 = vmatprep.mubr.bf16.mxu0 0
    %749 = vmatmul.mubr.bf16.gmra.mxu0 %v711
    %v750 = vpop.f32.mrf.mxu0
    %v751 = vadd.f32 %v704, %v750
    %v752 = vpop.f32.mrf.mxu0
    %v753 = vpop.f32.mrf.mxu0
    %v754 = vadd.f32 %v707, %v753
    %v755 = vpop.f32.mrf.mxu0
    %756 = vdwg.mxu0
    %757 = vrot.lane.b32.xlu0 %v215, 112
    %v758 = vpop.permute.xlu0 %757
    %759 = vrot.lane.b32.xlu0 %v215, 80
    %v760 = vpop.permute.xlu0 %759
    %v762 = vsel %vm219, %v758, 0
    %v765 = vsel %vm219, %v760, 0
    %767 = vmatprep.subr.bf16.mxu0 0
    %768 = vmatpush1.bf16.xpose.msra.mxu0 0
    %769 = vmatprep.subr.bf16.mxu0 0
    %770 = vmatpush1.bf16.xpose.msra.mxu0 0
    %771 = vmatprep.subr.bf16.mxu0 0
    %772 = vmatpush1.bf16.xpose.msra.mxu0 0
    %773 = vmatprep.subr.bf16.mxu0 0
    %774 = vmatpush1.bf16.xpose.msra.mxu0 0
    %775 = vmatprep.subr.bf16.mxu0 0
    %776 = vmatpush1.bf16.xpose.msra.mxu0 0
    %777 = vmatprep.subr.bf16.mxu0 0
    %778 = vmatpush1.bf16.xpose.msra.mxu0 0
    %779 = vmatprep.subr.bf16.mxu0 0
    %780 = vmatpush1.bf16.xpose.msra.mxu0 0
    %781 = vmatprep.subr.bf16.mxu0 0
    %782 = vmatpush1.bf16.xpose.msra.mxu0 %v765
    %783 = vmatprep.subr.bf16.mxu0 0
    %784 = vmatpush2.bf16.xpose.msra.mxu0 0
    %785 = vmatprep.subr.bf16.mxu0 0
    %786 = vmatpush2.bf16.xpose.msra.mxu0 0
    %787 = vmatprep.subr.bf16.mxu0 0
    %788 = vmatpush2.bf16.xpose.msra.mxu0 0
    %789 = vmatprep.subr.bf16.mxu0 0
    %790 = vmatpush2.bf16.xpose.msra.mxu0 0
    %791 = vmatprep.subr.bf16.mxu0 0
    %792 = vmatpush2.bf16.xpose.msra.mxu0 0
    %793 = vmatprep.subr.bf16.mxu0 0
    %794 = vmatpush2.bf16.xpose.msra.mxu0 0
    %795 = vmatprep.subr.bf16.mxu0 0
    %796 = vmatpush2.bf16.xpose.msra.mxu0 0
    %797 = vmatprep.subr.bf16.mxu0 0
    %798 = vmatpush2.bf16.xpose.msra.mxu0 0
    %799 = vmatprep.mubr.bf16.mxu0 0
    %800 = vmatmul.mubr.bf16.gmra.mxu0 %v762
    %v801 = vpop.f32.mrf.mxu0
    %v802 = vadd.f32 0.0, %v801
    %v803 = vpop.f32.mrf.mxu0
    %v804 = vpop.f32.mrf.mxu0
    %v805 = vpop.f32.mrf.mxu0
    %806 = vdwg.mxu0
    %807 = vrot.lane.b32.xlu0 %v216, 112
    %v808 = vpop.permute.xlu0 %807
    %809 = vrot.lane.b32.xlu0 %v216, 80
    %v810 = vpop.permute.xlu0 %809
    %v812 = vsel %vm219, %v808, 0
    %v815 = vsel %vm219, %v810, 0
    %817 = vmatprep.subr.bf16.mxu0 0
    %818 = vmatpush1.bf16.xpose.msra.mxu0 0
    %819 = vmatprep.subr.bf16.mxu0 0
    %820 = vmatpush1.bf16.xpose.msra.mxu0 0
    %821 = vmatprep.subr.bf16.mxu0 0
    %822 = vmatpush1.bf16.xpose.msra.mxu0 0
    %823 = vmatprep.subr.bf16.mxu0 0
    %824 = vmatpush1.bf16.xpose.msra.mxu0 0
    %825 = vmatprep.subr.bf16.mxu0 0
    %826 = vmatpush1.bf16.xpose.msra.mxu0 0
    %827 = vmatprep.subr.bf16.mxu0 0
    %828 = vmatpush1.bf16.xpose.msra.mxu0 0
    %829 = vmatprep.subr.bf16.mxu0 0
    %830 = vmatpush1.bf16.xpose.msra.mxu0 0
    %831 = vmatprep.subr.bf16.mxu0 0
    %832 = vmatpush1.bf16.xpose.msra.mxu0 %v815
    %833 = vmatprep.subr.bf16.mxu0 0
    %834 = vmatpush2.bf16.xpose.msra.mxu0 0
    %835 = vmatprep.subr.bf16.mxu0 0
    %836 = vmatpush2.bf16.xpose.msra.mxu0 0
    %837 = vmatprep.subr.bf16.mxu0 0
    %838 = vmatpush2.bf16.xpose.msra.mxu0 0
    %839 = vmatprep.subr.bf16.mxu0 0
    %840 = vmatpush2.bf16.xpose.msra.mxu0 0
    %841 = vmatprep.subr.bf16.mxu0 0
    %842 = vmatpush2.bf16.xpose.msra.mxu0 0
    %843 = vmatprep.subr.bf16.mxu0 0
    %844 = vmatpush2.bf16.xpose.msra.mxu0 0
    %845 = vmatprep.subr.bf16.mxu0 0
    %846 = vmatpush2.bf16.xpose.msra.mxu0 0
    %847 = vmatprep.subr.bf16.mxu0 0
    %848 = vmatpush2.bf16.xpose.msra.mxu0 0
    %849 = vmatprep.mubr.bf16.mxu0 0
    %850 = vmatmul.mubr.bf16.gmra.mxu0 %v812
    %v851 = vpop.f32.mrf.mxu0
    %v852 = vadd.f32 0.0, %v851
    %v853 = vpop.f32.mrf.mxu0
    %v854 = vpop.f32.mrf.mxu0
    %v855 = vpop.f32.mrf.mxu0
    %856 = vdwg.mxu0
    %v857 = vmul.f32 %v802, 0.35355338
    %v858 = vmul.f32 %v852, 0.35355338
    %v859 = vsel %vm219, %v857, -inf
    %860 = vmax.xlane.f32.xlu0 %v859
    %v861 = vpop.xlane.xlu0 %860
    %v862 = vsel %vm219, %v858, -inf
    %863 = vmax.xlane.f32.xlu0 %v862
    %v864 = vpop.xlane.xlu0 %863
    %v865 = vsub.f32 %v857, %v861
    %v866 = vsub.f32 %v858, %v864
    %v867 = vmul.f32 %v865, 1.442695
    %v868 = vpow.pop %v867
    %v869 = vmul.f32 %v866, 1.442695
    %v870 = vpow.pop %v869
    %v871 = vsel %vm219, %v868, 0.0
    %872 = vadd.xlane.f32.xlu0 %v871
    %v873 = vpop.xlane.xlu0 %872
    %v874 = vsel %vm219, %v870, 0.0
    %875 = vadd.xlane.f32.xlu0 %v874
    %v876 = vpop.xlane.xlu0 %875
    %v877 = vrcp.pop %v873
    %v878 = vrcp.pop %v876
    %v879 = vmul.f32 %v868, %v877
    %v880 = vmul.f32 %v870, %v878
    %v881 = vpack.c.bf16 %v879, %v879
    %v882 = vpack.c.bf16 %v880, %v880
    %883 = vrot.lane.b32.xlu0 %v215, 48
    %v884 = vpop.permute.xlu0 %883
    %v886 = vsel %vm219, %v881, 0
    %v889 = vsel %vm345, %v884, 0
    %891 = vmatprep.subr.bf16.mxu0 0
    %892 = vmatpush1.bf16.msra.mxu0 0
    %893 = vmatprep.subr.bf16.mxu0 0
    %894 = vmatpush1.bf16.msra.mxu0 0
    %895 = vmatprep.subr.bf16.mxu0 0
    %896 = vmatpush1.bf16.msra.mxu0 0
    %897 = vmatprep.subr.bf16.mxu0 0
    %898 = vmatpush1.bf16.msra.mxu0 0
    %899 = vmatprep.subr.bf16.mxu0 0
    %900 = vmatpush1.bf16.msra.mxu0 0
    %901 = vmatprep.subr.bf16.mxu0 0
    %902 = vmatpush1.bf16.msra.mxu0 0
    %903 = vmatprep.subr.bf16.mxu0 0
    %904 = vmatpush1.bf16.msra.mxu0 0
    %905 = vmatprep.subr.bf16.mxu0 0
    %906 = vmatpush1.bf16.msra.mxu0 %v889
    %907 = vmatprep.subr.bf16.mxu0 0
    %908 = vmatpush2.bf16.msra.mxu0 0
    %909 = vmatprep.subr.bf16.mxu0 0
    %910 = vmatpush2.bf16.msra.mxu0 0
    %911 = vmatprep.subr.bf16.mxu0 0
    %912 = vmatpush2.bf16.msra.mxu0 0
    %913 = vmatprep.subr.bf16.mxu0 0
    %914 = vmatpush2.bf16.msra.mxu0 0
    %915 = vmatprep.subr.bf16.mxu0 0
    %916 = vmatpush2.bf16.msra.mxu0 0
    %917 = vmatprep.subr.bf16.mxu0 0
    %918 = vmatpush2.bf16.msra.mxu0 0
    %919 = vmatprep.subr.bf16.mxu0 0
    %920 = vmatpush2.bf16.msra.mxu0 0
    %921 = vmatprep.subr.bf16.mxu0 0
    %922 = vmatpush2.bf16.msra.mxu0 0
    %923 = vmatprep.mubr.bf16.mxu0 0
    %924 = vmatmul.mubr.bf16.gmra.mxu0 %v886
    %v925 = vpop.f32.mrf.mxu0
    %v926 = vadd.f32 0.0, %v925
    %v927 = vpop.f32.mrf.mxu0
    %v928 = vpop.f32.mrf.mxu0
    %v929 = vpop.f32.mrf.mxu0
    %930 = vdwg.mxu0
    %931 = vrot.lane.b32.xlu0 %v216, 48
    %v932 = vpop.permute.xlu0 %931
    %v934 = vsel %vm219, %v882, 0
    %v937 = vsel %vm345, %v932, 0
    %939 = vmatprep.subr.bf16.mxu0 0
    %940 = vmatpush1.bf16.msra.mxu0 0
    %941 = vmatprep.subr.bf16.mxu0 0
    %942 = vmatpush1.bf16.msra.mxu0 0
    %943 = vmatprep.subr.bf16.mxu0 0
    %944 = vmatpush1.bf16.msra.mxu0 0
    %945 = vmatprep.subr.bf16.mxu0 0
    %946 = vmatpush1.bf16.msra.mxu0 0
    %947 = vmatprep.subr.bf16.mxu0 0
    %948 = vmatpush1.bf16.msra.mxu0 0
    %949 = vmatprep.subr.bf16.mxu0 0
    %950 = vmatpush1.bf16.msra.mxu0 0
    %951 = vmatprep.subr.bf16.mxu0 0
    %952 = vmatpush1.bf16.msra.mxu0 0
    %953 = vmatprep.subr.bf16.mxu0 0
    %954 = vmatpush1.bf16.msra.mxu0 %v937
    %955 = vmatprep.subr.bf16.mxu0 0
    %956 = vmatpush2.bf16.msra.mxu0 0
    %957 = vmatprep.subr.bf16.mxu0 0
    %958 = vmatpush2.bf16.msra.mxu0 0
    %959 = vmatprep.subr.bf16.mxu0 0
    %960 = vmatpush2.bf16.msra.mxu0 0
    %961 = vmatprep.subr.bf16.mxu0 0
    %962 = vmatpush2.bf16.msra.mxu0 0
    %963 = vmatprep.subr.bf16.mxu0 0
    %964 = vmatpush2.bf16.msra.mxu0 0
    %965 = vmatprep.subr.bf16.mxu0 0
    %966 = vmatpush2.bf16.msra.mxu0 0
    %967 = vmatprep.subr.bf16.mxu0 0
    %968 = vmatpush2.bf16.msra.mxu0 0
    %969 = vmatprep.subr.bf16.mxu0 0
    %970 = vmatpush2.bf16.msra.mxu0 0
    %971 = vmatprep.mubr.bf16.mxu0 0
    %972 = vmatmul.mubr.bf16.gmra.mxu0 %v934
    %v973 = vpop.f32.mrf.mxu0
    %v974 = vadd.f32 0.0, %v973
    %v975 = vpop.f32.mrf.mxu0
    %v976 = vpop.f32.mrf.mxu0
    %v977 = vpop.f32.mrf.mxu0
    %978 = vdwg.mxu0
    %v979 = vpack.c.bf16 %v974, %v926
    %v980 = vld [vmem:[%s5 + $0x8] sm:$0xf]
    %v982 = vsel %vm219, %v979, 0
    %v985 = vsel %vm345, %v980, 0
    %987 = vmatprep.subr.bf16.mxu0 0
    %988 = vmatpush1.bf16.msra.mxu0 0
    %989 = vmatprep.subr.bf16.mxu0 0
    %990 = vmatpush1.bf16.msra.mxu0 0
    %991 = vmatprep.subr.bf16.mxu0 0
    %992 = vmatpush1.bf16.msra.mxu0 0
    %993 = vmatprep.subr.bf16.mxu0 0
    %994 = vmatpush1.bf16.msra.mxu0 0
    %995 = vmatprep.subr.bf16.mxu0 0
    %996 = vmatpush1.bf16.msra.mxu0 0
    %997 = vmatprep.subr.bf16.mxu0 0
    %998 = vmatpush1.bf16.msra.mxu0 0
    %999 = vmatprep.subr.bf16.mxu0 0
    %1000 = vmatpush1.bf16.msra.mxu0 0
    %1001 = vmatprep.subr.bf16.mxu0 0
    %1002 = vmatpush1.bf16.msra.mxu0 %v985
    %1003 = vmatprep.subr.bf16.mxu0 0
    %1004 = vmatpush2.bf16.msra.mxu0 0
    %1005 = vmatprep.subr.bf16.mxu0 0
    %1006 = vmatpush2.bf16.msra.mxu0 0
    %1007 = vmatprep.subr.bf16.mxu0 0
    %1008 = vmatpush2.bf16.msra.mxu0 0
    %1009 = vmatprep.subr.bf16.mxu0 0
    %1010 = vmatpush2.bf16.msra.mxu0 0
    %1011 = vmatprep.subr.bf16.mxu0 0
    %1012 = vmatpush2.bf16.msra.mxu0 0
    %1013 = vmatprep.subr.bf16.mxu0 0
    %1014 = vmatpush2.bf16.msra.mxu0 0
    %1015 = vmatprep.subr.bf16.mxu0 0
    %1016 = vmatpush2.bf16.msra.mxu0 0
    %1017 = vmatprep.subr.bf16.mxu0 0
    %1018 = vmatpush2.bf16.msra.mxu0 0
    %1019 = vmatprep.mubr.bf16.mxu0 0
    %1020 = vmatmul.mubr.bf16.gmra.mxu0 %v982
    %v1021 = vpop.f32.mrf.mxu0
    %v1022 = vadd.f32 0.0, %v1021
    %v1023 = vpop.f32.mrf.mxu0
    %v1024 = vpop.f32.mrf.mxu0
    %v1025 = vadd.f32 0.0, %v1024
    %v1026 = vpop.f32.mrf.mxu0
    %1027 = vdwg.mxu0
    %v1028 = vadd.f32 %v751, %v1022
    %v1029 = vadd.f32 %v754, %v1025
    %1030 = vrot.lane.b32.xlu0 %v215, 104
    %v1031 = vpop.permute.xlu0 %1030
    %1032 = vrot.lane.b32.xlu0 %v215, 72
    %v1033 = vpop.permute.xlu0 %1032
    %v1035 = vsel %vm219, %v1031, 0
    %v1038 = vsel %vm219, %v1033, 0
    %1040 = vmatprep.subr.bf16.mxu0 0
    %1041 = vmatpush1.bf16.xpose.msra.mxu0 0
    %1042 = vmatprep.subr.bf16.mxu0 0
    %1043 = vmatpush1.bf16.xpose.msra.mxu0 0
    %1044 = vmatprep.subr.bf16.mxu0 0
    %1045 = vmatpush1.bf16.xpose.msra.mxu0 0
    %1046 = vmatprep.subr.bf16.mxu0 0
    %1047 = vmatpush1.bf16.xpose.msra.mxu0 0
    %1048 = vmatprep.subr.bf16.mxu0 0
    %1049 = vmatpush1.bf16.xpose.msra.mxu0 0
    %1050 = vmatprep.subr.bf16.mxu0 0
    %1051 = vmatpush1.bf16.xpose.msra.mxu0 0
    %1052 = vmatprep.subr.bf16.mxu0 0
    %1053 = vmatpush1.bf16.xpose.msra.mxu0 0
    %1054 = vmatprep.subr.bf16.mxu0 0
    %1055 = vmatpush1.bf16.xpose.msra.mxu0 %v1038
    %1056 = vmatprep.subr.bf16.mxu0 0
    %1057 = vmatpush2.bf16.xpose.msra.mxu0 0
    %1058 = vmatprep.subr.bf16.mxu0 0
    %1059 = vmatpush2.bf16.xpose.msra.mxu0 0
    %1060 = vmatprep.subr.bf16.mxu0 0
    %1061 = vmatpush2.bf16.xpose.msra.mxu0 0
    %1062 = vmatprep.subr.bf16.mxu0 0
    %1063 = vmatpush2.bf16.xpose.msra.mxu0 0
    %1064 = vmatprep.subr.bf16.mxu0 0
    %1065 = vmatpush2.bf16.xpose.msra.mxu0 0
    %1066 = vmatprep.subr.bf16.mxu0 0
    %1067 = vmatpush2.bf16.xpose.msra.mxu0 0
    %1068 = vmatprep.subr.bf16.mxu0 0
    %1069 = vmatpush2.bf16.xpose.msra.mxu0 0
    %1070 = vmatprep.subr.bf16.mxu0 0
    %1071 = vmatpush2.bf16.xpose.msra.mxu0 0
    %1072 = vmatprep.mubr.bf16.mxu0 0
    %1073 = vmatmul.mubr.bf16.gmra.mxu0 %v1035
    %v1074 = vpop.f32.mrf.mxu0
    %v1075 = vadd.f32 0.0, %v1074
    %v1076 = vpop.f32.mrf.mxu0
    %v1077 = vpop.f32.mrf.mxu0
    %v1078 = vpop.f32.mrf.mxu0
    %1079 = vdwg.mxu0
    %1080 = vrot.lane.b32.xlu0 %v216, 104
    %v1081 = vpop.permute.xlu0 %1080
    %1082 = vrot.lane.b32.xlu0 %v216, 72
    %v1083 = vpop.permute.xlu0 %1082
    %v1085 = vsel %vm219, %v1081, 0
    %v1088 = vsel %vm219, %v1083, 0
    %1090 = vmatprep.subr.bf16.mxu0 0
    %1091 = vmatpush1.bf16.xpose.msra.mxu0 0
    %1092 = vmatprep.subr.bf16.mxu0 0
    %1093 = vmatpush1.bf16.xpose.msra.mxu0 0
    %1094 = vmatprep.subr.bf16.mxu0 0
    %1095 = vmatpush1.bf16.xpose.msra.mxu0 0
    %1096 = vmatprep.subr.bf16.mxu0 0
    %1097 = vmatpush1.bf16.xpose.msra.mxu0 0
    %1098 = vmatprep.subr.bf16.mxu0 0
    %1099 = vmatpush1.bf16.xpose.msra.mxu0 0
    %1100 = vmatprep.subr.bf16.mxu0 0
    %1101 = vmatpush1.bf16.xpose.msra.mxu0 0
    %1102 = vmatprep.subr.bf16.mxu0 0
    %1103 = vmatpush1.bf16.xpose.msra.mxu0 0
    %1104 = vmatprep.subr.bf16.mxu0 0
    %1105 = vmatpush1.bf16.xpose.msra.mxu0 %v1088
    %1106 = vmatprep.subr.bf16.mxu0 0
    %1107 = vmatpush2.bf16.xpose.msra.mxu0 0
    %1108 = vmatprep.subr.bf16.mxu0 0
    %1109 = vmatpush2.bf16.xpose.msra.mxu0 0
    %1110 = vmatprep.subr.bf16.mxu0 0
    %1111 = vmatpush2.bf16.xpose.msra.mxu0 0
    %1112 = vmatprep.subr.bf16.mxu0 0
    %1113 = vmatpush2.bf16.xpose.msra.mxu0 0
    %1114 = vmatprep.subr.bf16.mxu0 0
    %1115 = vmatpush2.bf16.xpose.msra.mxu0 0
    %1116 = vmatprep.subr.bf16.mxu0 0
    %1117 = vmatpush2.bf16.xpose.msra.mxu0 0
    %1118 = vmatprep.subr.bf16.mxu0 0
    %1119 = vmatpush2.bf16.xpose.msra.mxu0 0
    %1120 = vmatprep.subr.bf16.mxu0 0
    %1121 = vmatpush2.bf16.xpose.msra.mxu0 0
    %1122 = vmatprep.mubr.bf16.mxu0 0
    %1123 = vmatmul.mubr.bf16.gmra.mxu0 %v1085
    %v1124 = vpop.f32.mrf.mxu0
    %v1125 = vadd.f32 0.0, %v1124
    %v1126 = vpop.f32.mrf.mxu0
    %v1127 = vpop.f32.mrf.mxu0
    %v1128 = vpop.f32.mrf.mxu0
    %1129 = vdwg.mxu0
    %v1130 = vmul.f32 %v1075, 0.35355338
    %v1131 = vmul.f32 %v1125, 0.35355338
    %v1132 = vsel %vm219, %v1130, -inf
    %1133 = vmax.xlane.f32.xlu0 %v1132
    %v1134 = vpop.xlane.xlu0 %1133
    %v1135 = vsel %vm219, %v1131, -inf
    %1136 = vmax.xlane.f32.xlu0 %v1135
    %v1137 = vpop.xlane.xlu0 %1136
    %v1138 = vsub.f32 %v1130, %v1134
    %v1139 = vsub.f32 %v1131, %v1137
    %v1140 = vmul.f32 %v1138, 1.442695
    %v1141 = vpow.pop %v1140
    %v1142 = vmul.f32 %v1139, 1.442695
    %v1143 = vpow.pop %v1142
    %v1144 = vsel %vm219, %v1141, 0.0
    %1145 = vadd.xlane.f32.xlu0 %v1144
    %v1146 = vpop.xlane.xlu0 %1145
    %v1147 = vsel %vm219, %v1143, 0.0
    %1148 = vadd.xlane.f32.xlu0 %v1147
    %v1149 = vpop.xlane.xlu0 %1148
    %v1150 = vrcp.pop %v1146
    %v1151 = vrcp.pop %v1149
    %v1152 = vmul.f32 %v1141, %v1150
    %v1153 = vmul.f32 %v1143, %v1151
    %v1154 = vpack.c.bf16 %v1152, %v1152
    %v1155 = vpack.c.bf16 %v1153, %v1153
    %1156 = vrot.lane.b32.xlu0 %v215, 40
    %v1157 = vpop.permute.xlu0 %1156
    %v1159 = vsel %vm219, %v1154, 0
    %v1162 = vsel %vm345, %v1157, 0
    %1164 = vmatprep.subr.bf16.mxu0 0
    %1165 = vmatpush1.bf16.msra.mxu0 0
    %1166 = vmatprep.subr.bf16.mxu0 0
    %1167 = vmatpush1.bf16.msra.mxu0 0
    %1168 = vmatprep.subr.bf16.mxu0 0
    %1169 = vmatpush1.bf16.msra.mxu0 0
    %1170 = vmatprep.subr.bf16.mxu0 0
    %1171 = vmatpush1.bf16.msra.mxu0 0
    %1172 = vmatprep.subr.bf16.mxu0 0
    %1173 = vmatpush1.bf16.msra.mxu0 0
    %1174 = vmatprep.subr.bf16.mxu0 0
    %1175 = vmatpush1.bf16.msra.mxu0 0
    %1176 = vmatprep.subr.bf16.mxu0 0
    %1177 = vmatpush1.bf16.msra.mxu0 0
    %1178 = vmatprep.subr.bf16.mxu0 0
    %1179 = vmatpush1.bf16.msra.mxu0 %v1162
    %1180 = vmatprep.subr.bf16.mxu0 0
    %1181 = vmatpush2.bf16.msra.mxu0 0
    %1182 = vmatprep.subr.bf16.mxu0 0
    %1183 = vmatpush2.bf16.msra.mxu0 0
    %1184 = vmatprep.subr.bf16.mxu0 0
    %1185 = vmatpush2.bf16.msra.mxu0 0
    %1186 = vmatprep.subr.bf16.mxu0 0
    %1187 = vmatpush2.bf16.msra.mxu0 0
    %1188 = vmatprep.subr.bf16.mxu0 0
    %1189 = vmatpush2.bf16.msra.mxu0 0
    %1190 = vmatprep.subr.bf16.mxu0 0
    %1191 = vmatpush2.bf16.msra.mxu0 0
    %1192 = vmatprep.subr.bf16.mxu0 0
    %1193 = vmatpush2.bf16.msra.mxu0 0
    %1194 = vmatprep.subr.bf16.mxu0 0
    %1195 = vmatpush2.bf16.msra.mxu0 0
    %1196 = vmatprep.mubr.bf16.mxu0 0
    %1197 = vmatmul.mubr.bf16.gmra.mxu0 %v1159
    %v1198 = vpop.f32.mrf.mxu0
    %v1199 = vadd.f32 0.0, %v1198
    %v1200 = vpop.f32.mrf.mxu0
    %v1201 = vpop.f32.mrf.mxu0
    %v1202 = vpop.f32.mrf.mxu0
    %1203 = vdwg.mxu0
    %1204 = vrot.lane.b32.xlu0 %v216, 40
    %v1205 = vpop.permute.xlu0 %1204
    %v1207 = vsel %vm219, %v1155, 0
    %v1210 = vsel %vm345, %v1205, 0
    %1212 = vmatprep.subr.bf16.mxu0 0
    %1213 = vmatpush1.bf16.msra.mxu0 0
    %1214 = vmatprep.subr.bf16.mxu0 0
    %1215 = vmatpush1.bf16.msra.mxu0 0
    %1216 = vmatprep.subr.bf16.mxu0 0
    %1217 = vmatpush1.bf16.msra.mxu0 0
    %1218 = vmatprep.subr.bf16.mxu0 0
    %1219 = vmatpush1.bf16.msra.mxu0 0
    %1220 = vmatprep.subr.bf16.mxu0 0
    %1221 = vmatpush1.bf16.msra.mxu0 0
    %1222 = vmatprep.subr.bf16.mxu0 0
    %1223 = vmatpush1.bf16.msra.mxu0 0
    %1224 = vmatprep.subr.bf16.mxu0 0
    %1225 = vmatpush1.bf16.msra.mxu0 0
    %1226 = vmatprep.subr.bf16.mxu0 0
    %1227 = vmatpush1.bf16.msra.mxu0 %v1210
    %1228 = vmatprep.subr.bf16.mxu0 0
    %1229 = vmatpush2.bf16.msra.mxu0 0
    %1230 = vmatprep.subr.bf16.mxu0 0
    %1231 = vmatpush2.bf16.msra.mxu0 0
    %1232 = vmatprep.subr.bf16.mxu0 0
    %1233 = vmatpush2.bf16.msra.mxu0 0
    %1234 = vmatprep.subr.bf16.mxu0 0
    %1235 = vmatpush2.bf16.msra.mxu0 0
    %1236 = vmatprep.subr.bf16.mxu0 0
    %1237 = vmatpush2.bf16.msra.mxu0 0
    %1238 = vmatprep.subr.bf16.mxu0 0
    %1239 = vmatpush2.bf16.msra.mxu0 0
    %1240 = vmatprep.subr.bf16.mxu0 0
    %1241 = vmatpush2.bf16.msra.mxu0 0
    %1242 = vmatprep.subr.bf16.mxu0 0
    %1243 = vmatpush2.bf16.msra.mxu0 0
    %1244 = vmatprep.mubr.bf16.mxu0 0
    %1245 = vmatmul.mubr.bf16.gmra.mxu0 %v1207
    %v1246 = vpop.f32.mrf.mxu0
    %v1247 = vadd.f32 0.0, %v1246
    %v1248 = vpop.f32.mrf.mxu0
    %v1249 = vpop.f32.mrf.mxu0
    %v1250 = vpop.f32.mrf.mxu0
    %1251 = vdwg.mxu0
    %v1252 = vpack.c.bf16 %v1247, %v1199
    %v1253 = vld [vmem:[%s5 + $0xc] sm:$0xf]
    %v1255 = vsel %vm219, %v1252, 0
    %v1258 = vsel %vm345, %v1253, 0
    %1260 = vmatprep.subr.bf16.mxu0 0
    %1261 = vmatpush1.bf16.msra.mxu0 0
    %1262 = vmatprep.subr.bf16.mxu0 0
    %1263 = vmatpush1.bf16.msra.mxu0 0
    %1264 = vmatprep.subr.bf16.mxu0 0
    %1265 = vmatpush1.bf16.msra.mxu0 0
    %1266 = vmatprep.subr.bf16.mxu0 0
    %1267 = vmatpush1.bf16.msra.mxu0 0
    %1268 = vmatprep.subr.bf16.mxu0 0
    %1269 = vmatpush1.bf16.msra.mxu0 0
    %1270 = vmatprep.subr.bf16.mxu0 0
    %1271 = vmatpush1.bf16.msra.mxu0 0
    %1272 = vmatprep.subr.bf16.mxu0 0
    %1273 = vmatpush1.bf16.msra.mxu0 0
    %1274 = vmatprep.subr.bf16.mxu0 0
    %1275 = vmatpush1.bf16.msra.mxu0 %v1258
    %1276 = vmatprep.subr.bf16.mxu0 0
    %1277 = vmatpush2.bf16.msra.mxu0 0
    %1278 = vmatprep.subr.bf16.mxu0 0
    %1279 = vmatpush2.bf16.msra.mxu0 0
    %1280 = vmatprep.subr.bf16.mxu0 0
    %1281 = vmatpush2.bf16.msra.mxu0 0
    %1282 = vmatprep.subr.bf16.mxu0 0
    %1283 = vmatpush2.bf16.msra.mxu0 0
    %1284 = vmatprep.subr.bf16.mxu0 0
    %1285 = vmatpush2.bf16.msra.mxu0 0
    %1286 = vmatprep.subr.bf16.mxu0 0
    %1287 = vmatpush2.bf16.msra.mxu0 0
    %1288 = vmatprep.subr.bf16.mxu0 0
    %1289 = vmatpush2.bf16.msra.mxu0 0
    %1290 = vmatprep.subr.bf16.mxu0 0
    %1291 = vmatpush2.bf16.msra.mxu0 0
    %1292 = vmatprep.mubr.bf16.mxu0 0
    %1293 = vmatmul.mubr.bf16.gmra.mxu0 %v1255
    %v1294 = vpop.f32.mrf.mxu0
    %v1295 = vadd.f32 0.0, %v1294
    %v1296 = vpop.f32.mrf.mxu0
    %v1297 = vpop.f32.mrf.mxu0
    %v1298 = vadd.f32 0.0, %v1297
    %v1299 = vpop.f32.mrf.mxu0
    %1300 = vdwg.mxu0
    %v1301 = vadd.f32 %v1028, %v1295
    %v1302 = vadd.f32 %v1029, %v1298
    %v1303 = vadd.f32 %v95, %v1301
    %v1304 = vadd.f32 %v96, %v1302
    %v1305 = vld [vmem:[%s6] sm:$0x1]
    %v1307 = vlaneseq
    %v1308 = vshrl.u32 %v1307, 7
    %v1309 = vsub.s32 0, %v1308
    %v1310 = vrot.slane %v1305, %v1309
    %v1312 = vadd.f32 %v1303, %v1310
    %v1313 = vadd.f32 %v1304, %v1310
    %v1314 = vld [vmem:[#allocation2] sm:$0x1]
    %v1315 = vld [vmem:[#allocation5] sm:$0x1]
    %v1316 = vsel %vm99, %v1312, 0.0
    %1317 = vadd.xlane.f32.xlu0 %v1316
    %v1318 = vpop.xlane.xlu0 %1317
    %v1319 = vsel %vm99, %v1313, 0.0
    %1320 = vadd.xlane.f32.xlu0 %v1319
    %v1321 = vpop.xlane.xlu0 %1320
    %v1322 = vmul.f32 %v1318, %v106
    %v1323 = vmul.f32 %v1321, %v106
    %v1324 = vsub.f32 %v1312, %v1322
    %v1325 = vsub.f32 %v1313, %v1323
    %v1326 = vmul.f32 %v1324, %v1324
    %v1327 = vmul.f32 %v1325, %v1325
    %v1328 = vsel %vm99, %v1326, 0.0
    %1329 = vadd.xlane.f32.xlu0 %v1328
    %v1330 = vpop.xlane.xlu0 %1329
    %v1331 = vsel %vm99, %v1327, 0.0
    %1332 = vadd.xlane.f32.xlu0 %v1331
    %v1333 = vpop.xlane.xlu0 %1332
    %v1334 = vmul.f32 %v1330, %v106
    %v1335 = vmul.f32 %v1333, %v106
    %v1336 = vadd.f32 %v1334, 1e-05
    %v1337 = vadd.f32 %v1335, 1e-05
    %v1338 = vrsqrt.pop %v1336
    %v1339 = vrsqrt.pop %v1337
    %v1340 = vmul.f32 %v1324, %v1338
    %v1341 = vmul.f32 %v1325, %v1339
    %v1343 = vlaneseq
    %v1344 = vshrl.u32 %v1343, 7
    %v1345 = vsub.s32 0, %v1344
    %v1346 = vrot.slane %v1314, %v1345
    %v1348 = vmul.f32 %v1340, %v1346
    %v1349 = vmul.f32 %v1341, %v1346
    %v1351 = vlaneseq
    %v1352 = vshrl.u32 %v1351, 7
    %v1353 = vsub.s32 0, %v1352
    %v1354 = vrot.slane %v1315, %v1353
    %v1356 = vadd.f32 %v1348, %v1354
    %v1357 = vadd.f32 %v1349, %v1354
    %v1358 = vpack.c.bf16 %v1357, %v1356
    %v1359 = vld [vmem:[#allocation7] sm:$0xf]
    %v1360 = vld [vmem:[#allocation7 + $0x4] sm:$0xf]
    %v1361 = vld [vmem:[#allocation7 + $0x8] sm:$0xf]
    %v1362 = vld [vmem:[#allocation7 + $0xc] sm:$0xf]
    %v1363 = vld [vmem:[#allocation8] sm:$0x1]
    %v1365 = vlaneseq
    %v1366 = vshrl.u32 %v1365, 7
    %v1367 = vsub.s32 0, %v1366
    %v1368 = vrot.slane %v1363, %v1367
    %v1374 = vunpack.c.l.b16 %v1359
    %v1375 = vunpack.c.l.b16 %v1360
    %v1376 = vunpack.c.l.b16 %v1361
    %v1377 = vunpack.c.l.b16 %v1362
    %v1378 = vpack.c.b16 %v1375, %v1374
    %v1379 = vpack.c.b16 %v1377, %v1376
    %v1383 = vsel %vm99, %v1358, 0
    %1385 = vmatprep.subr.bf16.mxu0 0
    %1386 = vmatpush1.bf16.msra.mxu0 0
    %1387 = vmatprep.subr.bf16.mxu0 0
    %1388 = vmatpush1.bf16.msra.mxu0 0
    %1389 = vmatprep.subr.bf16.mxu0 0
    %1390 = vmatpush1.bf16.msra.mxu0 0
    %1391 = vmatprep.subr.bf16.mxu0 0
    %1392 = vmatpush1.bf16.msra.mxu0 0
    %1393 = vmatprep.subr.bf16.mxu0 0
    %1394 = vmatpush1.bf16.msra.mxu0 0
    %1395 = vmatprep.subr.bf16.mxu0 0
    %1396 = vmatpush1.bf16.msra.mxu0 0
    %1397 = vmatprep.subr.bf16.mxu0 0
    %1398 = vmatpush1.bf16.msra.mxu0 %v1379
    %1399 = vmatprep.subr.bf16.mxu0 0
    %1400 = vmatpush1.bf16.msra.mxu0 %v1378
    %1401 = vmatprep.subr.bf16.mxu0 0
    %1402 = vmatpush2.bf16.msra.mxu0 0
    %1403 = vmatprep.subr.bf16.mxu0 0
    %1404 = vmatpush2.bf16.msra.mxu0 0
    %1405 = vmatprep.subr.bf16.mxu0 0
    %1406 = vmatpush2.bf16.msra.mxu0 0
    %1407 = vmatprep.subr.bf16.mxu0 0
    %1408 = vmatpush2.bf16.msra.mxu0 0
    %1409 = vmatprep.subr.bf16.mxu0 0
    %1410 = vmatpush2.bf16.msra.mxu0 0
    %1411 = vmatprep.subr.bf16.mxu0 0
    %1412 = vmatpush2.bf16.msra.mxu0 0
    %1413 = vmatprep.subr.bf16.mxu0 0
    %1414 = vmatpush2.bf16.msra.mxu0 0
    %1415 = vmatprep.subr.bf16.mxu0 0
    %1416 = vmatpush2.bf16.msra.mxu0 0
    %1417 = vmatprep.mubr.bf16.mxu0 0
    %1418 = vmatmul.mubr.bf16.gmra.mxu0 %v1383
    %v1419 = vpop.f32.mrf.mxu0
    %v1420 = vadd.f32 %v1368, %v1419
    %v1421 = vpop.f32.mrf.mxu0
    %v1422 = vpop.f32.mrf.mxu0
    %v1423 = vadd.f32 %v1368, %v1422
    %v1424 = vpop.f32.mrf.mxu0
    %1425 = vdwg.mxu0
    %v1426 = vmul.f32 %v1420, %v1420
    %v1427 = vmul.f32 %v1423, %v1423
    %v1428 = vmul.f32 %v1420, %v1426
    %v1429 = vmul.f32 %v1423, %v1427
    %v1430 = vmul.f32 %v1428, 0.044715
    %v1431 = vmul.f32 %v1429, 0.044715
    %v1432 = vadd.f32 %v1420, %v1430
    %v1433 = vadd.f32 %v1423, %v1431
    %v1434 = vmul.f32 %v1432, 0.7978846
    %v1435 = vmul.f32 %v1433, 0.7978846
    %v1436 = vtanh.pop %v1434
    %v1437 = vtanh.pop %v1435
    %v1438 = vadd.f32 %v1436, 1.0
    %v1439 = vadd.f32 %v1437, 1.0
    %v1440 = vmul.f32 %v1438, 0.5
    %v1441 = vmul.f32 %v1439, 0.5
    %v1442 = vmul.f32 %v1420, %v1440
    %v1443 = vmul.f32 %v1423, %v1441
    %v1444 = vpack.c.bf16 %v1443, %v1442
    %v1445 = vld [vmem:[%s11] sm:$0xf]
    %v1446 = vld [vmem:[%s11 + $0x4] sm:$0xf]
    %v1447 = vld [vmem:[%s11 + $0x8] sm:$0xf]
    %v1448 = vld [vmem:[%s11 + $0xc] sm:$0xf]
    %v1449 = vld [vmem:[%s11 + $0x10] sm:$0xf]
    %v1450 = vld [vmem:[%s11 + $0x14] sm:$0xf]
    %v1451 = vld [vmem:[%s11 + $0x18] sm:$0xf]
    %v1452 = vld [vmem:[%s11 + $0x1c] sm:$0xf]
    %v1453 = vld [vmem:[%s12] sm:$0x1]
    %v1455 = vlaneseq
    %v1456 = vshrl.u32 %v1455, 7
    %v1457 = vsub.s32 0, %v1456
    %v1458 = vrot.slane %v1453, %v1457
    %v1468 = vunpack.c.l.b16 %v1445
    %v1469 = vunpack.c.l.b16 %v1446
    %v1470 = vunpack.c.l.b16 %v1447
    %v1471 = vunpack.c.l.b16 %v1448
    %v1472 = vunpack.c.l.b16 %v1449
    %v1473 = vunpack.c.l.b16 %v1450
    %v1474 = vunpack.c.l.b16 %v1451
    %v1475 = vunpack.c.l.b16 %v1452
    %v1476 = vpack.c.b16 %v1469, %v1468
    %v1477 = vpack.c.b16 %v1471, %v1470
    %v1478 = vpack.c.b16 %v1473, %v1472
    %v1479 = vpack.c.b16 %v1475, %v1474
    %vm1484 = vcmask 523264
    %v1486 = vsel %vm1484, %v1444, 0
    %1488 = vmatprep.subr.bf16.mxu0 0
    %1489 = vmatpush1.bf16.msra.mxu0 0
    %1490 = vmatprep.subr.bf16.mxu0 0
    %1491 = vmatpush1.bf16.msra.mxu0 0
    %1492 = vmatprep.subr.bf16.mxu0 0
    %1493 = vmatpush1.bf16.msra.mxu0 0
    %1494 = vmatprep.subr.bf16.mxu0 0
    %1495 = vmatpush1.bf16.msra.mxu0 0
    %1496 = vmatprep.subr.bf16.mxu0 0
    %1497 = vmatpush1.bf16.msra.mxu0 %v1479
    %1498 = vmatprep.subr.bf16.mxu0 0
    %1499 = vmatpush1.bf16.msra.mxu0 %v1478
    %1500 = vmatprep.subr.bf16.mxu0 0
    %1501 = vmatpush1.bf16.msra.mxu0 %v1477
    %1502 = vmatprep.subr.bf16.mxu0 0
    %1503 = vmatpush1.bf16.msra.mxu0 %v1476
    %1504 = vmatprep.subr.bf16.mxu0 0
    %1505 = vmatpush2.bf16.msra.mxu0 0
    %1506 = vmatprep.subr.bf16.mxu0 0
    %1507 = vmatpush2.bf16.msra.mxu0 0
    %1508 = vmatprep.subr.bf16.mxu0 0
    %1509 = vmatpush2.bf16.msra.mxu0 0
    %1510 = vmatprep.subr.bf16.mxu0 0
    %1511 = vmatpush2.bf16.msra.mxu0 0
    %1512 = vmatprep.subr.bf16.mxu0 0
    %1513 = vmatpush2.bf16.msra.mxu0 0
    %1514 = vmatprep.subr.bf16.mxu0 0
    %1515 = vmatpush2.bf16.msra.mxu0 0
    %1516 = vmatprep.subr.bf16.mxu0 0
    %1517 = vmatpush2.bf16.msra.mxu0 0
    %1518 = vmatprep.subr.bf16.mxu0 0
    %1519 = vmatpush2.bf16.msra.mxu0 0
    %1520 = vmatprep.mubr.bf16.mxu0 0
    %1521 = vmatmul.mubr.bf16.gmra.mxu0 %v1486
    %v1522 = vpop.f32.mrf.mxu0
    %v1523 = vadd.f32 %v1458, %v1522
    %v1524 = vpop.f32.mrf.mxu0
    %v1525 = vpop.f32.mrf.mxu0
    %v1526 = vadd.f32 %v1458, %v1525
    %v1527 = vpop.f32.mrf.mxu0
    %1528 = vdwg.mxu0
    %v1529 = vadd.f32 %v1312, %v1523
    %v1530 = vadd.f32 %v1313, %v1526
    %1531 = vst.msk [vmem:[#allocation10] sm:$0xff] %vm99, %v1529
    %1532 = vst.msk [vmem:[#allocation10 + $0x8] sm:$0xff] %vm99, %v1530
    // Predicated region
    $region70: #{tpu_custom_call.1} parent=1 // pred_check
      _
    $region71: #{tpu_custom_call.1} parent=1 // pred_check_branch
      %1534 = sbr.rel (0) target = $region73
    $region72: #{tpu_custom_call.1} parent=1 // pred_region
      %s1536 = ssub.s32 256, 256
      %1537 = vsyncadd [#allocation4], %s1536
      %s1538 = sshll.u32 [#allocation10], 4
      %s1539 = int_to_ptr.vmem [resolvable:$true] %s1538
      %1544 = dma.vmem_to_hbm [thread:$0]  %s1539, 256, %s13, [#allocation4], 128, 128, 8
    $region73: #{tpu_custom_call.1} parent=1 // pred_fallthru
      _
    // Predicated region
    $region74: #{tpu_custom_call.1} parent=1 // pred_check
      _
    $region75: #{tpu_custom_call.1} parent=1 // pred_check_branch
      %1546 = sbr.rel (0) target = $region77
    $region76: #{tpu_custom_call.1} parent=1 // pred_region
      %1547 = dma.done [#allocation4], 256
    $region77: #{tpu_custom_call.1} parent=1 // pred_fallthru
      _
    %1548 = vsyncpa [#allocation3], 1
    %1549 = vsyncpa [#allocation6], 1
    %1550 = vsyncpa [#allocation9], 1
    %1551 = vsyncpa [#allocation4], 1

// kernel: tpu_custom_call.1
$region0: #{tpu_custom_call.1}
  #allocation0 [shape = 'u32[]', space=smem, size = 0x4, offset = 0x4, fixed_abs, tag = 'smem constant byte address 0x4 - core index']
  #allocation1 [shape = 'u32[144,128]{1,0:T(1,128)}', space=vmem, size = 0x12000, scoped, tag = 'internal scratch']
  %s0 = inlined_call_operand.vmem [shape: f32[2,8,32], index: 0, kind: input, shape index: {}]
  %s1 = inlined_call_operand.vmem [shape: f32[1,32], index: 1, kind: input, shape index: {}]
  %s2 = inlined_call_operand.vmem [shape: f32[1,32], index: 2, kind: input, shape index: {}]
  %s3 = inlined_call_operand.vmem [shape: bf16[32,96], index: 3, kind: input, shape index: {}]
  %s4 = inlined_call_operand.vmem [shape: f32[1,96], index: 4, kind: input, shape index: {}]
  %s5 = inlined_call_operand.vmem [shape: bf16[32,32], index: 5, kind: input, shape index: {}]
  %s6 = inlined_call_operand.vmem [shape: f32[1,32], index: 6, kind: input, shape index: {}]
  %s7 = inlined_call_operand.hbm [shape: f32[1,32], index: 7, kind: input, shape index: {}]
  %s8 = inlined_call_operand.hbm [shape: f32[1,32], index: 8, kind: input, shape index: {}]
  %s9 = inlined_call_operand.hbm [shape: bf16[32,64], index: 9, kind: input, shape index: {}]
  %s10 = inlined_call_operand.hbm [shape: f32[1,64], index: 10, kind: input, shape index: {}]
  %s11 = inlined_call_operand.vmem [shape: bf16[64,32], index: 11, kind: input, shape index: {}]
  %s12 = inlined_call_operand.vmem [shape: f32[1,32], index: 12, kind: input, shape index: {}]
  %s13 = inlined_call_operand.hbm [shape: f32[2,8,32], index: 13, kind: output, shape index: {}]
  %s14 = sld [smem:[#allocation0]]
  $region78: #{tpu_custom_call.1} parent=0
    _
  %s16 = ssub.s32 1, %s14
  %s17 = scalar_select 0, %s16, %s14
  $region1: #{tpu_custom_call.1} parent=0
    #allocation2 [shape = 'u8[512]{0}', space=vmem, size = 0x400, scoped, tag = 'input window, operand 7, single buffered']
    #allocation3 [shape = 's32[1]{0}', space=sflag, size = 0x4, scoped, tag = 'scoped memory for tpu_custom_call.1']
    #allocation4 [shape = 's32[1]{0}', space=sflag, size = 0x4, scoped, tag = 'scoped memory for tpu_custom_call.1']
    #allocation5 [shape = 'u8[512]{0}', space=vmem, size = 0x400, scoped, tag = 'input window, operand 8, single buffered']
    #allocation6 [shape = 's32[1]{0}', space=sflag, size = 0x4, scoped, tag = 'scoped memory for tpu_custom_call.1']
    #allocation7 [shape = 'u8[8192]{0}', space=vmem, size = 0x2000, scoped, tag = 'input window, operand 9, single buffered']
    #allocation8 [shape = 'u8[512]{0}', space=vmem, size = 0x400, scoped, tag = 'input window, operand 10, single buffered']
    #allocation9 [shape = 's32[1]{0}', space=sflag, size = 0x4, scoped, tag = 'scoped memory for tpu_custom_call.1']
    #allocation10 [shape = 'u8[8192]{0}', space=vmem, size = 0x2000, scoped, tag = 'output window, operand 0, single buffered']
    %18 = vsyncpa [#allocation3], 0
    %19 = vsyncpa [#allocation6], 0
    %20 = vsyncpa [#allocation9], 0
    %21 = vsyncpa [#allocation4], 0
    // Predicated region
    $region2: #{tpu_custom_call.1} parent=1 // pred_check
      _
    $region3: #{tpu_custom_call.1} parent=1 // pred_check_branch
      %23 = sbr.rel (0) target = $region5
    $region4: #{tpu_custom_call.1} parent=1 // pred_region
      _
    $region5: #{tpu_custom_call.1} parent=1 // pred_fallthru
      _
    // Predicated region
    $region6: #{tpu_custom_call.1} parent=1 // pred_check
      _
    $region7: #{tpu_custom_call.1} parent=1 // pred_check_branch
      %25 = sbr.rel (0) target = $region9
    $region8: #{tpu_custom_call.1} parent=1 // pred_region
      _
    $region9: #{tpu_custom_call.1} parent=1 // pred_fallthru
      _
    // Predicated region
    $region10: #{tpu_custom_call.1} parent=1 // pred_check
      _
    $region11: #{tpu_custom_call.1} parent=1 // pred_check_branch
      %27 = sbr.rel (0) target = $region13
    $region12: #{tpu_custom_call.1} parent=1 // pred_region
      _
    $region13: #{tpu_custom_call.1} parent=1 // pred_fallthru
      _
    // Predicated region
    $region14: #{tpu_custom_call.1} parent=1 // pred_check
      _
    $region15: #{tpu_custom_call.1} parent=1 // pred_check_branch
      %29 = sbr.rel (0) target = $region17
    $region16: #{tpu_custom_call.1} parent=1 // pred_region
      _
    $region17: #{tpu_custom_call.1} parent=1 // pred_fallthru
      _
    // Predicated region
    $region18: #{tpu_custom_call.1} parent=1 // pred_check
      _
    $region19: #{tpu_custom_call.1} parent=1 // pred_check_branch
      %31 = sbr.rel (0) target = $region21
    $region20: #{tpu_custom_call.1} parent=1 // pred_region
      _
    $region21: #{tpu_custom_call.1} parent=1 // pred_fallthru
      _
    // Predicated region
    $region22: #{tpu_custom_call.1} parent=1 // pred_check
      _
    $region23: #{tpu_custom_call.1} parent=1 // pred_check_branch
      %33 = sbr.rel (0) target = $region25
    $region24: #{tpu_custom_call.1} parent=1 // pred_region
      _
    $region25: #{tpu_custom_call.1} parent=1 // pred_fallthru
      _
    // Predicated region
    $region26: #{tpu_custom_call.1} parent=1 // pred_check
      _
    $region27: #{tpu_custom_call.1} parent=1 // pred_check_branch
      %35 = sbr.rel (0) target = $region29
    $region28: #{tpu_custom_call.1} parent=1 // pred_region
      _
    $region29: #{tpu_custom_call.1} parent=1 // pred_fallthru
      _
    // Predicated region
    $region30: #{tpu_custom_call.1} parent=1 // pred_check
      _
    $region31: #{tpu_custom_call.1} parent=1 // pred_check_branch
      %37 = sbr.rel (0) target = $region33
    $region32: #{tpu_custom_call.1} parent=1 // pred_region
      %s39 = ssub.s32 16, 16
      %40 = vsyncadd [#allocation3], %s39
      %s42 = sshll.u32 [#allocation2], 4
      %s43 = int_to_ptr.vmem [resolvable:$true] %s42
      %45 = dma.hbm_to_vmem [thread:$0]  %s7, 16, %s43, [#allocation3]
    $region33: #{tpu_custom_call.1} parent=1 // pred_fallthru
      _
    // Predicated region
    $region34: #{tpu_custom_call.1} parent=1 // pred_check
      _
    $region35: #{tpu_custom_call.1} parent=1 // pred_check_branch
      %47 = sbr.rel (0) target = $region37
    $region36: #{tpu_custom_call.1} parent=1 // pred_region
      %s49 = ssub.s32 16, 16
      %50 = vsyncadd [#allocation6], %s49
      %s52 = sshll.u32 [#allocation5], 4
      %s53 = int_to_ptr.vmem [resolvable:$true] %s52
      %55 = dma.hbm_to_vmem [thread:$0]  %s8, 16, %s53, [#allocation6]
    $region37: #{tpu_custom_call.1} parent=1 // pred_fallthru
      _
    // Predicated region
    $region38: #{tpu_custom_call.1} parent=1 // pred_check
      _
    $region39: #{tpu_custom_call.1} parent=1 // pred_check_branch
      %57 = sbr.rel (0) target = $region41
    $region40: #{tpu_custom_call.1} parent=1 // pred_region
      %s59 = ssub.s32 256, 256
      %60 = vsyncadd [#allocation6], %s59
      %s61 = sshll.u32 [#allocation7], 4
      %s62 = int_to_ptr.vmem [resolvable:$true] %s61
      %67 = dma.hbm_to_vmem [thread:$0]  %s9, 256, %s62, [#allocation6], 64, 64, 4
    $region41: #{tpu_custom_call.1} parent=1 // pred_fallthru
      _
    // Predicated region
    $region42: #{tpu_custom_call.1} parent=1 // pred_check
      _
    $region43: #{tpu_custom_call.1} parent=1 // pred_check_branch
      %69 = sbr.rel (0) target = $region45
    $region44: #{tpu_custom_call.1} parent=1 // pred_region
      %s71 = ssub.s32 16, 16
      %72 = vsyncadd [#allocation9], %s71
      %s74 = sshll.u32 [#allocation8], 4
      %s75 = int_to_ptr.vmem [resolvable:$true] %s74
      %77 = dma.hbm_to_vmem [thread:$0]  %s10, 16, %s75, [#allocation9]
    $region45: #{tpu_custom_call.1} parent=1 // pred_fallthru
      _
    // Predicated region
    $region46: #{tpu_custom_call.1} parent=1 // pred_check
      _
    $region47: #{tpu_custom_call.1} parent=1 // pred_check_branch
      %79 = sbr.rel (0) target = $region49
    $region48: #{tpu_custom_call.1} parent=1 // pred_region
      _
    $region49: #{tpu_custom_call.1} parent=1 // pred_fallthru
      _
    // Predicated region
    $region50: #{tpu_custom_call.1} parent=1 // pred_check
      _
    $region51: #{tpu_custom_call.1} parent=1 // pred_check_branch
      %81 = sbr.rel (0) target = $region53
    $region52: #{tpu_custom_call.1} parent=1 // pred_region
      _
    $region53: #{tpu_custom_call.1} parent=1 // pred_fallthru
      _
    // Predicated region
    $region54: #{tpu_custom_call.1} parent=1 // pred_check
      _
    $region55: #{tpu_custom_call.1} parent=1 // pred_check_branch
      %83 = sbr.rel (0) target = $region57
    $region56: #{tpu_custom_call.1} parent=1 // pred_region
      %84 = dma.done [#allocation3], 16
    $region57: #{tpu_custom_call.1} parent=1 // pred_fallthru
      _
    // Predicated region
    $region58: #{tpu_custom_call.1} parent=1 // pred_check
      _
    $region59: #{tpu_custom_call.1} parent=1 // pred_check_branch
      %86 = sbr.rel (0) target = $region61
    $region60: #{tpu_custom_call.1} parent=1 // pred_region
      %87 = dma.done [#allocation6], 16
    $region61: #{tpu_custom_call.1} parent=1 // pred_fallthru
      _
    // Predicated region
    $region62: #{tpu_custom_call.1} parent=1 // pred_check
      _
    $region63: #{tpu_custom_call.1} parent=1 // pred_check_branch
      %89 = sbr.rel (0) target = $region65
    $region64: #{tpu_custom_call.1} parent=1 // pred_region
      %90 = dma.done [#allocation6], 256
    $region65: #{tpu_custom_call.1} parent=1 // pred_fallthru
      _
    // Predicated region
    $region66: #{tpu_custom_call.1} parent=1 // pred_check
      _
    $region67: #{tpu_custom_call.1} parent=1 // pred_check_branch
      %92 = sbr.rel (0) target = $region69
    $region68: #{tpu_custom_call.1} parent=1 // pred_region
      %93 = dma.done [#allocation9], 16
    $region69: #{tpu_custom_call.1} parent=1 // pred_fallthru
      _
    %v95 = vld [vmem:[%s0] sm:$0xff]
    %v96 = vld [vmem:[%s0 + $0x8] sm:$0xff]
    %v97 = vld [vmem:[%s1] sm:$0x1]
    %v98 = vld [vmem:[%s2] sm:$0x1]
    %vm99 = vcmask 261120
    %v100 = vsel %vm99, %v95, 0.0
    %101 = vadd.xlane.f32.xlu0 %v100
    %v102 = vpop.xlane.xlu0 %101
    %v103 = vsel %vm99, %v96, 0.0
    %104 = vadd.xlane.f32.xlu0 %v103
    %v105 = vpop.xlane.xlu0 %104
    %v106 = vrcp.pop 32.0
    %v107 = vmul.f32 %v102, %v106
    %v108 = vmul.f32 %v105, %v106
    %v109 = vsub.f32 %v95, %v107
    %v110 = vsub.f32 %v96, %v108
    %v111 = vmul.f32 %v109, %v109
    %v112 = vmul.f32 %v110, %v110
    %v113 = vsel %vm99, %v111, 0.0
    %114 = vadd.xlane.f32.xlu0 %v113
    %v115 = vpop.xlane.xlu0 %114
    %v116 = vsel %vm99, %v112, 0.0
    %117 = vadd.xlane.f32.xlu0 %v116
    %v118 = vpop.xlane.xlu0 %117
    %v119 = vmul.f32 %v115, %v106
    %v120 = vmul.f32 %v118, %v106
    %v121 = vadd.f32 %v119, 1e-05
    %v122 = vadd.f32 %v120, 1e-05
    %v123 = vrsqrt.pop %v121
    %v124 = vrsqrt.pop %v122
    %v125 = vmul.f32 %v109, %v123
    %v126 = vmul.f32 %v110, %v124
    %v128 = vlaneseq
    %v129 = vshrl.u32 %v128, 7
    %v130 = vsub.s32 0, %v129
    %v131 = vrot.slane %v97, %v130
    %v133 = vmul.f32 %v125, %v131
    %v134 = vmul.f32 %v126, %v131
    %v136 = vlaneseq
    %v137 = vshrl.u32 %v136, 7
    %v138 = vsub.s32 0, %v137
    %v139 = vrot.slane %v98, %v138
    %v141 = vadd.f32 %v133, %v139
    %v142 = vadd.f32 %v134, %v139
    %v143 = vpack.c.bf16 %v142, %v141
    %v144 = vld [vmem:[%s3] sm:$0xf]
    %v145 = vld [vmem:[%s3 + $0x4] sm:$0xf]
    %v146 = vld [vmem:[%s3 + $0x8] sm:$0xf]
    %v147 = vld [vmem:[%s3 + $0xc] sm:$0xf]
    %v148 = vld [vmem:[%s4] sm:$0x1]
    %v150 = vlaneseq
    %v151 = vshrl.u32 %v150, 7
    %v152 = vsub.s32 0, %v151
    %v153 = vrot.slane %v148, %v152
    %v159 = vunpack.c.l.b16 %v144
    %v160 = vunpack.c.l.b16 %v145
    %v161 = vunpack.c.l.b16 %v146
    %v162 = vunpack.c.l.b16 %v147
    %v163 = vpack.c.b16 %v160, %v159
    %v164 = vpack.c.b16 %v162, %v161
    %v168 = vsel %vm99, %v143, 0
    %170 = vmatprep.subr.bf16.mxu0 0
    %171 = vmatpush1.bf16.msra.mxu0 0
    %172 = vmatprep.subr.bf16.mxu0 0
    %173 = vmatpush1.bf16.msra.mxu0 0
    %174 = vmatprep.subr.bf16.mxu0 0
    %175 = vmatpush1.bf16.msra.mxu0 0
    %176 = vmatprep.subr.bf16.mxu0 0
    %177 = vmatpush1.bf16.msra.mxu0 0
    %178 = vmatprep.subr.bf16.mxu0 0
    %179 = vmatpush1.bf16.msra.mxu0 0
    %180 = vmatprep.subr.bf16.mxu0 0
    %181 = vmatpush1.bf16.msra.mxu0 0
    %182 = vmatprep.subr.bf16.mxu0 0
    %183 = vmatpush1.bf16.msra.mxu0 %v164
    %184 = vmatprep.subr.bf16.mxu0 0
    %185 = vmatpush1.bf16.msra.mxu0 %v163
    %186 = vmatprep.subr.bf16.mxu0 0
    %187 = vmatpush2.bf16.msra.mxu0 0
    %188 = vmatprep.subr.bf16.mxu0 0
    %189 = vmatpush2.bf16.msra.mxu0 0
    %190 = vmatprep.subr.bf16.mxu0 0
    %191 = vmatpush2.bf16.msra.mxu0 0
    %192 = vmatprep.subr.bf16.mxu0 0
    %193 = vmatpush2.bf16.msra.mxu0 0
    %194 = vmatprep.subr.bf16.mxu0 0
    %195 = vmatpush2.bf16.msra.mxu0 0
    %196 = vmatprep.subr.bf16.mxu0 0
    %197 = vmatpush2.bf16.msra.mxu0 0
    %198 = vmatprep.subr.bf16.mxu0 0
    %199 = vmatpush2.bf16.msra.mxu0 0
    %200 = vmatprep.subr.bf16.mxu0 0
    %201 = vmatpush2.bf16.msra.mxu0 0
    %202 = vmatprep.mubr.bf16.mxu0 0
    %203 = vmatmul.mubr.bf16.gmra.mxu0 %v168
    %v204 = vpop.f32.mrf.mxu0
    %v205 = vadd.f32 %v153, %v204
    %v206 = vpop.f32.mrf.mxu0
    %v207 = vpop.f32.mrf.mxu0
    %v208 = vadd.f32 %v153, %v207
    %v209 = vpop.f32.mrf.mxu0
    %210 = vdwg.mxu0
    %v211 = vpack.c.bf16 %v208, %v205
    %v213 = vunpack.c.l.b16 %v211
    %v214 = vunpack.c.h.b16 %v211
    %v215 = vpack.c.b16 %v213, %v213
    %v216 = vpack.c.b16 %v214, %v214
    %217 = vrot.lane.b32.xlu0 %v215, 96
    %v218 = vpop.permute.xlu0 %217
    %vm219 = vcmask 64512
    %v221 = vsel %vm219, %v215, 0
    %v224 = vsel %vm219, %v218, 0
    %226 = vmatprep.subr.bf16.mxu0 0
    %227 = vmatpush1.bf16.xpose.msra.mxu0 0
    %228 = vmatprep.subr.bf16.mxu0 0
    %229 = vmatpush1.bf16.xpose.msra.mxu0 0
    %230 = vmatprep.subr.bf16.mxu0 0
    %231 = vmatpush1.bf16.xpose.msra.mxu0 0
    %232 = vmatprep.subr.bf16.mxu0 0
    %233 = vmatpush1.bf16.xpose.msra.mxu0 0
    %234 = vmatprep.subr.bf16.mxu0 0
    %235 = vmatpush1.bf16.xpose.msra.mxu0 0
    %236 = vmatprep.subr.bf16.mxu0 0
    %237 = vmatpush1.bf16.xpose.msra.mxu0 0
    %238 = vmatprep.subr.bf16.mxu0 0
    %239 = vmatpush1.bf16.xpose.msra.mxu0 0
    %240 = vmatprep.subr.bf16.mxu0 0
    %241 = vmatpush1.bf16.xpose.msra.mxu0 %v224
    %242 = vmatprep.subr.bf16.mxu0 0
    %243 = vmatpush2.bf16.xpose.msra.mxu0 0
    %244 = vmatprep.subr.bf16.mxu0 0
    %245 = vmatpush2.bf16.xpose.msra.mxu0 0
    %246 = vmatprep.subr.bf16.mxu0 0
    %247 = vmatpush2.bf16.xpose.msra.mxu0 0
    %248 = vmatprep.subr.bf16.mxu0 0
    %249 = vmatpush2.bf16.xpose.msra.mxu0 0
    %250 = vmatprep.subr.bf16.mxu0 0
    %251 = vmatpush2.bf16.xpose.msra.mxu0 0
    %252 = vmatprep.subr.bf16.mxu0 0
    %253 = vmatpush2.bf16.xpose.msra.mxu0 0
    %254 = vmatprep.subr.bf16.mxu0 0
    %255 = vmatpush2.bf16.xpose.msra.mxu0 0
    %256 = vmatprep.subr.bf16.mxu0 0
    %257 = vmatpush2.bf16.xpose.msra.mxu0 0
    %258 = vmatprep.mubr.bf16.mxu0 0
    %259 = vmatmul.mubr.bf16.gmra.mxu0 %v221
    %v260 = vpop.f32.mrf.mxu0
    %v261 = vadd.f32 0.0, %v260
    %v262 = vpop.f32.mrf.mxu0
    %v263 = vpop.f32.mrf.mxu0
    %v264 = vpop.f32.mrf.mxu0
    %265 = vdwg.mxu0
    %266 = vrot.lane.b32.xlu0 %v216, 96
    %v267 = vpop.permute.xlu0 %266
    %v269 = vsel %vm219, %v216, 0
    %v272 = vsel %vm219, %v267, 0
    %274 = vmatprep.subr.bf16.mxu0 0
    %275 = vmatpush1.bf16.xpose.msra.mxu0 0
    %276 = vmatprep.subr.bf16.mxu0 0
    %277 = vmatpush1.bf16.xpose.msra.mxu0 0
    %278 = vmatprep.subr.bf16.mxu0 0
    %279 = vmatpush1.bf16.xpose.msra.mxu0 0
    %280 = vmatprep.subr.bf16.mxu0 0
    %281 = vmatpush1.bf16.xpose.msra.mxu0 0
    %282 = vmatprep.subr.bf16.mxu0 0
    %283 = vmatpush1.bf16.xpose.msra.mxu0 0
    %284 = vmatprep.subr.bf16.mxu0 0
    %285 = vmatpush1.bf16.xpose.msra.mxu0 0
    %286 = vmatprep.subr.bf16.mxu0 0
    %287 = vmatpush1.bf16.xpose.msra.mxu0 0
    %288 = vmatprep.subr.bf16.mxu0 0
    %289 = vmatpush1.bf16.xpose.msra.mxu0 %v272
    %290 = vmatprep.subr.bf16.mxu0 0
    %291 = vmatpush2.bf16.xpose.msra.mxu0 0
    %292 = vmatprep.subr.bf16.mxu0 0
    %293 = vmatpush2.bf16.xpose.msra.mxu0 0
    %294 = vmatprep.subr.bf16.mxu0 0
    %295 = vmatpush2.bf16.xpose.msra.mxu0 0
    %296 = vmatprep.subr.bf16.mxu0 0
    %297 = vmatpush2.bf16.xpose.msra.mxu0 0
    %298 = vmatprep.subr.bf16.mxu0 0
    %299 = vmatpush2.bf16.xpose.msra.mxu0 0
    %300 = vmatprep.subr.bf16.mxu0 0
    %301 = vmatpush2.bf16.xpose.msra.mxu0 0
    %302 = vmatprep.subr.bf16.mxu0 0
    %303 = vmatpush2.bf16.xpose.msra.mxu0 0
    %304 = vmatprep.subr.bf16.mxu0 0
    %305 = vmatpush2.bf16.xpose.msra.mxu0 0
    %306 = vmatprep.mubr.bf16.mxu0 0
    %307 = vmatmul.mubr.bf16.gmra.mxu0 %v269
    %v308 = vpop.f32.mrf.mxu0
    %v309 = vadd.f32 0.0, %v308
    %v310 = vpop.f32.mrf.mxu0
    %v311 = vpop.f32.mrf.mxu0
    %v312 = vpop.f32.mrf.mxu0
    %313 = vdwg.mxu0
    %v314 = vmul.f32 %v261, 0.35355338
    %v315 = vmul.f32 %v309, 0.35355338
    %v316 = vsel %vm219, %v314, -inf
    %317 = vmax.xlane.f32.xlu0 %v316
    %v318 = vpop.xlane.xlu0 %317
    %v319 = vsel %vm219, %v315, -inf
    %320 = vmax.xlane.f32.xlu0 %v319
    %v321 = vpop.xlane.xlu0 %320
    %v322 = vsub.f32 %v314, %v318
    %v323 = vsub.f32 %v315, %v321
    %v324 = vmul.f32 %v322, 1.442695
    %v325 = vpow.pop %v324
    %v326 = vmul.f32 %v323, 1.442695
    %v327 = vpow.pop %v326
    %v328 = vsel %vm219, %v325, 0.0
    %329 = vadd.xlane.f32.xlu0 %v328
    %v330 = vpop.xlane.xlu0 %329
    %v331 = vsel %vm219, %v327, 0.0
    %332 = vadd.xlane.f32.xlu0 %v331
    %v333 = vpop.xlane.xlu0 %332
    %v334 = vrcp.pop %v330
    %v335 = vrcp.pop %v333
    %v336 = vmul.f32 %v325, %v334
    %v337 = vmul.f32 %v327, %v335
    %v338 = vpack.c.bf16 %v336, %v336
    %v339 = vpack.c.bf16 %v337, %v337
    %340 = vrot.lane.b32.xlu0 %v215, 64
    %v341 = vpop.permute.xlu0 %340
    %v343 = vsel %vm219, %v338, 0
    %vm345 = vcmask 1043456
    %v347 = vsel %vm345, %v341, 0
    %349 = vmatprep.subr.bf16.mxu0 0
    %350 = vmatpush1.bf16.msra.mxu0 0
    %351 = vmatprep.subr.bf16.mxu0 0
    %352 = vmatpush1.bf16.msra.mxu0 0
    %353 = vmatprep.subr.bf16.mxu0 0
    %354 = vmatpush1.bf16.msra.mxu0 0
    %355 = vmatprep.subr.bf16.mxu0 0
    %356 = vmatpush1.bf16.msra.mxu0 0
    %357 = vmatprep.subr.bf16.mxu0 0
    %358 = vmatpush1.bf16.msra.mxu0 0
    %359 = vmatprep.subr.bf16.mxu0 0
    %360 = vmatpush1.bf16.msra.mxu0 0
    %361 = vmatprep.subr.bf16.mxu0 0
    %362 = vmatpush1.bf16.msra.mxu0 0
    %363 = vmatprep.subr.bf16.mxu0 0
    %364 = vmatpush1.bf16.msra.mxu0 %v347
    %365 = vmatprep.subr.bf16.mxu0 0
    %366 = vmatpush2.bf16.msra.mxu0 0
    %367 = vmatprep.subr.bf16.mxu0 0
    %368 = vmatpush2.bf16.msra.mxu0 0
    %369 = vmatprep.subr.bf16.mxu0 0
    %370 = vmatpush2.bf16.msra.mxu0 0
    %371 = vmatprep.subr.bf16.mxu0 0
    %372 = vmatpush2.bf16.msra.mxu0 0
    %373 = vmatprep.subr.bf16.mxu0 0
    %374 = vmatpush2.bf16.msra.mxu0 0
    %375 = vmatprep.subr.bf16.mxu0 0
    %376 = vmatpush2.bf16.msra.mxu0 0
    %377 = vmatprep.subr.bf16.mxu0 0
    %378 = vmatpush2.bf16.msra.mxu0 0
    %379 = vmatprep.subr.bf16.mxu0 0
    %380 = vmatpush2.bf16.msra.mxu0 0
    %381 = vmatprep.mubr.bf16.mxu0 0
    %382 = vmatmul.mubr.bf16.gmra.mxu0 %v343
    %v383 = vpop.f32.mrf.mxu0
    %v384 = vadd.f32 0.0, %v383
    %v385 = vpop.f32.mrf.mxu0
    %v386 = vpop.f32.mrf.mxu0
    %v387 = vpop.f32.mrf.mxu0
    %388 = vdwg.mxu0
    %389 = vrot.lane.b32.xlu0 %v216, 64
    %v390 = vpop.permute.xlu0 %389
    %v392 = vsel %vm219, %v339, 0
    %v395 = vsel %vm345, %v390, 0
    %397 = vmatprep.subr.bf16.mxu0 0
    %398 = vmatpush1.bf16.msra.mxu0 0
    %399 = vmatprep.subr.bf16.mxu0 0
    %400 = vmatpush1.bf16.msra.mxu0 0
    %401 = vmatprep.subr.bf16.mxu0 0
    %402 = vmatpush1.bf16.msra.mxu0 0
    %403 = vmatprep.subr.bf16.mxu0 0
    %404 = vmatpush1.bf16.msra.mxu0 0
    %405 = vmatprep.subr.bf16.mxu0 0
    %406 = vmatpush1.bf16.msra.mxu0 0
    %407 = vmatprep.subr.bf16.mxu0 0
    %408 = vmatpush1.bf16.msra.mxu0 0
    %409 = vmatprep.subr.bf16.mxu0 0
    %410 = vmatpush1.bf16.msra.mxu0 0
    %411 = vmatprep.subr.bf16.mxu0 0
    %412 = vmatpush1.bf16.msra.mxu0 %v395
    %413 = vmatprep.subr.bf16.mxu0 0
    %414 = vmatpush2.bf16.msra.mxu0 0
    %415 = vmatprep.subr.bf16.mxu0 0
    %416 = vmatpush2.bf16.msra.mxu0 0
    %417 = vmatprep.subr.bf16.mxu0 0
    %418 = vmatpush2.bf16.msra.mxu0 0
    %419 = vmatprep.subr.bf16.mxu0 0
    %420 = vmatpush2.bf16.msra.mxu0 0
    %421 = vmatprep.subr.bf16.mxu0 0
    %422 = vmatpush2.bf16.msra.mxu0 0
    %423 = vmatprep.subr.bf16.mxu0 0
    %424 = vmatpush2.bf16.msra.mxu0 0
    %425 = vmatprep.subr.bf16.mxu0 0
    %426 = vmatpush2.bf16.msra.mxu0 0
    %427 = vmatprep.subr.bf16.mxu0 0
    %428 = vmatpush2.bf16.msra.mxu0 0
    %429 = vmatprep.mubr.bf16.mxu0 0
    %430 = vmatmul.mubr.bf16.gmra.mxu0 %v392
    %v431 = vpop.f32.mrf.mxu0
    %v432 = vadd.f32 0.0, %v431
    %v433 = vpop.f32.mrf.mxu0
    %v434 = vpop.f32.mrf.mxu0
    %v435 = vpop.f32.mrf.mxu0
    %436 = vdwg.mxu0
    %v437 = vpack.c.bf16 %v432, %v384
    %v438 = vld [vmem:[%s5] sm:$0xf]
    %439 = vrot.lane.b32.xlu0 %v215, 120
    %v440 = vpop.permute.xlu0 %439
    %441 = vrot.lane.b32.xlu0 %v215, 88
    %v442 = vpop.permute.xlu0 %441
    %v444 = vsel %vm219, %v440, 0
    %v447 = vsel %vm219, %v442, 0
    %449 = vmatprep.subr.bf16.mxu0 0
    %450 = vmatpush1.bf16.xpose.msra.mxu0 0
    %451 = vmatprep.subr.bf16.mxu0 0
    %452 = vmatpush1.bf16.xpose.msra.mxu0 0
    %453 = vmatprep.subr.bf16.mxu0 0
    %454 = vmatpush1.bf16.xpose.msra.mxu0 0
    %455 = vmatprep.subr.bf16.mxu0 0
    %456 = vmatpush1.bf16.xpose.msra.mxu0 0
    %457 = vmatprep.subr.bf16.mxu0 0
    %458 = vmatpush1.bf16.xpose.msra.mxu0 0
    %459 = vmatprep.subr.bf16.mxu0 0
    %460 = vmatpush1.bf16.xpose.msra.mxu0 0
    %461 = vmatprep.subr.bf16.mxu0 0
    %462 = vmatpush1.bf16.xpose.msra.mxu0 0
    %463 = vmatprep.subr.bf16.mxu0 0
    %464 = vmatpush1.bf16.xpose.msra.mxu0 %v447
    %465 = vmatprep.subr.bf16.mxu0 0
    %466 = vmatpush2.bf16.xpose.msra.mxu0 0
    %467 = vmatprep.subr.bf16.mxu0 0
    %468 = vmatpush2.bf16.xpose.msra.mxu0 0
    %469 = vmatprep.subr.bf16.mxu0 0
    %470 = vmatpush2.bf16.xpose.msra.mxu0 0
    %471 = vmatprep.subr.bf16.mxu0 0
    %472 = vmatpush2.bf16.xpose.msra.mxu0 0
    %473 = vmatprep.subr.bf16.mxu0 0
    %474 = vmatpush2.bf16.xpose.msra.mxu0 0
    %475 = vmatprep.subr.bf16.mxu0 0
    %476 = vmatpush2.bf16.xpose.msra.mxu0 0
    %477 = vmatprep.subr.bf16.mxu0 0
    %478 = vmatpush2.bf16.xpose.msra.mxu0 0
    %479 = vmatprep.subr.bf16.mxu0 0
    %480 = vmatpush2.bf16.xpose.msra.mxu0 0
    %481 = vmatprep.mubr.bf16.mxu0 0
    %482 = vmatmul.mubr.bf16.gmra.mxu0 %v444
    %v483 = vpop.f32.mrf.mxu0
    %v484 = vadd.f32 0.0, %v483
    %v485 = vpop.f32.mrf.mxu0
    %v486 = vpop.f32.mrf.mxu0
    %v487 = vpop.f32.mrf.mxu0
    %488 = vdwg.mxu0
    %489 = vrot.lane.b32.xlu0 %v216, 120
    %v490 = vpop.permute.xlu0 %489
    %491 = vrot.lane.b32.xlu0 %v216, 88
    %v492 = vpop.permute.xlu0 %491
    %v494 = vsel %vm219, %v490, 0
    %v497 = vsel %vm219, %v492, 0
    %499 = vmatprep.subr.bf16.mxu0 0
    %500 = vmatpush1.bf16.xpose.msra.mxu0 0
    %501 = vmatprep.subr.bf16.mxu0 0
    %502 = vmatpush1.bf16.xpose.msra.mxu0 0
    %503 = vmatprep.subr.bf16.mxu0 0
    %504 = vmatpush1.bf16.xpose.msra.mxu0 0
    %505 = vmatprep.subr.bf16.mxu0 0
    %506 = vmatpush1.bf16.xpose.msra.mxu0 0
    %507 = vmatprep.subr.bf16.mxu0 0
    %508 = vmatpush1.bf16.xpose.msra.mxu0 0
    %509 = vmatprep.subr.bf16.mxu0 0
    %510 = vmatpush1.bf16.xpose.msra.mxu0 0
    %511 = vmatprep.subr.bf16.mxu0 0
    %512 = vmatpush1.bf16.xpose.msra.mxu0 0
    %513 = vmatprep.subr.bf16.mxu0 0
    %514 = vmatpush1.bf16.xpose.msra.mxu0 %v497
    %515 = vmatprep.subr.bf16.mxu0 0
    %516 = vmatpush2.bf16.xpose.msra.mxu0 0
    %517 = vmatprep.subr.bf16.mxu0 0
    %518 = vmatpush2.bf16.xpose.msra.mxu0 0
    %519 = vmatprep.subr.bf16.mxu0 0
    %520 = vmatpush2.bf16.xpose.msra.mxu0 0
    %521 = vmatprep.subr.bf16.mxu0 0
    %522 = vmatpush2.bf16.xpose.msra.mxu0 0
    %523 = vmatprep.subr.bf16.mxu0 0
    %524 = vmatpush2.bf16.xpose.msra.mxu0 0
    %525 = vmatprep.subr.bf16.mxu0 0
    %526 = vmatpush2.bf16.xpose.msra.mxu0 0
    %527 = vmatprep.subr.bf16.mxu0 0
    %528 = vmatpush2.bf16.xpose.msra.mxu0 0
    %529 = vmatprep.subr.bf16.mxu0 0
    %530 = vmatpush2.bf16.xpose.msra.mxu0 0
    %531 = vmatprep.mubr.bf16.mxu0 0
    %532 = vmatmul.mubr.bf16.gmra.mxu0 %v494
    %v533 = vpop.f32.mrf.mxu0
    %v534 = vadd.f32 0.0, %v533
    %v535 = vpop.f32.mrf.mxu0
    %v536 = vpop.f32.mrf.mxu0
    %v537 = vpop.f32.mrf.mxu0
    %538 = vdwg.mxu0
    %v539 = vmul.f32 %v484, 0.35355338
    %v540 = vmul.f32 %v534, 0.35355338
    %v541 = vsel %vm219, %v539, -inf
    %542 = vmax.xlane.f32.xlu0 %v541
    %v543 = vpop.xlane.xlu0 %542
    %v544 = vsel %vm219, %v540, -inf
    %545 = vmax.xlane.f32.xlu0 %v544
    %v546 = vpop.xlane.xlu0 %545
    %v547 = vsub.f32 %v539, %v543
    %v548 = vsub.f32 %v540, %v546
    %v549 = vmul.f32 %v547, 1.442695
    %v550 = vpow.pop %v549
    %v551 = vmul.f32 %v548, 1.442695
    %v552 = vpow.pop %v551
    %v553 = vsel %vm219, %v550, 0.0
    %554 = vadd.xlane.f32.xlu0 %v553
    %v555 = vpop.xlane.xlu0 %554
    %v556 = vsel %vm219, %v552, 0.0
    %557 = vadd.xlane.f32.xlu0 %v556
    %v558 = vpop.xlane.xlu0 %557
    %v559 = vrcp.pop %v555
    %v560 = vrcp.pop %v558
    %v561 = vmul.f32 %v550, %v559
    %v562 = vmul.f32 %v552, %v560
    %v563 = vpack.c.bf16 %v561, %v561
    %v564 = vpack.c.bf16 %v562, %v562
    %565 = vrot.lane.b32.xlu0 %v215, 56
    %v566 = vpop.permute.xlu0 %565
    %v568 = vsel %vm219, %v563, 0
    %v571 = vsel %vm345, %v566, 0
    %573 = vmatprep.subr.bf16.mxu0 0
    %574 = vmatpush1.bf16.msra.mxu0 0
    %575 = vmatprep.subr.bf16.mxu0 0
    %576 = vmatpush1.bf16.msra.mxu0 0
    %577 = vmatprep.subr.bf16.mxu0 0
    %578 = vmatpush1.bf16.msra.mxu0 0
    %579 = vmatprep.subr.bf16.mxu0 0
    %580 = vmatpush1.bf16.msra.mxu0 0
    %581 = vmatprep.subr.bf16.mxu0 0
    %582 = vmatpush1.bf16.msra.mxu0 0
    %583 = vmatprep.subr.bf16.mxu0 0
    %584 = vmatpush1.bf16.msra.mxu0 0
    %585 = vmatprep.subr.bf16.mxu0 0
    %586 = vmatpush1.bf16.msra.mxu0 0
    %587 = vmatprep.subr.bf16.mxu0 0
    %588 = vmatpush1.bf16.msra.mxu0 %v571
    %589 = vmatprep.subr.bf16.mxu0 0
    %590 = vmatpush2.bf16.msra.mxu0 0
    %591 = vmatprep.subr.bf16.mxu0 0
    %592 = vmatpush2.bf16.msra.mxu0 0
    %593 = vmatprep.subr.bf16.mxu0 0
    %594 = vmatpush2.bf16.msra.mxu0 0
    %595 = vmatprep.subr.bf16.mxu0 0
    %596 = vmatpush2.bf16.msra.mxu0 0
    %597 = vmatprep.subr.bf16.mxu0 0
    %598 = vmatpush2.bf16.msra.mxu0 0
    %599 = vmatprep.subr.bf16.mxu0 0
    %600 = vmatpush2.bf16.msra.mxu0 0
    %601 = vmatprep.subr.bf16.mxu0 0
    %602 = vmatpush2.bf16.msra.mxu0 0
    %603 = vmatprep.subr.bf16.mxu0 0
    %604 = vmatpush2.bf16.msra.mxu0 0
    %605 = vmatprep.mubr.bf16.mxu0 0
    %606 = vmatmul.mubr.bf16.gmra.mxu0 %v568
    %v607 = vpop.f32.mrf.mxu0
    %v608 = vadd.f32 0.0, %v607
    %v609 = vpop.f32.mrf.mxu0
    %v610 = vpop.f32.mrf.mxu0
    %v611 = vpop.f32.mrf.mxu0
    %612 = vdwg.mxu0
    %613 = vrot.lane.b32.xlu0 %v216, 56
    %v614 = vpop.permute.xlu0 %613
    %v616 = vsel %vm219, %v564, 0
    %v619 = vsel %vm345, %v614, 0
    %621 = vmatprep.subr.bf16.mxu0 0
    %622 = vmatpush1.bf16.msra.mxu0 0
    %623 = vmatprep.subr.bf16.mxu0 0
    %624 = vmatpush1.bf16.msra.mxu0 0
    %625 = vmatprep.subr.bf16.mxu0 0
    %626 = vmatpush1.bf16.msra.mxu0 0
    %627 = vmatprep.subr.bf16.mxu0 0
    %628 = vmatpush1.bf16.msra.mxu0 0
    %629 = vmatprep.subr.bf16.mxu0 0
    %630 = vmatpush1.bf16.msra.mxu0 0
    %631 = vmatprep.subr.bf16.mxu0 0
    %632 = vmatpush1.bf16.msra.mxu0 0
    %633 = vmatprep.subr.bf16.mxu0 0
    %634 = vmatpush1.bf16.msra.mxu0 0
    %635 = vmatprep.subr.bf16.mxu0 0
    %636 = vmatpush1.bf16.msra.mxu0 %v619
    %637 = vmatprep.subr.bf16.mxu0 0
    %638 = vmatpush2.bf16.msra.mxu0 0
    %639 = vmatprep.subr.bf16.mxu0 0
    %640 = vmatpush2.bf16.msra.mxu0 0
    %641 = vmatprep.subr.bf16.mxu0 0
    %642 = vmatpush2.bf16.msra.mxu0 0
    %643 = vmatprep.subr.bf16.mxu0 0
    %644 = vmatpush2.bf16.msra.mxu0 0
    %645 = vmatprep.subr.bf16.mxu0 0
    %646 = vmatpush2.bf16.msra.mxu0 0
    %647 = vmatprep.subr.bf16.mxu0 0
    %648 = vmatpush2.bf16.msra.mxu0 0
    %649 = vmatprep.subr.bf16.mxu0 0
    %650 = vmatpush2.bf16.msra.mxu0 0
    %651 = vmatprep.subr.bf16.mxu0 0
    %652 = vmatpush2.bf16.msra.mxu0 0
    %653 = vmatprep.mubr.bf16.mxu0 0
    %654 = vmatmul.mubr.bf16.gmra.mxu0 %v616
    %v655 = vpop.f32.mrf.mxu0
    %v656 = vadd.f32 0.0, %v655
    %v657 = vpop.f32.mrf.mxu0
    %v658 = vpop.f32.mrf.mxu0
    %v659 = vpop.f32.mrf.mxu0
    %660 = vdwg.mxu0
    %v661 = vpack.c.bf16 %v656, %v608
    %v662 = vld [vmem:[%s5 + $0x4] sm:$0xf]
    %v664 = vsel %vm219, %v661, 0
    %v667 = vsel %vm345, %v662, 0
    %669 = vmatprep.subr.bf16.mxu0 0
    %670 = vmatpush1.bf16.msra.mxu0 0
    %671 = vmatprep.subr.bf16.mxu0 0
    %672 = vmatpush1.bf16.msra.mxu0 0
    %673 = vmatprep.subr.bf16.mxu0 0
    %674 = vmatpush1.bf16.msra.mxu0 0
    %675 = vmatprep.subr.bf16.mxu0 0
    %676 = vmatpush1.bf16.msra.mxu0 0
    %677 = vmatprep.subr.bf16.mxu0 0
    %678 = vmatpush1.bf16.msra.mxu0 0
    %679 = vmatprep.subr.bf16.mxu0 0
    %680 = vmatpush1.bf16.msra.mxu0 0
    %681 = vmatprep.subr.bf16.mxu0 0
    %682 = vmatpush1.bf16.msra.mxu0 0
    %683 = vmatprep.subr.bf16.mxu0 0
    %684 = vmatpush1.bf16.msra.mxu0 %v667
    %685 = vmatprep.subr.bf16.mxu0 0
    %686 = vmatpush2.bf16.msra.mxu0 0
    %687 = vmatprep.subr.bf16.mxu0 0
    %688 = vmatpush2.bf16.msra.mxu0 0
    %689 = vmatprep.subr.bf16.mxu0 0
    %690 = vmatpush2.bf16.msra.mxu0 0
    %691 = vmatprep.subr.bf16.mxu0 0
    %692 = vmatpush2.bf16.msra.mxu0 0
    %693 = vmatprep.subr.bf16.mxu0 0
    %694 = vmatpush2.bf16.msra.mxu0 0
    %695 = vmatprep.subr.bf16.mxu0 0
    %696 = vmatpush2.bf16.msra.mxu0 0
    %697 = vmatprep.subr.bf16.mxu0 0
    %698 = vmatpush2.bf16.msra.mxu0 0
    %699 = vmatprep.subr.bf16.mxu0 0
    %700 = vmatpush2.bf16.msra.mxu0 0
    %701 = vmatprep.mubr.bf16.mxu0 0
    %702 = vmatmul.mubr.bf16.gmra.mxu0 %v664
    %v703 = vpop.f32.mrf.mxu0
    %v704 = vadd.f32 0.0, %v703
    %v705 = vpop.f32.mrf.mxu0
    %v706 = vpop.f32.mrf.mxu0
    %v707 = vadd.f32 0.0, %v706
    %v708 = vpop.f32.mrf.mxu0
    %709 = vdwg.mxu0
    %v711 = vsel %vm219, %v437, 0
    %v714 = vsel %vm345, %v438, 0
    %716 = vmatprep.subr.bf16.mxu0 0
    %717 = vmatpush1.bf16.msra.mxu0 0
    %718 = vmatprep.subr.bf16.mxu0 0
    %719 = vmatpush1.bf16.msra.mxu0 0
    %720 = vmatprep.subr.bf16.mxu0 0
    %721 = vmatpush1.bf16.msra.mxu0 0
    %722 = vmatprep.subr.bf16.mxu0 0
    %723 = vmatpush1.bf16.msra.mxu0 0
    %724 = vmatprep.subr.bf16.mxu0 0
    %725 = vmatpush1.bf16.msra.mxu0 0
    %726 = vmatprep.subr.bf16.mxu0 0
    %727 = vmatpush1.bf16.msra.mxu0 0
    %728 = vmatprep.subr.bf16.mxu0 0
    %729 = vmatpush1.bf16.msra.mxu0 0
    %730 = vmatprep.subr.bf16.mxu0 0
    %731 = vmatpush1.bf16.msra.mxu0 %v714
    %732 = vmatprep.subr.bf16.mxu0 0
    %733 = vmatpush2.bf16.msra.mxu0 0
    %734 = vmatprep.subr.bf16.mxu0 0
    %735 = vmatpush2.bf16.msra.mxu0 0
    %736 = vmatprep.subr.bf16.mxu0 0
    %737 = vmatpush2.bf16.msra.mxu0 0
    %738 = vmatprep.subr.bf16.mxu0 0
    %739 = vmatpush2.bf16.msra.mxu0 0
    %740 = vmatprep.subr.bf16.mxu0 0
    %741 = vmatpush2.bf16.msra.mxu0 0
    %742 = vmatprep.subr.bf16.mxu0 0
    %743 = vmatpush2.bf16.msra.mxu0 0
    %744 = vmatprep.subr.bf16.mxu0 0
    %745 = vmatpush2.bf16.msra.mxu0 0
    %746 = vmatprep.subr.bf16.mxu0 0
    %747 = vmatpush2.bf16.msra.mxu0 0
    %748 = vmatprep.mubr.bf16.mxu0 0
    %749 = vmatmul.mubr.bf16.gmra.mxu0 %v711
    %v750 = vpop.f32.mrf.mxu0
    %v751 = vadd.f32 %v704, %v750
    %v752 = vpop.f32.mrf.mxu0
    %v753 = vpop.f32.mrf.mxu0
    %v754 = vadd.f32 %v707, %v753
    %v755 = vpop.f32.mrf.mxu0
    %756 = vdwg.mxu0
    %757 = vrot.lane.b32.xlu0 %v215, 112
    %v758 = vpop.permute.xlu0 %757
    %759 = vrot.lane.b32.xlu0 %v215, 80
    %v760 = vpop.permute.xlu0 %759
    %v762 = vsel %vm219, %v758, 0
    %v765 = vsel %vm219, %v760, 0
    %767 = vmatprep.subr.bf16.mxu0 0
    %768 = vmatpush1.bf16.xpose.msra.mxu0 0
    %769 = vmatprep.subr.bf16.mxu0 0
    %770 = vmatpush1.bf16.xpose.msra.mxu0 0
    %771 = vmatprep.subr.bf16.mxu0 0
    %772 = vmatpush1.bf16.xpose.msra.mxu0 0
    %773 = vmatprep.subr.bf16.mxu0 0
    %774 = vmatpush1.bf16.xpose.msra.mxu0 0
    %775 = vmatprep.subr.bf16.mxu0 0
    %776 = vmatpush1.bf16.xpose.msra.mxu0 0
    %777 = vmatprep.subr.bf16.mxu0 0
    %778 = vmatpush1.bf16.xpose.msra.mxu0 0
    %779 = vmatprep.subr.bf16.mxu0 0
    %780 = vmatpush1.bf16.xpose.msra.mxu0 0
    %781 = vmatprep.subr.bf16.mxu0 0
    %782 = vmatpush1.bf16.xpose.msra.mxu0 %v765
    %783 = vmatprep.subr.bf16.mxu0 0
    %784 = vmatpush2.bf16.xpose.msra.mxu0 0
    %785 = vmatprep.subr.bf16.mxu0 0
    %786 = vmatpush2.bf16.xpose.msra.mxu0 0
    %787 = vmatprep.subr.bf16.mxu0 0
    %788 = vmatpush2.bf16.xpose.msra.mxu0 0
    %789 = vmatprep.subr.bf16.mxu0 0
    %790 = vmatpush2.bf16.xpose.msra.mxu0 0
    %791 = vmatprep.subr.bf16.mxu0 0
    %792 = vmatpush2.bf16.xpose.msra.mxu0 0
    %793 = vmatprep.subr.bf16.mxu0 0
    %794 = vmatpush2.bf16.xpose.msra.mxu0 0
    %795 = vmatprep.subr.bf16.mxu0 0
    %796 = vmatpush2.bf16.xpose.msra.mxu0 0
    %797 = vmatprep.subr.bf16.mxu0 0
    %798 = vmatpush2.bf16.xpose.msra.mxu0 0
    %799 = vmatprep.mubr.bf16.mxu0 0
    %800 = vmatmul.mubr.bf16.gmra.mxu0 %v762
    %v801 = vpop.f32.mrf.mxu0
    %v802 = vadd.f32 0.0, %v801
    %v803 = vpop.f32.mrf.mxu0
    %v804 = vpop.f32.mrf.mxu0
    %v805 = vpop.f32.mrf.mxu0
    %806 = vdwg.mxu0
    %807 = vrot.lane.b32.xlu0 %v216, 112
    %v808 = vpop.permute.xlu0 %807
    %809 = vrot.lane.b32.xlu0 %v216, 80
    %v810 = vpop.permute.xlu0 %809
    %v812 = vsel %vm219, %v808, 0
    %v815 = vsel %vm219, %v810, 0
    %817 = vmatprep.subr.bf16.mxu0 0
    %818 = vmatpush1.bf16.xpose.msra.mxu0 0
    %819 = vmatprep.subr.bf16.mxu0 0
    %820 = vmatpush1.bf16.xpose.msra.mxu0 0
    %821 = vmatprep.subr.bf16.mxu0 0
    %822 = vmatpush1.bf16.xpose.msra.mxu0 0
    %823 = vmatprep.subr.bf16.mxu0 0
    %824 = vmatpush1.bf16.xpose.msra.mxu0 0
    %825 = vmatprep.subr.bf16.mxu0 0
    %826 = vmatpush1.bf16.xpose.msra.mxu0 0
    %827 = vmatprep.subr.bf16.mxu0 0
    %828 = vmatpush1.bf16.xpose.msra.mxu0 0
    %829 = vmatprep.subr.bf16.mxu0 0
    %830 = vmatpush1.bf16.xpose.msra.mxu0 0
    %831 = vmatprep.subr.bf16.mxu0 0
    %832 = vmatpush1.bf16.xpose.msra.mxu0 %v815
    %833 = vmatprep.subr.bf16.mxu0 0
    %834 = vmatpush2.bf16.xpose.msra.mxu0 0
    %835 = vmatprep.subr.bf16.mxu0 0
    %836 = vmatpush2.bf16.xpose.msra.mxu0 0
    %837 = vmatprep.subr.bf16.mxu0 0
    %838 = vmatpush2.bf16.xpose.msra.mxu0 0
    %839 = vmatprep.subr.bf16.mxu0 0
    %840 = vmatpush2.bf16.xpose.msra.mxu0 0
    %841 = vmatprep.subr.bf16.mxu0 0
    %842 = vmatpush2.bf16.xpose.msra.mxu0 0
    %843 = vmatprep.subr.bf16.mxu0 0
    %844 = vmatpush2.bf16.xpose.msra.mxu0 0
    %845 = vmatprep.subr.bf16.mxu0 0
    %846 = vmatpush2.bf16.xpose.msra.mxu0 0
    %847 = vmatprep.subr.bf16.mxu0 0
    %848 = vmatpush2.bf16.xpose.msra.mxu0 0
    %849 = vmatprep.mubr.bf16.mxu0 0
    %850 = vmatmul.mubr.bf16.gmra.mxu0 %v812
    %v851 = vpop.f32.mrf.mxu0
    %v852 = vadd.f32 0.0, %v851
    %v853 = vpop.f32.mrf.mxu0
    %v854 = vpop.f32.mrf.mxu0
    %v855 = vpop.f32.mrf.mxu0
    %856 = vdwg.mxu0
    %v857 = vmul.f32 %v802, 0.35355338
    %v858 = vmul.f32 %v852, 0.35355338
    %v859 = vsel %vm219, %v857, -inf
    %860 = vmax.xlane.f32.xlu0 %v859
    %v861 = vpop.xlane.xlu0 %860
    %v862 = vsel %vm219, %v858, -inf
    %863 = vmax.xlane.f32.xlu0 %v862
    %v864 = vpop.xlane.xlu0 %863
    %v865 = vsub.f32 %v857, %v861
    %v866 = vsub.f32 %v858, %v864
    %v867 = vmul.f32 %v865, 1.442695
    %v868 = vpow.pop %v867
    %v869 = vmul.f32 %v866, 1.442695
    %v870 = vpow.pop %v869
    %v871 = vsel %vm219, %v868, 0.0
    %872 = vadd.xlane.f32.xlu0 %v871
    %v873 = vpop.xlane.xlu0 %872
    %v874 = vsel %vm219, %v870, 0.0
    %875 = vadd.xlane.f32.xlu0 %v874
    %v876 = vpop.xlane.xlu0 %875
    %v877 = vrcp.pop %v873
    %v878 = vrcp.pop %v876
    %v879 = vmul.f32 %v868, %v877
    %v880 = vmul.f32 %v870, %v878
    %v881 = vpack.c.bf16 %v879, %v879
    %v882 = vpack.c.bf16 %v880, %v880
    %883 = vrot.lane.b32.xlu0 %v215, 48
    %v884 = vpop.permute.xlu0 %883
    %v886 = vsel %vm219, %v881, 0
    %v889 = vsel %vm345, %v884, 0
    %891 = vmatprep.subr.bf16.mxu0 0
    %892 = vmatpush1.bf16.msra.mxu0 0
    %893 = vmatprep.subr.bf16.mxu0 0
    %894 = vmatpush1.bf16.msra.mxu0 0
    %895 = vmatprep.subr.bf16.mxu0 0
    %896 = vmatpush1.bf16.msra.mxu0 0
    %897 = vmatprep.subr.bf16.mxu0 0
    %898 = vmatpush1.bf16.msra.mxu0 0
    %899 = vmatprep.subr.bf16.mxu0 0
    %900 = vmatpush1.bf16.msra.mxu0 0
    %901 = vmatprep.subr.bf16.mxu0 0
    %902 = vmatpush1.bf16.msra.mxu0 0
    %903 = vmatprep.subr.bf16.mxu0 0
    %904 = vmatpush1.bf16.msra.mxu0 0
    %905 = vmatprep.subr.bf16.mxu0 0
    %906 = vmatpush1.bf16.msra.mxu0 %v889
    %907 = vmatprep.subr.bf16.mxu0 0
    %908 = vmatpush2.bf16.msra.mxu0 0
    %909 = vmatprep.subr.bf16.mxu0 0
    %910 = vmatpush2.bf16.msra.mxu0 0
    %911 = vmatprep.subr.bf16.mxu0 0
    %912 = vmatpush2.bf16.msra.mxu0 0
    %913 = vmatprep.subr.bf16.mxu0 0
    %914 = vmatpush2.bf16.msra.mxu0 0
    %915 = vmatprep.subr.bf16.mxu0 0
    %916 = vmatpush2.bf16.msra.mxu0 0
    %917 = vmatprep.subr.bf16.mxu0 0
    %918 = vmatpush2.bf16.msra.mxu0 0
    %919 = vmatprep.subr.bf16.mxu0 0
    %920 = vmatpush2.bf16.msra.mxu0 0
    %921 = vmatprep.subr.bf16.mxu0 0
    %922 = vmatpush2.bf16.msra.mxu0 0
    %923 = vmatprep.mubr.bf16.mxu0 0
    %924 = vmatmul.mubr.bf16.gmra.mxu0 %v886
    %v925 = vpop.f32.mrf.mxu0
    %v926 = vadd.f32 0.0, %v925
    %v927 = vpop.f32.mrf.mxu0
    %v928 = vpop.f32.mrf.mxu0
    %v929 = vpop.f32.mrf.mxu0
    %930 = vdwg.mxu0
    %931 = vrot.lane.b32.xlu0 %v216, 48
    %v932 = vpop.permute.xlu0 %931
    %v934 = vsel %vm219, %v882, 0
    %v937 = vsel %vm345, %v932, 0
    %939 = vmatprep.subr.bf16.mxu0 0
    %940 = vmatpush1.bf16.msra.mxu0 0
    %941 = vmatprep.subr.bf16.mxu0 0
    %942 = vmatpush1.bf16.msra.mxu0 0
    %943 = vmatprep.subr.bf16.mxu0 0
    %944 = vmatpush1.bf16.msra.mxu0 0
    %945 = vmatprep.subr.bf16.mxu0 0
    %946 = vmatpush1.bf16.msra.mxu0 0
    %947 = vmatprep.subr.bf16.mxu0 0
    %948 = vmatpush1.bf16.msra.mxu0 0
    %949 = vmatprep.subr.bf16.mxu0 0
    %950 = vmatpush1.bf16.msra.mxu0 0
    %951 = vmatprep.subr.bf16.mxu0 0
    %952 = vmatpush1.bf16.msra.mxu0 0
    %953 = vmatprep.subr.bf16.mxu0 0
    %954 = vmatpush1.bf16.msra.mxu0 %v937
    %955 = vmatprep.subr.bf16.mxu0 0
    %956 = vmatpush2.bf16.msra.mxu0 0
    %957 = vmatprep.subr.bf16.mxu0 0
    %958 = vmatpush2.bf16.msra.mxu0 0
    %959 = vmatprep.subr.bf16.mxu0 0
    %960 = vmatpush2.bf16.msra.mxu0 0
    %961 = vmatprep.subr.bf16.mxu0 0
    %962 = vmatpush2.bf16.msra.mxu0 0
    %963 = vmatprep.subr.bf16.mxu0 0
    %964 = vmatpush2.bf16.msra.mxu0 0
    %965 = vmatprep.subr.bf16.mxu0 0
    %966 = vmatpush2.bf16.msra.mxu0 0
    %967 = vmatprep.subr.bf16.mxu0 0
    %968 = vmatpush2.bf16.msra.mxu0 0
    %969 = vmatprep.subr.bf16.mxu0 0
    %970 = vmatpush2.bf16.msra.mxu0 0
    %971 = vmatprep.mubr.bf16.mxu0 0
    %972 = vmatmul.mubr.bf16.gmra.mxu0 %v934
    %v973 = vpop.f32.mrf.mxu0
    %v974 = vadd.f32 0.0, %v973
    %v975 = vpop.f32.mrf.mxu0
    %v976 = vpop.f32.mrf.mxu0
    %v977 = vpop.f32.mrf.mxu0
    %978 = vdwg.mxu0
    %v979 = vpack.c.bf16 %v974, %v926
    %v980 = vld [vmem:[%s5 + $0x8] sm:$0xf]
    %v982 = vsel %vm219, %v979, 0
    %v985 = vsel %vm345, %v980, 0
    %987 = vmatprep.subr.bf16.mxu0 0
    %988 = vmatpush1.bf16.msra.mxu0 0
    %989 = vmatprep.subr.bf16.mxu0 0
    %990 = vmatpush1.bf16.msra.mxu0 0
    %991 = vmatprep.subr.bf16.mxu0 0
    %992 = vmatpush1.bf16.msra.mxu0 0
    %993 = vmatprep.subr.bf16.mxu0 0
    %994 = vmatpush1.bf16.msra.mxu0 0
    %995 = vmatprep.subr.bf16.mxu0 0
    %996 = vmatpush1.bf16.msra.mxu0 0
    %997 = vmatprep.subr.bf16.mxu0 0
    %998 = vmatpush1.bf16.msra.mxu0 0
    %999 = vmatprep.subr.bf16.mxu0 0
    %1000 = vmatpush1.bf16.msra.mxu0 0
    %1001 = vmatprep.subr.bf16.mxu0 0
    %1002 = vmatpush1.bf16.msra.mxu0 %v985
    %1003 = vmatprep.subr.bf16.mxu0 0
    %1004 = vmatpush2.bf16.msra.mxu0 0
    %1005 = vmatprep.subr.bf16.mxu0 0
    %1006 = vmatpush2.bf16.msra.mxu0 0
    %1007 = vmatprep.subr.bf16.mxu0 0
    %1008 = vmatpush2.bf16.msra.mxu0 0
    %1009 = vmatprep.subr.bf16.mxu0 0
    %1010 = vmatpush2.bf16.msra.mxu0 0
    %1011 = vmatprep.subr.bf16.mxu0 0
    %1012 = vmatpush2.bf16.msra.mxu0 0
    %1013 = vmatprep.subr.bf16.mxu0 0
    %1014 = vmatpush2.bf16.msra.mxu0 0
    %1015 = vmatprep.subr.bf16.mxu0 0
    %1016 = vmatpush2.bf16.msra.mxu0 0
    %1017 = vmatprep.subr.bf16.mxu0 0
    %1018 = vmatpush2.bf16.msra.mxu0 0
    %1019 = vmatprep.mubr.bf16.mxu0 0
    %1020 = vmatmul.mubr.bf16.gmra.mxu0 %v982
    %v1021 = vpop.f32.mrf.mxu0
    %v1022 = vadd.f32 0.0, %v1021
    %v1023 = vpop.f32.mrf.mxu0
    %v1024 = vpop.f32.mrf.mxu0
    %v1025 = vadd.f32 0.0, %v1024
    %v1026 = vpop.f32.mrf.mxu0
    %1027 = vdwg.mxu0
    %v1028 = vadd.f32 %v751, %v1022
    %v1029 = vadd.f32 %v754, %v1025
    %1030 = vrot.lane.b32.xlu0 %v215, 104
    %v1031 = vpop.permute.xlu0 %1030
    %1032 = vrot.lane.b32.xlu0 %v215, 72
    %v1033 = vpop.permute.xlu0 %1032
    %v1035 = vsel %vm219, %v1031, 0
    %v1038 = vsel %vm219, %v1033, 0
    %1040 = vmatprep.subr.bf16.mxu0 0
    %1041 = vmatpush1.bf16.xpose.msra.mxu0 0
    %1042 = vmatprep.subr.bf16.mxu0 0
    %1043 = vmatpush1.bf16.xpose.msra.mxu0 0
    %1044 = vmatprep.subr.bf16.mxu0 0
    %1045 = vmatpush1.bf16.xpose.msra.mxu0 0
    %1046 = vmatprep.subr.bf16.mxu0 0
    %1047 = vmatpush1.bf16.xpose.msra.mxu0 0
    %1048 = vmatprep.subr.bf16.mxu0 0
    %1049 = vmatpush1.bf16.xpose.msra.mxu0 0
    %1050 = vmatprep.subr.bf16.mxu0 0
    %1051 = vmatpush1.bf16.xpose.msra.mxu0 0
    %1052 = vmatprep.subr.bf16.mxu0 0
    %1053 = vmatpush1.bf16.xpose.msra.mxu0 0
    %1054 = vmatprep.subr.bf16.mxu0 0
    %1055 = vmatpush1.bf16.xpose.msra.mxu0 %v1038
    %1056 = vmatprep.subr.bf16.mxu0 0
    %1057 = vmatpush2.bf16.xpose.msra.mxu0 0
    %1058 = vmatprep.subr.bf16.mxu0 0
    %1059 = vmatpush2.bf16.xpose.msra.mxu0 0
    %1060 = vmatprep.subr.bf16.mxu0 0
    %1061 = vmatpush2.bf16.xpose.msra.mxu0 0
    %1062 = vmatprep.subr.bf16.mxu0 0
    %1063 = vmatpush2.bf16.xpose.msra.mxu0 0
    %1064 = vmatprep.subr.bf16.mxu0 0
    %1065 = vmatpush2.bf16.xpose.msra.mxu0 0
    %1066 = vmatprep.subr.bf16.mxu0 0
    %1067 = vmatpush2.bf16.xpose.msra.mxu0 0
    %1068 = vmatprep.subr.bf16.mxu0 0
    %1069 = vmatpush2.bf16.xpose.msra.mxu0 0
    %1070 = vmatprep.subr.bf16.mxu0 0
    %1071 = vmatpush2.bf16.xpose.msra.mxu0 0
    %1072 = vmatprep.mubr.bf16.mxu0 0
    %1073 = vmatmul.mubr.bf16.gmra.mxu0 %v1035
    %v1074 = vpop.f32.mrf.mxu0
    %v1075 = vadd.f32 0.0, %v1074
    %v1076 = vpop.f32.mrf.mxu0
    %v1077 = vpop.f32.mrf.mxu0
    %v1078 = vpop.f32.mrf.mxu0
    %1079 = vdwg.mxu0
    %1080 = vrot.lane.b32.xlu0 %v216, 104
    %v1081 = vpop.permute.xlu0 %1080
    %1082 = vrot.lane.b32.xlu0 %v216, 72
    %v1083 = vpop.permute.xlu0 %1082
    %v1085 = vsel %vm219, %v1081, 0
    %v1088 = vsel %vm219, %v1083, 0
    %1090 = vmatprep.subr.bf16.mxu0 0
    %1091 = vmatpush1.bf16.xpose.msra.mxu0 0
    %1092 = vmatprep.subr.bf16.mxu0 0
    %1093 = vmatpush1.bf16.xpose.msra.mxu0 0
    %1094 = vmatprep.subr.bf16.mxu0 0
    %1095 = vmatpush1.bf16.xpose.msra.mxu0 0
    %1096 = vmatprep.subr.bf16.mxu0 0
    %1097 = vmatpush1.bf16.xpose.msra.mxu0 0
    %1098 = vmatprep.subr.bf16.mxu0 0
    %1099 = vmatpush1.bf16.xpose.msra.mxu0 0
    %1100 = vmatprep.subr.bf16.mxu0 0
    %1101 = vmatpush1.bf16.xpose.msra.mxu0 0
    %1102 = vmatprep.subr.bf16.mxu0 0
    %1103 = vmatpush1.bf16.xpose.msra.mxu0 0
    %1104 = vmatprep.subr.bf16.mxu0 0
    %1105 = vmatpush1.bf16.xpose.msra.mxu0 %v1088
    %1106 = vmatprep.subr.bf16.mxu0 0
    %1107 = vmatpush2.bf16.xpose.msra.mxu0 0
    %1108 = vmatprep.subr.bf16.mxu0 0
    %1109 = vmatpush2.bf16.xpose.msra.mxu0 0
    %1110 = vmatprep.subr.bf16.mxu0 0
    %1111 = vmatpush2.bf16.xpose.msra.mxu0 0
    %1112 = vmatprep.subr.bf16.mxu0 0
    %1113 = vmatpush2.bf16.xpose.msra.mxu0 0
    %1114 = vmatprep.subr.bf16.mxu0 0
    %1115 = vmatpush2.bf16.xpose.msra.mxu0 0
    %1116 = vmatprep.subr.bf16.mxu0 0
    %1117 = vmatpush2.bf16.xpose.msra.mxu0 0
    %1118 = vmatprep.subr.bf16.mxu0 0
    %1119 = vmatpush2.bf16.xpose.msra.mxu0 0
    %1120 = vmatprep.subr.bf16.mxu0 0
    %1121 = vmatpush2.bf16.xpose.msra.mxu0 0
    %1122 = vmatprep.mubr.bf16.mxu0 0
    %1123 = vmatmul.mubr.bf16.gmra.mxu0 %v1085
    %v1124 = vpop.f32.mrf.mxu0
    %v1125 = vadd.f32 0.0, %v1124
    %v1126 = vpop.f32.mrf.mxu0
    %v1127 = vpop.f32.mrf.mxu0
    %v1128 = vpop.f32.mrf.mxu0
    %1129 = vdwg.mxu0
    %v1130 = vmul.f32 %v1075, 0.35355338
    %v1131 = vmul.f32 %v1125, 0.35355338
    %v1132 = vsel %vm219, %v1130, -inf
    %1133 = vmax.xlane.f32.xlu0 %v1132
    %v1134 = vpop.xlane.xlu0 %1133
    %v1135 = vsel %vm219, %v1131, -inf
    %1136 = vmax.xlane.f32.xlu0 %v1135
    %v1137 = vpop.xlane.xlu0 %1136
    %v1138 = vsub.f32 %v1130, %v1134
    %v1139 = vsub.f32 %v1131, %v1137
    %v1140 = vmul.f32 %v1138, 1.442695
    %v1141 = vpow.pop %v1140
    %v1142 = vmul.f32 %v1139, 1.442695
    %v1143 = vpow.pop %v1142
    %v1144 = vsel %vm219, %v1141, 0.0
    %1145 = vadd.xlane.f32.xlu0 %v1144
    %v1146 = vpop.xlane.xlu0 %1145
    %v1147 = vsel %vm219, %v1143, 0.0
    %1148 = vadd.xlane.f32.xlu0 %v1147
    %v1149 = vpop.xlane.xlu0 %1148
    %v1150 = vrcp.pop %v1146
    %v1151 = vrcp.pop %v1149
    %v1152 = vmul.f32 %v1141, %v1150
    %v1153 = vmul.f32 %v1143, %v1151
    %v1154 = vpack.c.bf16 %v1152, %v1152
    %v1155 = vpack.c.bf16 %v1153, %v1153
    %1156 = vrot.lane.b32.xlu0 %v215, 40
    %v1157 = vpop.permute.xlu0 %1156
    %v1159 = vsel %vm219, %v1154, 0
    %v1162 = vsel %vm345, %v1157, 0
    %1164 = vmatprep.subr.bf16.mxu0 0
    %1165 = vmatpush1.bf16.msra.mxu0 0
    %1166 = vmatprep.subr.bf16.mxu0 0
    %1167 = vmatpush1.bf16.msra.mxu0 0
    %1168 = vmatprep.subr.bf16.mxu0 0
    %1169 = vmatpush1.bf16.msra.mxu0 0
    %1170 = vmatprep.subr.bf16.mxu0 0
    %1171 = vmatpush1.bf16.msra.mxu0 0
    %1172 = vmatprep.subr.bf16.mxu0 0
    %1173 = vmatpush1.bf16.msra.mxu0 0
    %1174 = vmatprep.subr.bf16.mxu0 0
    %1175 = vmatpush1.bf16.msra.mxu0 0
    %1176 = vmatprep.subr.bf16.mxu0 0
    %1177 = vmatpush1.bf16.msra.mxu0 0
    %1178 = vmatprep.subr.bf16.mxu0 0
    %1179 = vmatpush1.bf16.msra.mxu0 %v1162
    %1180 = vmatprep.subr.bf16.mxu0 0
    %1181 = vmatpush2.bf16.msra.mxu0 0
    %1182 = vmatprep.subr.bf16.mxu0 0
    %1183 = vmatpush2.bf16.msra.mxu0 0
    %1184 = vmatprep.subr.bf16.mxu0 0
    %1185 = vmatpush2.bf16.msra.mxu0 0
    %1186 = vmatprep.subr.bf16.mxu0 0
    %1187 = vmatpush2.bf16.msra.mxu0 0
    %1188 = vmatprep.subr.bf16.mxu0 0
    %1189 = vmatpush2.bf16.msra.mxu0 0
    %1190 = vmatprep.subr.bf16.mxu0 0
    %1191 = vmatpush2.bf16.msra.mxu0 0
    %1192 = vmatprep.subr.bf16.mxu0 0
    %1193 = vmatpush2.bf16.msra.mxu0 0
    %1194 = vmatprep.subr.bf16.mxu0 0
    %1195 = vmatpush2.bf16.msra.mxu0 0
    %1196 = vmatprep.mubr.bf16.mxu0 0
    %1197 = vmatmul.mubr.bf16.gmra.mxu0 %v1159
    %v1198 = vpop.f32.mrf.mxu0
    %v1199 = vadd.f32 0.0, %v1198
    %v1200 = vpop.f32.mrf.mxu0
    %v1201 = vpop.f32.mrf.mxu0
    %v1202 = vpop.f32.mrf.mxu0
    %1203 = vdwg.mxu0
    %1204 = vrot.lane.b32.xlu0 %v216, 40
    %v1205 = vpop.permute.xlu0 %1204
    %v1207 = vsel %vm219, %v1155, 0
    %v1210 = vsel %vm345, %v1205, 0
    %1212 = vmatprep.subr.bf16.mxu0 0
    %1213 = vmatpush1.bf16.msra.mxu0 0
    %1214 = vmatprep.subr.bf16.mxu0 0
    %1215 = vmatpush1.bf16.msra.mxu0 0
    %1216 = vmatprep.subr.bf16.mxu0 0
    %1217 = vmatpush1.bf16.msra.mxu0 0
    %1218 = vmatprep.subr.bf16.mxu0 0
    %1219 = vmatpush1.bf16.msra.mxu0 0
    %1220 = vmatprep.subr.bf16.mxu0 0
    %1221 = vmatpush1.bf16.msra.mxu0 0
    %1222 = vmatprep.subr.bf16.mxu0 0
    %1223 = vmatpush1.bf16.msra.mxu0 0
    %1224 = vmatprep.subr.bf16.mxu0 0
    %1225 = vmatpush1.bf16.msra.mxu0 0
    %1226 = vmatprep.subr.bf16.mxu0 0
    %1227 = vmatpush1.bf16.msra.mxu0 %v1210
    %1228 = vmatprep.subr.bf16.mxu0 0
    %1229 = vmatpush2.bf16.msra.mxu0 0
    %1230 = vmatprep.subr.bf16.mxu0 0
    %1231 = vmatpush2.bf16.msra.mxu0 0
    %1232 = vmatprep.subr.bf16.mxu0 0
    %1233 = vmatpush2.bf16.msra.mxu0 0
    %1234 = vmatprep.subr.bf16.mxu0 0
    %1235 = vmatpush2.bf16.msra.mxu0 0
    %1236 = vmatprep.subr.bf16.mxu0 0
    %1237 = vmatpush2.bf16.msra.mxu0 0
    %1238 = vmatprep.subr.bf16.mxu0 0
    %1239 = vmatpush2.bf16.msra.mxu0 0
    %1240 = vmatprep.subr.bf16.mxu0 0
    %1241 = vmatpush2.bf16.msra.mxu0 0
    %1242 = vmatprep.subr.bf16.mxu0 0
    %1243 = vmatpush2.bf16.msra.mxu0 0
    %1244 = vmatprep.mubr.bf16.mxu0 0
    %1245 = vmatmul.mubr.bf16.gmra.mxu0 %v1207
    %v1246 = vpop.f32.mrf.mxu0
    %v1247 = vadd.f32 0.0, %v1246
    %v1248 = vpop.f32.mrf.mxu0
    %v1249 = vpop.f32.mrf.mxu0
    %v1250 = vpop.f32.mrf.mxu0
    %1251 = vdwg.mxu0
    %v1252 = vpack.c.bf16 %v1247, %v1199
    %v1253 = vld [vmem:[%s5 + $0xc] sm:$0xf]
    %v1255 = vsel %vm219, %v1252, 0
    %v1258 = vsel %vm345, %v1253, 0
    %1260 = vmatprep.subr.bf16.mxu0 0
    %1261 = vmatpush1.bf16.msra.mxu0 0
    %1262 = vmatprep.subr.bf16.mxu0 0
    %1263 = vmatpush1.bf16.msra.mxu0 0
    %1264 = vmatprep.subr.bf16.mxu0 0
    %1265 = vmatpush1.bf16.msra.mxu0 0
    %1266 = vmatprep.subr.bf16.mxu0 0
    %1267 = vmatpush1.bf16.msra.mxu0 0
    %1268 = vmatprep.subr.bf16.mxu0 0
    %1269 = vmatpush1.bf16.msra.mxu0 0
    %1270 = vmatprep.subr.bf16.mxu0 0
    %1271 = vmatpush1.bf16.msra.mxu0 0
    %1272 = vmatprep.subr.bf16.mxu0 0
    %1273 = vmatpush1.bf16.msra.mxu0 0
    %1274 = vmatprep.subr.bf16.mxu0 0
    %1275 = vmatpush1.bf16.msra.mxu0 %v1258
    %1276 = vmatprep.subr.bf16.mxu0 0
    %1277 = vmatpush2.bf16.msra.mxu0 0
    %1278 = vmatprep.subr.bf16.mxu0 0
    %1279 = vmatpush2.bf16.msra.mxu0 0
    %1280 = vmatprep.subr.bf16.mxu0 0
    %1281 = vmatpush2.bf16.msra.mxu0 0
    %1282 = vmatprep.subr.bf16.mxu0 0
    %1283 = vmatpush2.bf16.msra.mxu0 0
    %1284 = vmatprep.subr.bf16.mxu0 0
    %1285 = vmatpush2.bf16.msra.mxu0 0
    %1286 = vmatprep.subr.bf16.mxu0 0
    %1287 = vmatpush2.bf16.msra.mxu0 0
    %1288 = vmatprep.subr.bf16.mxu0 0
    %1289 = vmatpush2.bf16.msra.mxu0 0
    %1290 = vmatprep.subr.bf16.mxu0 0
    %1291 = vmatpush2.bf16.msra.mxu0 0
    %1292 = vmatprep.mubr.bf16.mxu0 0
    %1293 = vmatmul.mubr.bf16.gmra.mxu0 %v1255
    %v1294 = vpop.f32.mrf.mxu0
    %v1295 = vadd.f32 0.0, %v1294
    %v1296 = vpop.f32.mrf.mxu0
    %v1297 = vpop.f32.mrf.mxu0
    %v1298 = vadd.f32 0.0, %v1297
    %v1299 = vpop.f32.mrf.mxu0
    %1300 = vdwg.mxu0
    %v1301 = vadd.f32 %v1028, %v1295
    %v1302 = vadd.f32 %v1029, %v1298
    %v1303 = vadd.f32 %v95, %v1301
    %v1304 = vadd.f32 %v96, %v1302
    %v1305 = vld [vmem:[%s6] sm:$0x1]
    %v1307 = vlaneseq
    %v1308 = vshrl.u32 %v1307, 7
    %v1309 = vsub.s32 0, %v1308
    %v1310 = vrot.slane %v1305, %v1309
    %v1312 = vadd.f32 %v1303, %v1310
    %v1313 = vadd.f32 %v1304, %v1310
    %v1314 = vld [vmem:[#allocation2] sm:$0x1]
    %v1315 = vld [vmem:[#allocation5] sm:$0x1]
    %v1316 = vsel %vm99, %v1312, 0.0
    %1317 = vadd.xlane.f32.xlu0 %v1316
    %v1318 = vpop.xlane.xlu0 %1317
    %v1319 = vsel %vm99, %v1313, 0.0
    %1320 = vadd.xlane.f32.xlu0 %v1319
    %v1321 = vpop.xlane.xlu0 %1320
    %v1322 = vmul.f32 %v1318, %v106
    %v1323 = vmul.f32 %v1321, %v106
    %v1324 = vsub.f32 %v1312, %v1322
    %v1325 = vsub.f32 %v1313, %v1323
    %v1326 = vmul.f32 %v1324, %v1324
    %v1327 = vmul.f32 %v1325, %v1325
    %v1328 = vsel %vm99, %v1326, 0.0
    %1329 = vadd.xlane.f32.xlu0 %v1328
    %v1330 = vpop.xlane.xlu0 %1329
    %v1331 = vsel %vm99, %v1327, 0.0
    %1332 = vadd.xlane.f32.xlu0 %v1331
    %v1333 = vpop.xlane.xlu0 %1332
    %v1334 = vmul.f32 %v1330, %v106
    %v1335 = vmul.f32 %v1333, %v106
    %v1336 = vadd.f32 %v1334, 1e-05
    %v1337 = vadd.f32 %v1335, 1e-05
    %v1338 = vrsqrt.pop %v1336
    %v1339 = vrsqrt.pop %v1337
    %v1340 = vmul.f32 %v1324, %v1338
    %v1341 = vmul.f32 %v1325, %v1339
    %v1343 = vlaneseq
    %v1344 = vshrl.u32 %v1343, 7
    %v1345 = vsub.s32 0, %v1344
    %v1346 = vrot.slane %v1314, %v1345
    %v1348 = vmul.f32 %v1340, %v1346
    %v1349 = vmul.f32 %v1341, %v1346
    %v1351 = vlaneseq
    %v1352 = vshrl.u32 %v1351, 7
    %v1353 = vsub.s32 0, %v1352
    %v1354 = vrot.slane %v1315, %v1353
    %v1356 = vadd.f32 %v1348, %v1354
    %v1357 = vadd.f32 %v1349, %v1354
    %v1358 = vpack.c.bf16 %v1357, %v1356
    %v1359 = vld [vmem:[#allocation7] sm:$0xf]
    %v1360 = vld [vmem:[#allocation7 + $0x4] sm:$0xf]
    %v1361 = vld [vmem:[#allocation7 + $0x8] sm:$0xf]
    %v1362 = vld [vmem:[#allocation7 + $0xc] sm:$0xf]
    %v1363 = vld [vmem:[#allocation8] sm:$0x1]
    %v1365 = vlaneseq
    %v1366 = vshrl.u32 %v1365, 7
    %v1367 = vsub.s32 0, %v1366
    %v1368 = vrot.slane %v1363, %v1367
    %v1374 = vunpack.c.l.b16 %v1359
    %v1375 = vunpack.c.l.b16 %v1360
    %v1376 = vunpack.c.l.b16 %v1361
    %v1377 = vunpack.c.l.b16 %v1362
    %v1378 = vpack.c.b16 %v1375, %v1374
    %v1379 = vpack.c.b16 %v1377, %v1376
    %v1383 = vsel %vm99, %v1358, 0
    %1385 = vmatprep.subr.bf16.mxu0 0
    %1386 = vmatpush1.bf16.msra.mxu0 0
    %1387 = vmatprep.subr.bf16.mxu0 0
    %1388 = vmatpush1.bf16.msra.mxu0 0
    %1389 = vmatprep.subr.bf16.mxu0 0
    %1390 = vmatpush1.bf16.msra.mxu0 0
    %1391 = vmatprep.subr.bf16.mxu0 0
    %1392 = vmatpush1.bf16.msra.mxu0 0
    %1393 = vmatprep.subr.bf16.mxu0 0
    %1394 = vmatpush1.bf16.msra.mxu0 0
    %1395 = vmatprep.subr.bf16.mxu0 0
    %1396 = vmatpush1.bf16.msra.mxu0 0
    %1397 = vmatprep.subr.bf16.mxu0 0
    %1398 = vmatpush1.bf16.msra.mxu0 %v1379
    %1399 = vmatprep.subr.bf16.mxu0 0
    %1400 = vmatpush1.bf16.msra.mxu0 %v1378
    %1401 = vmatprep.subr.bf16.mxu0 0
    %1402 = vmatpush2.bf16.msra.mxu0 0
    %1403 = vmatprep.subr.bf16.mxu0 0
    %1404 = vmatpush2.bf16.msra.mxu0 0
    %1405 = vmatprep.subr.bf16.mxu0 0
    %1406 = vmatpush2.bf16.msra.mxu0 0
    %1407 = vmatprep.subr.bf16.mxu0 0
    %1408 = vmatpush2.bf16.msra.mxu0 0
    %1409 = vmatprep.subr.bf16.mxu0 0
    %1410 = vmatpush2.bf16.msra.mxu0 0
    %1411 = vmatprep.subr.bf16.mxu0 0
    %1412 = vmatpush2.bf16.msra.mxu0 0
    %1413 = vmatprep.subr.bf16.mxu0 0
    %1414 = vmatpush2.bf16.msra.mxu0 0
    %1415 = vmatprep.subr.bf16.mxu0 0
    %1416 = vmatpush2.bf16.msra.mxu0 0
    %1417 = vmatprep.mubr.bf16.mxu0 0
    %1418 = vmatmul.mubr.bf16.gmra.mxu0 %v1383
    %v1419 = vpop.f32.mrf.mxu0
    %v1420 = vadd.f32 %v1368, %v1419
    %v1421 = vpop.f32.mrf.mxu0
    %v1422 = vpop.f32.mrf.mxu0
    %v1423 = vadd.f32 %v1368, %v1422
    %v1424 = vpop.f32.mrf.mxu0
    %1425 = vdwg.mxu0
    %v1426 = vmul.f32 %v1420, %v1420
    %v1427 = vmul.f32 %v1423, %v1423
    %v1428 = vmul.f32 %v1420, %v1426
    %v1429 = vmul.f32 %v1423, %v1427
    %v1430 = vmul.f32 %v1428, 0.044715
    %v1431 = vmul.f32 %v1429, 0.044715
    %v1432 = vadd.f32 %v1420, %v1430
    %v1433 = vadd.f32 %v1423, %v1431
    %v1434 = vmul.f32 %v1432, 0.7978846
    %v1435 = vmul.f32 %v1433, 0.7978846
    %v1436 = vtanh.pop %v1434
    %v1437 = vtanh.pop %v1435
    %v1438 = vadd.f32 %v1436, 1.0
    %v1439 = vadd.f32 %v1437, 1.0
    %v1440 = vmul.f32 %v1438, 0.5
    %v1441 = vmul.f32 %v1439, 0.5
    %v1442 = vmul.f32 %v1420, %v1440
    %v1443 = vmul.f32 %v1423, %v1441
    %v1444 = vpack.c.bf16 %v1443, %v1442
    %v1445 = vld [vmem:[%s11] sm:$0xf]
    %v1446 = vld [vmem:[%s11 + $0x4] sm:$0xf]
    %v1447 = vld [vmem:[%s11 + $0x8] sm:$0xf]
    %v1448 = vld [vmem:[%s11 + $0xc] sm:$0xf]
    %v1449 = vld [vmem:[%s11 + $0x10] sm:$0xf]
    %v1450 = vld [vmem:[%s11 + $0x14] sm:$0xf]
    %v1451 = vld [vmem:[%s11 + $0x18] sm:$0xf]
    %v1452 = vld [vmem:[%s11 + $0x1c] sm:$0xf]
    %v1453 = vld [vmem:[%s12] sm:$0x1]
    %v1455 = vlaneseq
    %v1456 = vshrl.u32 %v1455, 7
    %v1457 = vsub.s32 0, %v1456
    %v1458 = vrot.slane %v1453, %v1457
    %v1468 = vunpack.c.l.b16 %v1445
    %v1469 = vunpack.c.l.b16 %v1446
    %v1470 = vunpack.c.l.b16 %v1447
    %v1471 = vunpack.c.l.b16 %v1448
    %v1472 = vunpack.c.l.b16 %v1449
    %v1473 = vunpack.c.l.b16 %v1450
    %v1474 = vunpack.c.l.b16 %v1451
    %v1475 = vunpack.c.l.b16 %v1452
    %v1476 = vpack.c.b16 %v1469, %v1468
    %v1477 = vpack.c.b16 %v1471, %v1470
    %v1478 = vpack.c.b16 %v1473, %v1472
    %v1479 = vpack.c.b16 %v1475, %v1474
    %vm1484 = vcmask 523264
    %v1486 = vsel %vm1484, %v1444, 0
    %1488 = vmatprep.subr.bf16.mxu0 0
    %1489 = vmatpush1.bf16.msra.mxu0 0
    %1490 = vmatprep.subr.bf16.mxu0 0
    %1491 = vmatpush1.bf16.msra.mxu0 0
    %1492 = vmatprep.subr.bf16.mxu0 0
    %1493 = vmatpush1.bf16.msra.mxu0 0
    %1494 = vmatprep.subr.bf16.mxu0 0
    %1495 = vmatpush1.bf16.msra.mxu0 0
    %1496 = vmatprep.subr.bf16.mxu0 0
    %1497 = vmatpush1.bf16.msra.mxu0 %v1479
    %1498 = vmatprep.subr.bf16.mxu0 0
    %1499 = vmatpush1.bf16.msra.mxu0 %v1478
    %1500 = vmatprep.subr.bf16.mxu0 0
    %1501 = vmatpush1.bf16.msra.mxu0 %v1477
    %1502 = vmatprep.subr.bf16.mxu0 0
    %1503 = vmatpush1.bf16.msra.mxu0 %v1476
    %1504 = vmatprep.subr.bf16.mxu0 0
    %1505 = vmatpush2.bf16.msra.mxu0 0
    %1506 = vmatprep.subr.bf16.mxu0 0
    %1507 = vmatpush2.bf16.msra.mxu0 0
    %1508 = vmatprep.subr.bf16.mxu0 0
    %1509 = vmatpush2.bf16.msra.mxu0 0
    %1510 = vmatprep.subr.bf16.mxu0 0
    %1511 = vmatpush2.bf16.msra.mxu0 0
    %1512 = vmatprep.subr.bf16.mxu0 0
    %1513 = vmatpush2.bf16.msra.mxu0 0
    %1514 = vmatprep.subr.bf16.mxu0 0
    %1515 = vmatpush2.bf16.msra.mxu0 0
    %1516 = vmatprep.subr.bf16.mxu0 0
    %1517 = vmatpush2.bf16.msra.mxu0 0
    %1518 = vmatprep.subr.bf16.mxu0 0
    %1519 = vmatpush2.bf16.msra.mxu0 0
    %1520 = vmatprep.mubr.bf16.mxu0 0
    %1521 = vmatmul.mubr.bf16.gmra.mxu0 %v1486
    %v1522 = vpop.f32.mrf.mxu0
    %v1523 = vadd.f32 %v1458, %v1522
    %v1524 = vpop.f32.mrf.mxu0
    %v1525 = vpop.f32.mrf.mxu0
    %v1526 = vadd.f32 %v1458, %v1525
    %v1527 = vpop.f32.mrf.mxu0
    %1528 = vdwg.mxu0
    %v1529 = vadd.f32 %v1312, %v1523
    %v1530 = vadd.f32 %v1313, %v1526
    %1531 = vst.msk [vmem:[#allocation10] sm:$0xff] %vm99, %v1529
    %1532 = vst.msk [vmem:[#allocation10 + $0x8] sm:$0xff] %vm99, %v1530
    // Predicated region
    $region70: #{tpu_custom_call.1} parent=1 // pred_check
      _
    $region71: #{tpu_custom_call.1} parent=1 // pred_check_branch
      %1534 = sbr.rel (0) target = $region73
    $region72: #{tpu_custom_call.1} parent=1 // pred_region
      %s1536 = ssub.s32 256, 256
      %1537 = vsyncadd [#allocation4], %s1536
      %s1538 = sshll.u32 [#allocation10], 4
      %s1539 = int_to_ptr.vmem [resolvable:$true] %s1538
      %1544 = dma.vmem_to_hbm [thread:$0]  %s1539, 256, %s13, [#allocation4], 128, 128, 8
    $region73: #{tpu_custom_call.1} parent=1 // pred_fallthru
      _
    // Predicated region
    $region74: #{tpu_custom_call.1} parent=1 // pred_check
      _
    $region75: #{tpu_custom_call.1} parent=1 // pred_check_branch
      %1546 = sbr.rel (0) target = $region77
    $region76: #{tpu_custom_call.1} parent=1 // pred_region
      %1547 = dma.done [#allocation4], 256
    $region77: #{tpu_custom_call.1} parent=1 // pred_fallthru
      _
    %1548 = vsyncpa [#allocation3], 1
    %1549 = vsyncpa [#allocation6], 1
    %1550 = vsyncpa [#allocation9], 1
    %1551 = vsyncpa [#allocation4], 1

</llo_original>
